<compile_context>
chip_gen: v7x
topology: tpu7x:2x2x1
jax: 0.10.0
libtpu: 0.0.40
codegen_flags: <defaults>
</compile_context>

<pallas_src>
import jax
import jax.numpy as jnp
from jax.experimental import pallas as pl
from jax.experimental.pallas import tpu as pltpu

NEG_INF = -1e30  # finite sentinel: -inf would turn into NaN through pred matmul


def _round_up(v, m):
    return (v + m - 1) // m * m


def _fused_kernel(x_ref, batch_ref,
                  wf_ref, bf_ref,
                  s0_ref, t0_ref,
                  w1_ref, b1_ref, s1_ref, t1_ref,
                  w2_ref, b2_ref, s2_ref, t2_ref,
                  alpha_ref,
                  pred_w_ref, pred_b_ref,
                  out_ref,
                  acc_ref):
    g_pad, d_pad = acc_ref.shape

    @pl.when(pl.program_id(0) == 0)
    def _init():
        acc_ref[...] = jnp.full_like(acc_ref, NEG_INF)

    x = x_ref[...]                                           # (TN, F_pad) bf16

    # ---- fused first matmul: x @ [gnn_w | side_w0] (shared LHS) ----------
    y = (jnp.dot(x, wf_ref[...], preferred_element_type=jnp.float32)
         + bf_ref[...])                                      # (TN, D+H) f32
    node = y[:, :d_pad]                                      # gnn branch
    h = y[:, d_pad:]                                         # side branch
    # TODO(synk): the real ptcld_GNN backbone (k-NN graph + GIN/DGCNN stack)
    # was not provided in the source; a single linear projection stands in
    # for `self.gnn` so the gating / pooling / pred path is exercised.

    # ---- SideMLP: (lin -> BN -> ReLU) x2 -> lin -> BN (dropout = id, eval)
    h = jnp.maximum(h * s0_ref[...] + t0_ref[...], 0.0)
    h = (jnp.dot(h.astype(w1_ref.dtype), w1_ref[...],
                 preferred_element_type=jnp.float32) + b1_ref[...])
    h = jnp.maximum(h * s1_ref[...] + t1_ref[...], 0.0)
    h = (jnp.dot(h.astype(w2_ref.dtype), w2_ref[...],
                 preferred_element_type=jnp.float32) + b2_ref[...])
    side = h * s2_ref[...] + t2_ref[...]

    # ---- gated residual fusion: (1 - alpha) * gnn + alpha * side ----------
    alpha = alpha_ref[0]
    gated = (1.0 - alpha) * node + alpha * side              # (TN, D_pad) f32

    # ---- global_max_pool: per-graph running max into resident scratch -----
    seg = batch_ref[...]                                     # (TN, 1) int32
    parts = []
    for g in range(g_pad):                                   # static, tiny G
        bias = jnp.where(seg == g, 0.0, NEG_INF)             # (TN, 1)
        parts.append(jnp.max(gated + bias, axis=0, keepdims=True))
    acc_ref[...] = jnp.maximum(acc_ref[...], jnp.concatenate(parts, axis=0))

    # ---- graph_pred_linear, once, after the last node tile ----------------
    @pl.when(pl.program_id(0) == pl.num_programs(0) - 1)
    def _finalize():
        out_ref[...] = (jnp.dot(acc_ref[...], pred_w_ref[...],
                                preferred_element_type=jnp.float32)
                        + pred_b_ref[...])


def gnn_ptcldpred_side_forward(x, batch, params, num_graphs, num_class,
                               *, tile_n=256):
    """JAX wrapper: pads to lane-dense shapes and calls the tiled kernel."""
    n, f = x.shape
    d = params["gnn_w"].shape[1]          # out_dim (== hid_dim in the module)
    hd = params["w0"].shape[1]            # side_hid_dim

    f_pad = _round_up(f, 128)
    d_pad = _round_up(d, 128)
    h_pad = _round_up(hd, 128)
    c_pad = _round_up(num_class, 128)
    g_pad = _round_up(max(num_graphs, 1), 8)
    n_pad = _round_up(n, tile_n)
    grid = (n_pad // tile_n,)

    def pad2(a, r, c, dtype=jnp.float32):
        return (jnp.zeros((r, c), dtype)
                .at[:a.shape[0], :a.shape[1]].set(a.astype(dtype)))

    # Node features streamed as bf16 (halves HBM->VMEM bytes); pad nodes get
    # segment id -1 so they never match a real graph in the pool.
    x_p = pad2(x, n_pad, f_pad, jnp.bfloat16)
    batch_p = (jnp.full((n_pad, 1), -1, jnp.int32)
               .at[:n, 0].set(batch.astype(jnp.int32)))

    wf = jnp.concatenate(
        [pad2(params["gnn_w"], f_pad, d_pad, jnp.bfloat16),
         pad2(params["w0"], f_pad, h_pad, jnp.bfloat16)], axis=1)
    bf = jnp.concatenate(
        [pad2(params["gnn_b"], 1, d_pad), pad2(params["b0"], 1, h_pad)], axis=1)
    s0 = pad2(params["s0"], 1, h_pad); t0 = pad2(params["t0"], 1, h_pad)
    w1 = pad2(params["w1"], h_pad, h_pad, jnp.bfloat16)
    b1 = pad2(params["b1"], 1, h_pad)
    s1 = pad2(params["s1"], 1, h_pad); t1 = pad2(params["t1"], 1, h_pad)
    w2 = pad2(params["w2"], h_pad, d_pad, jnp.bfloat16)
    b2 = pad2(params["b2"], 1, d_pad)
    s2 = pad2(params["s2"], 1, d_pad); t2 = pad2(params["t2"], 1, d_pad)
    pred_w = pad2(params["pred_w"], d_pad, c_pad)
    pred_b = pad2(params["pred_b"], 1, c_pad)
    alpha = params["alpha"].astype(jnp.float32).reshape((1,))

    def resident(a):  # weights: constant block index -> stay in VMEM, no re-DMA
        return pl.BlockSpec(a.shape, lambda i: (0,) * a.ndim)

    in_specs = [
        pl.BlockSpec((tile_n, f_pad), lambda i: (i, 0)),     # x tile (streamed)
        pl.BlockSpec((tile_n, 1), lambda i: (i, 0)),         # segment ids
        resident(wf), resident(bf),
        resident(s0), resident(t0),
        resident(w1), resident(b1), resident(s1), resident(t1),
        resident(w2), resident(b2), resident(s2), resident(t2),
        pl.BlockSpec(memory_space=pltpu.MemorySpace.SMEM),   # alpha scalar
        resident(pred_w), resident(pred_b),
    ]

    flops = (2 * n_pad * f_pad * (d_pad + h_pad)
             + 2 * n_pad * h_pad * h_pad
             + 2 * n_pad * h_pad * d_pad
             + 2 * g_pad * d_pad * c_pad)
    bytes_accessed = (x_p.size * 2 + batch_p.size * 4
                      + (wf.size + w1.size + w2.size) * 2
                      + (bf.size + b1.size + b2.size) * 4
                      + (s0.size + t0.size + s1.size + t1.size
                         + s2.size + t2.size) * 4
                      + (pred_w.size + pred_b.size) * 4
                      + g_pad * c_pad * 4)

    out = pl.pallas_call(
        _fused_kernel,
        out_shape=jax.ShapeDtypeStruct((g_pad, c_pad), jnp.float32),
        grid_spec=pltpu.PrefetchScalarGridSpec(
            num_scalar_prefetch=0,
            grid=grid,
            in_specs=in_specs,
            out_specs=pl.BlockSpec((g_pad, c_pad), lambda i: (0, 0)),
            scratch_shapes=[pltpu.VMEM((g_pad, d_pad), jnp.float32)],
        ),
        compiler_params=pltpu.CompilerParams(
            dimension_semantics=("arbitrary",),   # pool accumulator carries
            vmem_limit_bytes=32 * 1024 * 1024,
        ),
        cost_estimate=pl.CostEstimate(
            flops=flops, transcendentals=0, bytes_accessed=bytes_accessed),
    )(x_p, batch_p, wf, bf, s0, t0, w1, b1, s1, t1, w2, b2, s2, t2,
      alpha, pred_w, pred_b)

    return out[:num_graphs, :num_class]


def _reference_forward(x, batch, params, num_graphs, num_class):
    """Pure-JAX reference mirroring the kernel's bf16 casts."""
    bf16 = lambda a: a.astype(jnp.bfloat16).astype(jnp.float32)
    xb = bf16(x)
    node = xb @ bf16(params["gnn_w"]) + params["gnn_b"]
    h = xb @ bf16(params["w0"]) + params["b0"]
    h = jnp.maximum(h * params["s0"] + params["t0"], 0.0)
    h = bf16(h) @ bf16(params["w1"]) + params["b1"]
    h = jnp.maximum(h * params["s1"] + params["t1"], 0.0)
    h = bf16(h) @ bf16(params["w2"]) + params["b2"]
    side = h * params["s2"] + params["t2"]
    alpha = params["alpha"][0]
    gated = (1.0 - alpha) * node + alpha * side
    pooled = jnp.stack(
        [jnp.max(jnp.where((batch == g)[:, None], gated, NEG_INF), axis=0)
         for g in range(num_graphs)], axis=0)
    return pooled @ params["pred_w"] + params["pred_b"]


if __name__ == "__main__":
    # Small, module-consistent shapes.  Note: the original forward only
    # typechecks when out_dim == hid_dim (graph_pred_linear takes hid_dim).
    feat_dim = 16
    hid_dim = 32
    out_dim = 32
    side_hid_dim = 16
    num_class = 8
    num_nodes = 600            # -> 3 node tiles of 256 (exercises the grid)
    num_graphs = 4

    key = jax.random.PRNGKey(0)
    ks = jax.random.split(key, 16)

    x = jax.random.normal(ks[0], (num_nodes, feat_dim), jnp.float32)
    batch = jnp.repeat(jnp.arange(num_graphs, dtype=jnp.int32),
                       num_nodes // num_graphs)

    def xavier(k, i, o):
        lim = (6.0 / (i + o)) ** 0.5
        return jax.random.uniform(k, (i, o), jnp.float32, -lim, lim)

    def lin_bias(k, i, o):
        b = 1.0 / (i ** 0.5)
        return jax.random.uniform(k, (1, o), jnp.float32, -b, b)

    def fold_bn(k, dim, eps=1e-5):
        k1, k2, k3, k4 = jax.random.split(k, 4)
        gamma = jax.random.uniform(k1, (1, dim), jnp.float32, 0.5, 1.5)
        beta = 0.1 * jax.random.normal(k2, (1, dim), jnp.float32)
        mean = 0.1 * jax.random.normal(k3, (1, dim), jnp.float32)
        var = jax.random.uniform(k4, (1, dim), jnp.float32, 0.5, 1.5)
        scale = gamma / jnp.sqrt(var + eps)
        return scale, beta - mean * scale

    s0, t0 = fold_bn(ks[10], side_hid_dim)
    s1, t1 = fold_bn(ks[11], side_hid_dim)
    s2, t2 = fold_bn(ks[12], out_dim)

    params = {
        # gnn stand-in (see TODO(synk) in the kernel)
        "gnn_w": xavier(ks[1], feat_dim, out_dim),
        "gnn_b": jnp.zeros((1, out_dim), jnp.float32),
        # SideMLP: SideLayer(feat,16) -> SideLayer(16,16) -> SideLayer(16,out)
        "w0": xavier(ks[2], feat_dim, side_hid_dim),
        "b0": lin_bias(ks[3], feat_dim, side_hid_dim),
        "s0": s0, "t0": t0,
        "w1": xavier(ks[4], side_hid_dim, side_hid_dim),
        "b1": lin_bias(ks[5], side_hid_dim, side_hid_dim),
        "s1": s1, "t1": t1,
        "w2": xavier(ks[6], side_hid_dim, out_dim),
        "b2": lin_bias(ks[7], side_hid_dim, out_dim),
        "s2": s2, "t2": t2,
        # alpha gate (nonzero so both branches are exercised numerically)
        "alpha": jnp.array([0.25], jnp.float32),
        # graph_pred_linear: Linear(hid_dim, num_class)
        "pred_w": xavier(ks[8], hid_dim, num_class),
        "pred_b": lin_bias(ks[9], hid_dim, num_class),
    }

    out = gnn_ptcldpred_side_forward(x, batch, params, num_graphs, num_class)
    out = jax.block_until_ready(out)
    ref = _reference_forward(x, batch, params, num_graphs, num_class)

    assert out.shape == (num_graphs, num_class)
    assert bool(jnp.all(jnp.isfinite(out)))
    assert bool(jnp.allclose(out, ref, rtol=2e-2, atol=2e-2)), \
        float(jnp.max(jnp.abs(out - ref)))
    print("KERNEL_OK")
</pallas_src>

<mosaic_0001>
module attributes {stable_mosaic.version = 11 : i64} {
  func.func @_fused_kernel(%arg0: i32, %arg1: memref<256x128xbf16, #tpu.memory_space<vmem>>, %arg2: memref<256x1xi32, #tpu.memory_space<vmem>>, %arg3: memref<128x256xbf16, #tpu.memory_space<vmem>>, %arg4: memref<1x256xf32, #tpu.memory_space<vmem>>, %arg5: memref<1x128xf32, #tpu.memory_space<vmem>>, %arg6: memref<1x128xf32, #tpu.memory_space<vmem>>, %arg7: memref<128x128xbf16, #tpu.memory_space<vmem>>, %arg8: memref<1x128xf32, #tpu.memory_space<vmem>>, %arg9: memref<1x128xf32, #tpu.memory_space<vmem>>, %arg10: memref<1x128xf32, #tpu.memory_space<vmem>>, %arg11: memref<128x128xbf16, #tpu.memory_space<vmem>>, %arg12: memref<1x128xf32, #tpu.memory_space<vmem>>, %arg13: memref<1x128xf32, #tpu.memory_space<vmem>>, %arg14: memref<1x128xf32, #tpu.memory_space<vmem>>, %arg15: memref<1xf32, #tpu.memory_space<smem>>, %arg16: memref<128x128xf32, #tpu.memory_space<vmem>>, %arg17: memref<1x128xf32, #tpu.memory_space<vmem>>, %arg18: memref<8x128xf32, #tpu.memory_space<vmem>>, %arg19: memref<8x128xf32, #tpu.memory_space<vmem>>) attributes {dimension_semantics = [#tpu.dimension_semantics<arbitrary>], iteration_bounds = array<i64: 3>, scalar_prefetch = 0 : i64, scratch_operands = 1 : i64, tpu.core_type = #tpu.core_type<tc>, window_params = [{transform_indices = @transform_0, window_bounds = array<i64: 256, 128>}, {transform_indices = @transform_1, window_bounds = array<i64: 256, 1>}, {pipeline_mode = #tpu.pipeline_mode<synchronous>, transform_indices = @transform_2, window_bounds = array<i64: 128, 256>}, {pipeline_mode = #tpu.pipeline_mode<synchronous>, transform_indices = @transform_3, window_bounds = array<i64: 1, 256>}, {pipeline_mode = #tpu.pipeline_mode<synchronous>, transform_indices = @transform_4, window_bounds = array<i64: 1, 128>}, {pipeline_mode = #tpu.pipeline_mode<synchronous>, transform_indices = @transform_5, window_bounds = array<i64: 1, 128>}, {pipeline_mode = #tpu.pipeline_mode<synchronous>, transform_indices = @transform_6, window_bounds = array<i64: 128, 128>}, {pipeline_mode = #tpu.pipeline_mode<synchronous>, transform_indices = @transform_7, window_bounds = array<i64: 1, 128>}, {pipeline_mode = #tpu.pipeline_mode<synchronous>, transform_indices = @transform_8, window_bounds = array<i64: 1, 128>}, {pipeline_mode = #tpu.pipeline_mode<synchronous>, transform_indices = @transform_9, window_bounds = array<i64: 1, 128>}, {pipeline_mode = #tpu.pipeline_mode<synchronous>, transform_indices = @transform_10, window_bounds = array<i64: 128, 128>}, {pipeline_mode = #tpu.pipeline_mode<synchronous>, transform_indices = @transform_11, window_bounds = array<i64: 1, 128>}, {pipeline_mode = #tpu.pipeline_mode<synchronous>, transform_indices = @transform_12, window_bounds = array<i64: 1, 128>}, {pipeline_mode = #tpu.pipeline_mode<synchronous>, transform_indices = @transform_13, window_bounds = array<i64: 1, 128>}, {transform_indices = @transform_14, window_bounds = array<i64: 1>}, {pipeline_mode = #tpu.pipeline_mode<synchronous>, transform_indices = @transform_15, window_bounds = array<i64: 128, 128>}, {pipeline_mode = #tpu.pipeline_mode<synchronous>, transform_indices = @transform_16, window_bounds = array<i64: 1, 128>}, {pipeline_mode = #tpu.pipeline_mode<synchronous>, transform_indices = @transform_17, window_bounds = array<i64: 8, 128>}]} {
    %c0_i32 = arith.constant 0 : i32
    %0 = arith.cmpi eq, %arg0, %c0_i32 : i32
    %1 = arith.extui %0 : i1 to i32
    %c0_i32_0 = arith.constant 0 : i32
    %2 = arith.cmpi ne, %1, %c0_i32_0 : i32
    scf.if %2 {
      %cst_65 = arith.constant -1.000000e+30 : f32
      %132 = vector.broadcast %cst_65 : f32 to vector<8x128xf32>
      %c0_66 = arith.constant 0 : index
      %c0_67 = arith.constant 0 : index
      %133 = vector.load %arg19[%c0_66, %c0_67] : memref<8x128xf32, #tpu.memory_space<vmem>>, vector<8x128xf32>
      tpu.vector_store %arg19[%c0_66, %c0_67], %132 {strides = array<i32>} : memref<8x128xf32, #tpu.memory_space<vmem>>, vector<8x128xf32>,
    } else {
    }
    %c0 = arith.constant 0 : index
    %c0_1 = arith.constant 0 : index
    %3 = vector.load %arg1[%c0, %c0_1] : memref<256x128xbf16, #tpu.memory_space<vmem>>, vector<256x128xbf16>
    %c0_2 = arith.constant 0 : index
    %c0_3 = arith.constant 0 : index
    %4 = vector.load %arg3[%c0_2, %c0_3] : memref<128x256xbf16, #tpu.memory_space<vmem>>, vector<128x256xbf16>
    %cst = arith.constant dense<0.000000e+00> : vector<256x256xf32>
    %5 = tpu.matmul %3, %4, %cst {dimension_numbers = #tpu.dot_dimension_numbers<[1], [0], [0], [1], [0, 0, 1, 1], [], []>} : vector<256x128xbf16>, vector<128x256xbf16>, vector<256x256xf32> -> vector<256x256xf32>
    %c0_4 = arith.constant 0 : index
    %c0_5 = arith.constant 0 : index
    %6 = vector.load %arg4[%c0_4, %c0_5] : memref<1x256xf32, #tpu.memory_space<vmem>>, vector<1x256xf32>
    %7 = vector.broadcast %6 : vector<1x256xf32> to vector<256x256xf32>
    %8 = arith.addf %5, %7 : vector<256x256xf32>
    %9 = vector.extract_strided_slice %8 {offsets = [0, 0], sizes = [256, 128], strides = [1, 1]} : vector<256x256xf32> to vector<256x128xf32>
    %10 = vector.extract_strided_slice %8 {offsets = [0, 128], sizes = [256, 128], strides = [1, 1]} : vector<256x256xf32> to vector<256x128xf32>
    %c0_6 = arith.constant 0 : index
    %c0_7 = arith.constant 0 : index
    %11 = vector.load %arg5[%c0_6, %c0_7] : memref<1x128xf32, #tpu.memory_space<vmem>>, vector<1x128xf32>
    %12 = vector.broadcast %11 : vector<1x128xf32> to vector<256x128xf32>
    %13 = arith.mulf %10, %12 : vector<256x128xf32>
    %c0_8 = arith.constant 0 : index
    %c0_9 = arith.constant 0 : index
    %14 = vector.load %arg6[%c0_8, %c0_9] : memref<1x128xf32, #tpu.memory_space<vmem>>, vector<1x128xf32>
    %15 = vector.broadcast %14 : vector<1x128xf32> to vector<256x128xf32>
    %16 = arith.addf %13, %15 : vector<256x128xf32>
    %cst_10 = arith.constant 0.000000e+00 : f32
    %17 = vector.broadcast %cst_10 : f32 to vector<256x128xf32>
    %18 = arith.maximumf %16, %17 : vector<256x128xf32>
    %19 = arith.truncf %18 : vector<256x128xf32> to vector<256x128xbf16>
    %c0_11 = arith.constant 0 : index
    %c0_12 = arith.constant 0 : index
    %20 = vector.load %arg7[%c0_11, %c0_12] : memref<128x128xbf16, #tpu.memory_space<vmem>>, vector<128x128xbf16>
    %cst_13 = arith.constant dense<0.000000e+00> : vector<256x128xf32>
    %21 = tpu.matmul %19, %20, %cst_13 {dimension_numbers = #tpu.dot_dimension_numbers<[1], [0], [0], [1], [0, 0, 1, 1], [], []>} : vector<256x128xbf16>, vector<128x128xbf16>, vector<256x128xf32> -> vector<256x128xf32>
    %c0_14 = arith.constant 0 : index
    %c0_15 = arith.constant 0 : index
    %22 = vector.load %arg8[%c0_14, %c0_15] : memref<1x128xf32, #tpu.memory_space<vmem>>, vector<1x128xf32>
    %23 = vector.broadcast %22 : vector<1x128xf32> to vector<256x128xf32>
    %24 = arith.addf %21, %23 : vector<256x128xf32>
    %c0_16 = arith.constant 0 : index
    %c0_17 = arith.constant 0 : index
    %25 = vector.load %arg9[%c0_16, %c0_17] : memref<1x128xf32, #tpu.memory_space<vmem>>, vector<1x128xf32>
    %26 = vector.broadcast %25 : vector<1x128xf32> to vector<256x128xf32>
    %27 = arith.mulf %24, %26 : vector<256x128xf32>
    %c0_18 = arith.constant 0 : index
    %c0_19 = arith.constant 0 : index
    %28 = vector.load %arg10[%c0_18, %c0_19] : memref<1x128xf32, #tpu.memory_space<vmem>>, vector<1x128xf32>
    %29 = vector.broadcast %28 : vector<1x128xf32> to vector<256x128xf32>
    %30 = arith.addf %27, %29 : vector<256x128xf32>
    %cst_20 = arith.constant 0.000000e+00 : f32
    %31 = vector.broadcast %cst_20 : f32 to vector<256x128xf32>
    %32 = arith.maximumf %30, %31 : vector<256x128xf32>
    %33 = arith.truncf %32 : vector<256x128xf32> to vector<256x128xbf16>
    %c0_21 = arith.constant 0 : index
    %c0_22 = arith.constant 0 : index
    %34 = vector.load %arg11[%c0_21, %c0_22] : memref<128x128xbf16, #tpu.memory_space<vmem>>, vector<128x128xbf16>
    %cst_23 = arith.constant dense<0.000000e+00> : vector<256x128xf32>
    %35 = tpu.matmul %33, %34, %cst_23 {dimension_numbers = #tpu.dot_dimension_numbers<[1], [0], [0], [1], [0, 0, 1, 1], [], []>} : vector<256x128xbf16>, vector<128x128xbf16>, vector<256x128xf32> -> vector<256x128xf32>
    %c0_24 = arith.constant 0 : index
    %c0_25 = arith.constant 0 : index
    %36 = vector.load %arg12[%c0_24, %c0_25] : memref<1x128xf32, #tpu.memory_space<vmem>>, vector<1x128xf32>
    %37 = vector.broadcast %36 : vector<1x128xf32> to vector<256x128xf32>
    %38 = arith.addf %35, %37 : vector<256x128xf32>
    %c0_26 = arith.constant 0 : index
    %c0_27 = arith.constant 0 : index
    %39 = vector.load %arg13[%c0_26, %c0_27] : memref<1x128xf32, #tpu.memory_space<vmem>>, vector<1x128xf32>
    %40 = vector.broadcast %39 : vector<1x128xf32> to vector<256x128xf32>
    %41 = arith.mulf %38, %40 : vector<256x128xf32>
    %c0_28 = arith.constant 0 : index
    %c0_29 = arith.constant 0 : index
    %42 = vector.load %arg14[%c0_28, %c0_29] : memref<1x128xf32, #tpu.memory_space<vmem>>, vector<1x128xf32>
    %43 = vector.broadcast %42 : vector<1x128xf32> to vector<256x128xf32>
    %44 = arith.addf %41, %43 : vector<256x128xf32>
    %c0_30 = arith.constant 0 : index
    %45 = memref.load %arg15[%c0_30] : memref<1xf32, #tpu.memory_space<smem>>
    %cst_31 = arith.constant 1.000000e+00 : f32
    %46 = arith.subf %cst_31, %45 : f32
    %47 = vector.broadcast %46 : f32 to vector<256x128xf32>
    %48 = arith.mulf %47, %9 : vector<256x128xf32>
    %49 = vector.broadcast %45 : f32 to vector<256x128xf32>
    %50 = arith.mulf %49, %44 : vector<256x128xf32>
    %51 = arith.addf %48, %50 : vector<256x128xf32>
    %c0_32 = arith.constant 0 : index
    %c0_33 = arith.constant 0 : index
    %52 = vector.load %arg2[%c0_32, %c0_33] : memref<256x1xi32, #tpu.memory_space<vmem>>, vector<256x1xi32>
    %c0_i32_34 = arith.constant 0 : i32
    %53 = vector.broadcast %c0_i32_34 : i32 to vector<256x1xi32>
    %54 = arith.cmpi eq, %52, %53 : vector<256x1xi32>
    %cst_35 = arith.constant 0.000000e+00 : f32
    %cst_36 = arith.constant -1.000000e+30 : f32
    %55 = vector.broadcast %cst_35 : f32 to vector<256x1xf32>
    %56 = vector.broadcast %cst_36 : f32 to vector<256x1xf32>
    %57 = arith.select %54, %55, %56 : vector<256x1xi1>, vector<256x1xf32>
    %58 = vector.broadcast %57 : vector<256x1xf32> to vector<256x128xf32>
    %59 = arith.addf %51, %58 : vector<256x128xf32>
    %cst_37 = arith.constant dense<0xFF800000> : vector<128xf32>
    %60 = vector.multi_reduction <maximumf>, %59, %cst_37 [0] : vector<256x128xf32> to vector<128xf32>
    %61 = vector.shape_cast %60 : vector<128xf32> to vector<1x128xf32>
    %c1_i32 = arith.constant 1 : i32
    %62 = vector.broadcast %c1_i32 : i32 to vector<256x1xi32>
    %63 = arith.cmpi eq, %52, %62 : vector<256x1xi32>
    %cst_38 = arith.constant 0.000000e+00 : f32
    %cst_39 = arith.constant -1.000000e+30 : f32
    %64 = vector.broadcast %cst_38 : f32 to vector<256x1xf32>
    %65 = vector.broadcast %cst_39 : f32 to vector<256x1xf32>
    %66 = arith.select %63, %64, %65 : vector<256x1xi1>, vector<256x1xf32>
    %67 = vector.broadcast %66 : vector<256x1xf32> to vector<256x128xf32>
    %68 = arith.addf %51, %67 : vector<256x128xf32>
    %cst_40 = arith.constant dense<0xFF800000> : vector<128xf32>
    %69 = vector.multi_reduction <maximumf>, %68, %cst_40 [0] : vector<256x128xf32> to vector<128xf32>
    %70 = vector.shape_cast %69 : vector<128xf32> to vector<1x128xf32>
    %c2_i32 = arith.constant 2 : i32
    %71 = vector.broadcast %c2_i32 : i32 to vector<256x1xi32>
    %72 = arith.cmpi eq, %52, %71 : vector<256x1xi32>
    %cst_41 = arith.constant 0.000000e+00 : f32
    %cst_42 = arith.constant -1.000000e+30 : f32
    %73 = vector.broadcast %cst_41 : f32 to vector<256x1xf32>
    %74 = vector.broadcast %cst_42 : f32 to vector<256x1xf32>
    %75 = arith.select %72, %73, %74 : vector<256x1xi1>, vector<256x1xf32>
    %76 = vector.broadcast %75 : vector<256x1xf32> to vector<256x128xf32>
    %77 = arith.addf %51, %76 : vector<256x128xf32>
    %cst_43 = arith.constant dense<0xFF800000> : vector<128xf32>
    %78 = vector.multi_reduction <maximumf>, %77, %cst_43 [0] : vector<256x128xf32> to vector<128xf32>
    %79 = vector.shape_cast %78 : vector<128xf32> to vector<1x128xf32>
    %c3_i32 = arith.constant 3 : i32
    %80 = vector.broadcast %c3_i32 : i32 to vector<256x1xi32>
    %81 = arith.cmpi eq, %52, %80 : vector<256x1xi32>
    %cst_44 = arith.constant 0.000000e+00 : f32
    %cst_45 = arith.constant -1.000000e+30 : f32
    %82 = vector.broadcast %cst_44 : f32 to vector<256x1xf32>
    %83 = vector.broadcast %cst_45 : f32 to vector<256x1xf32>
    %84 = arith.select %81, %82, %83 : vector<256x1xi1>, vector<256x1xf32>
    %85 = vector.broadcast %84 : vector<256x1xf32> to vector<256x128xf32>
    %86 = arith.addf %51, %85 : vector<256x128xf32>
    %cst_46 = arith.constant dense<0xFF800000> : vector<128xf32>
    %87 = vector.multi_reduction <maximumf>, %86, %cst_46 [0] : vector<256x128xf32> to vector<128xf32>
    %88 = vector.shape_cast %87 : vector<128xf32> to vector<1x128xf32>
    %c4_i32 = arith.constant 4 : i32
    %89 = vector.broadcast %c4_i32 : i32 to vector<256x1xi32>
    %90 = arith.cmpi eq, %52, %89 : vector<256x1xi32>
    %cst_47 = arith.constant 0.000000e+00 : f32
    %cst_48 = arith.constant -1.000000e+30 : f32
    %91 = vector.broadcast %cst_47 : f32 to vector<256x1xf32>
    %92 = vector.broadcast %cst_48 : f32 to vector<256x1xf32>
    %93 = arith.select %90, %91, %92 : vector<256x1xi1>, vector<256x1xf32>
    %94 = vector.broadcast %93 : vector<256x1xf32> to vector<256x128xf32>
    %95 = arith.addf %51, %94 : vector<256x128xf32>
    %cst_49 = arith.constant dense<0xFF800000> : vector<128xf32>
    %96 = vector.multi_reduction <maximumf>, %95, %cst_49 [0] : vector<256x128xf32> to vector<128xf32>
    %97 = vector.shape_cast %96 : vector<128xf32> to vector<1x128xf32>
    %c5_i32 = arith.constant 5 : i32
    %98 = vector.broadcast %c5_i32 : i32 to vector<256x1xi32>
    %99 = arith.cmpi eq, %52, %98 : vector<256x1xi32>
    %cst_50 = arith.constant 0.000000e+00 : f32
    %cst_51 = arith.constant -1.000000e+30 : f32
    %100 = vector.broadcast %cst_50 : f32 to vector<256x1xf32>
    %101 = vector.broadcast %cst_51 : f32 to vector<256x1xf32>
    %102 = arith.select %99, %100, %101 : vector<256x1xi1>, vector<256x1xf32>
    %103 = vector.broadcast %102 : vector<256x1xf32> to vector<256x128xf32>
    %104 = arith.addf %51, %103 : vector<256x128xf32>
    %cst_52 = arith.constant dense<0xFF800000> : vector<128xf32>
    %105 = vector.multi_reduction <maximumf>, %104, %cst_52 [0] : vector<256x128xf32> to vector<128xf32>
    %106 = vector.shape_cast %105 : vector<128xf32> to vector<1x128xf32>
    %c6_i32 = arith.constant 6 : i32
    %107 = vector.broadcast %c6_i32 : i32 to vector<256x1xi32>
    %108 = arith.cmpi eq, %52, %107 : vector<256x1xi32>
    %cst_53 = arith.constant 0.000000e+00 : f32
    %cst_54 = arith.constant -1.000000e+30 : f32
    %109 = vector.broadcast %cst_53 : f32 to vector<256x1xf32>
    %110 = vector.broadcast %cst_54 : f32 to vector<256x1xf32>
    %111 = arith.select %108, %109, %110 : vector<256x1xi1>, vector<256x1xf32>
    %112 = vector.broadcast %111 : vector<256x1xf32> to vector<256x128xf32>
    %113 = arith.addf %51, %112 : vector<256x128xf32>
    %cst_55 = arith.constant dense<0xFF800000> : vector<128xf32>
    %114 = vector.multi_reduction <maximumf>, %113, %cst_55 [0] : vector<256x128xf32> to vector<128xf32>
    %115 = vector.shape_cast %114 : vector<128xf32> to vector<1x128xf32>
    %c7_i32 = arith.constant 7 : i32
    %116 = vector.broadcast %c7_i32 : i32 to vector<256x1xi32>
    %117 = arith.cmpi eq, %52, %116 : vector<256x1xi32>
    %cst_56 = arith.constant 0.000000e+00 : f32
    %cst_57 = arith.constant -1.000000e+30 : f32
    %118 = vector.broadcast %cst_56 : f32 to vector<256x1xf32>
    %119 = vector.broadcast %cst_57 : f32 to vector<256x1xf32>
    %120 = arith.select %117, %118, %119 : vector<256x1xi1>, vector<256x1xf32>
    %121 = vector.broadcast %120 : vector<256x1xf32> to vector<256x128xf32>
    %122 = arith.addf %51, %121 : vector<256x128xf32>
    %cst_58 = arith.constant dense<0xFF800000> : vector<128xf32>
    %123 = vector.multi_reduction <maximumf>, %122, %cst_58 [0] : vector<256x128xf32> to vector<128xf32>
    %124 = vector.shape_cast %123 : vector<128xf32> to vector<1x128xf32>
    %c0_59 = arith.constant 0 : index
    %c0_60 = arith.constant 0 : index
    %125 = vector.load %arg19[%c0_59, %c0_60] : memref<8x128xf32, #tpu.memory_space<vmem>>, vector<8x128xf32>
    %126 = tpu.concatenate %61, %70, %79, %88, %97, %106, %115, %124 in 0 : vector<1x128xf32>, vector<1x128xf32>, vector<1x128xf32>, vector<1x128xf32>, vector<1x128xf32>, vector<1x128xf32>, vector<1x128xf32>, vector<1x128xf32> -> vector<8x128xf32>
    %127 = arith.maximumf %125, %126 : vector<8x128xf32>
    %c0_61 = arith.constant 0 : index
    %c0_62 = arith.constant 0 : index
    %128 = vector.load %arg19[%c0_61, %c0_62] : memref<8x128xf32, #tpu.memory_space<vmem>>, vector<8x128xf32>
    tpu.vector_store %arg19[%c0_61, %c0_62], %127 {strides = array<i32>} : memref<8x128xf32, #tpu.memory_space<vmem>>, vector<8x128xf32>,
    %c2_i32_63 = arith.constant 2 : i32
    %129 = arith.cmpi eq, %arg0, %c2_i32_63 : i32
    %130 = arith.extui %129 : i1 to i32
    %c0_i32_64 = arith.constant 0 : i32
    %131 = arith.cmpi ne, %130, %c0_i32_64 : i32
    scf.if %131 {
      %c0_65 = arith.constant 0 : index
      %c0_66 = arith.constant 0 : index
      %132 = vector.load %arg19[%c0_65, %c0_66] : memref<8x128xf32, #tpu.memory_space<vmem>>, vector<8x128xf32>
      %c0_67 = arith.constant 0 : index
      %c0_68 = arith.constant 0 : index
      %133 = vector.load %arg16[%c0_67, %c0_68] : memref<128x128xf32, #tpu.memory_space<vmem>>, vector<128x128xf32>
      %cst_69 = arith.constant dense<0.000000e+00> : vector<8x128xf32>
      %134 = tpu.matmul %132, %133, %cst_69 {dimension_numbers = #tpu.dot_dimension_numbers<[1], [0], [0], [1], [0, 0, 1, 1], [], []>} : vector<8x128xf32>, vector<128x128xf32>, vector<8x128xf32> -> vector<8x128xf32>
      %c0_70 = arith.constant 0 : index
      %c0_71 = arith.constant 0 : index
      %135 = vector.load %arg17[%c0_70, %c0_71] : memref<1x128xf32, #tpu.memory_space<vmem>>, vector<1x128xf32>
      %136 = vector.broadcast %135 : vector<1x128xf32> to vector<8x128xf32>
      %137 = arith.addf %134, %136 : vector<8x128xf32>
      %c0_72 = arith.constant 0 : index
      %c0_73 = arith.constant 0 : index
      %138 = vector.load %arg18[%c0_72, %c0_73] : memref<8x128xf32, #tpu.memory_space<vmem>>, vector<8x128xf32>
      tpu.vector_store %arg18[%c0_72, %c0_73], %137 {strides = array<i32>} : memref<8x128xf32, #tpu.memory_space<vmem>>, vector<8x128xf32>,
    } else {
    }
    return
  }
  func.func @transform_0(%arg0: i32) -> (i32, i32) {
    %c0_i32 = arith.constant 0 : i32
    %c0_i32_0 = arith.constant 0 : i32
    return %arg0, %c0_i32 : i32, i32
  }
  func.func @transform_1(%arg0: i32) -> (i32, i32) {
    %c0_i32 = arith.constant 0 : i32
    %c0_i32_0 = arith.constant 0 : i32
    return %arg0, %c0_i32 : i32, i32
  }
  func.func @transform_2(%arg0: i32) -> (i32, i32) {
    %c0_i32 = arith.constant 0 : i32
    %c0_i32_0 = arith.constant 0 : i32
    %c0_i32_1 = arith.constant 0 : i32
    return %c0_i32, %c0_i32_0 : i32, i32
  }
  func.func @transform_3(%arg0: i32) -> (i32, i32) {
    %c0_i32 = arith.constant 0 : i32
    %c0_i32_0 = arith.constant 0 : i32
    %c0_i32_1 = arith.constant 0 : i32
    return %c0_i32, %c0_i32_0 : i32, i32
  }
  func.func @transform_4(%arg0: i32) -> (i32, i32) {
    %c0_i32 = arith.constant 0 : i32
    %c0_i32_0 = arith.constant 0 : i32
    %c0_i32_1 = arith.constant 0 : i32
    return %c0_i32, %c0_i32_0 : i32, i32
  }
  func.func @transform_5(%arg0: i32) -> (i32, i32) {
    %c0_i32 = arith.constant 0 : i32
    %c0_i32_0 = arith.constant 0 : i32
    %c0_i32_1 = arith.constant 0 : i32
    return %c0_i32, %c0_i32_0 : i32, i32
  }
  func.func @transform_6(%arg0: i32) -> (i32, i32) {
    %c0_i32 = arith.constant 0 : i32
    %c0_i32_0 = arith.constant 0 : i32
    %c0_i32_1 = arith.constant 0 : i32
    return %c0_i32, %c0_i32_0 : i32, i32
  }
  func.func @transform_7(%arg0: i32) -> (i32, i32) {
    %c0_i32 = arith.constant 0 : i32
    %c0_i32_0 = arith.constant 0 : i32
    %c0_i32_1 = arith.constant 0 : i32
    return %c0_i32, %c0_i32_0 : i32, i32
  }
  func.func @transform_8(%arg0: i32) -> (i32, i32) {
    %c0_i32 = arith.constant 0 : i32
    %c0_i32_0 = arith.constant 0 : i32
    %c0_i32_1 = arith.constant 0 : i32
    return %c0_i32, %c0_i32_0 : i32, i32
  }
  func.func @transform_9(%arg0: i32) -> (i32, i32) {
    %c0_i32 = arith.constant 0 : i32
    %c0_i32_0 = arith.constant 0 : i32
    %c0_i32_1 = arith.constant 0 : i32
    return %c0_i32, %c0_i32_0 : i32, i32
  }
  func.func @transform_10(%arg0: i32) -> (i32, i32) {
    %c0_i32 = arith.constant 0 : i32
    %c0_i32_0 = arith.constant 0 : i32
    %c0_i32_1 = arith.constant 0 : i32
    return %c0_i32, %c0_i32_0 : i32, i32
  }
  func.func @transform_11(%arg0: i32) -> (i32, i32) {
    %c0_i32 = arith.constant 0 : i32
    %c0_i32_0 = arith.constant 0 : i32
    %c0_i32_1 = arith.constant 0 : i32
    return %c0_i32, %c0_i32_0 : i32, i32
  }
  func.func @transform_12(%arg0: i32) -> (i32, i32) {
    %c0_i32 = arith.constant 0 : i32
    %c0_i32_0 = arith.constant 0 : i32
    %c0_i32_1 = arith.constant 0 : i32
    return %c0_i32, %c0_i32_0 : i32, i32
  }
  func.func @transform_13(%arg0: i32) -> (i32, i32) {
    %c0_i32 = arith.constant 0 : i32
    %c0_i32_0 = arith.constant 0 : i32
    %c0_i32_1 = arith.constant 0 : i32
    return %c0_i32, %c0_i32_0 : i32, i32
  }
  func.func @transform_14(%arg0: i32) -> i32 {
    %c0_i32 = arith.constant 0 : i32
    %c0_i32_0 = arith.constant 0 : i32
    return %c0_i32 : i32
  }
  func.func @transform_15(%arg0: i32) -> (i32, i32) {
    %c0_i32 = arith.constant 0 : i32
    %c0_i32_0 = arith.constant 0 : i32
    %c0_i32_1 = arith.constant 0 : i32
    return %c0_i32, %c0_i32_0 : i32, i32
  }
  func.func @transform_16(%arg0: i32) -> (i32, i32) {
    %c0_i32 = arith.constant 0 : i32
    %c0_i32_0 = arith.constant 0 : i32
    %c0_i32_1 = arith.constant 0 : i32
    return %c0_i32, %c0_i32_0 : i32, i32
  }
  func.func @transform_17(%arg0: i32) -> (i32, i32) {
    %c0_i32 = arith.constant 0 : i32
    %c0_i32_0 = arith.constant 0 : i32
    %c0_i32_1 = arith.constant 0 : i32
    return %c0_i32, %c0_i32_0 : i32, i32
  }
}

</mosaic_0001>

<llo_original>
// kernel: tpu_custom_call.1
$region0: #{tpu_custom_call.1}
  #allocation0 [shape = 'u32[]', space=smem, size = 0x4, offset = 0x4, fixed_abs, tag = 'smem constant byte address 0x4 - core index']
  #allocation1 [shape = 'u32[144,128]{1,0:T(1,128)}', space=vmem, size = 0x12000, scoped, tag = 'internal scratch']
  #allocation2 [shape = 'f32[8,128]{1,0:T(8,128)}', space=vmem, size = 0x1000, scoped, tag = 'scratch operand']
  #allocation3 [shape = 'f32[1]{0:T(128)S(6)}', space=smem, size = 0x200, scoped, tag = 'scoped memory for tpu_custom_call.1']
  %s0 = inlined_call_operand.vmem [shape: bf16[768,128], index: 0, kind: input, shape index: {}]
  %s1 = inlined_call_operand.vmem [shape: s32[768,1], index: 1, kind: input, shape index: {}]
  %s2 = inlined_call_operand.vmem [shape: bf16[128,256], index: 2, kind: input, shape index: {}]
  %s3 = inlined_call_operand.vmem [shape: f32[1,256], index: 3, kind: input, shape index: {}]
  %s4 = inlined_call_operand.vmem [shape: f32[1,128], index: 4, kind: input, shape index: {}]
  %s5 = inlined_call_operand.vmem [shape: f32[1,128], index: 5, kind: input, shape index: {}]
  %s6 = inlined_call_operand.vmem [shape: bf16[128,128], index: 6, kind: input, shape index: {}]
  %s7 = inlined_call_operand.vmem [shape: f32[1,128], index: 7, kind: input, shape index: {}]
  %s8 = inlined_call_operand.vmem [shape: f32[1,128], index: 8, kind: input, shape index: {}]
  %s9 = inlined_call_operand.vmem [shape: f32[1,128], index: 9, kind: input, shape index: {}]
  %s10 = inlined_call_operand.vmem [shape: bf16[128,128], index: 10, kind: input, shape index: {}]
  %s11 = inlined_call_operand.vmem [shape: f32[1,128], index: 11, kind: input, shape index: {}]
  %s12 = inlined_call_operand.vmem [shape: f32[1,128], index: 12, kind: input, shape index: {}]
  %s13 = inlined_call_operand.vmem [shape: f32[1,128], index: 13, kind: input, shape index: {}]
  %s14 = inlined_call_operand.<no memory space> [shape: f32[1], index: 14, kind: input, shape index: {}]
  %s15 = inlined_call_operand.vmem [shape: f32[128,128], index: 15, kind: input, shape index: {}]
  %s16 = inlined_call_operand.vmem [shape: f32[1,128], index: 16, kind: input, shape index: {}]
  %s17 = inlined_call_operand.hbm [shape: f32[8,128], index: 17, kind: output, shape index: {}]
  %s18 = sld [smem:[#allocation0]]
  $region109: #{tpu_custom_call.1} parent=0
    _
  %s20 = ssub.s32 1, %s18
  %s21 = scalar_select 0, %s20, %s18
  %22 = sst [smem:[#allocation3]] %s14
  $region1: #{tpu_custom_call.1} parent=0
    #allocation4 [shape = 'u8[4096]{0}', space=vmem, size = 0x1000, scoped, tag = 'output window, operand 0, single buffered']
    #allocation5 [shape = 's32[2]{0}', space=sflag, size = 0x8, scoped, tag = 'scoped memory for tpu_custom_call.1']
    %23 = vsyncpa [#allocation5], 0
    loop: start=0, step=1, limit=5
    $region2: #{tpu_custom_call.1} parent=1 // loop_pre_header
      _
    $region3: #{tpu_custom_call.1} parent=1 // loop_header
      %s25 = sphi 0, %s29
      %p26 = scmp.ge.s32.totalorder %s25, 5
      %s35 = sphi 0, %s37
      %s38 = sphi 0, %s35
      %s39 = sphi 0, %s38
      %s55 = sphi 0, %s39
      %s61 = sphi 0, %s63
      %s64 = sphi 0, %s61
      %s65 = sphi 0, %s64
      %s81 = sphi 0, %s65
      %s85 = sphi 0, %s85
      %s87 = sphi 0, %s85
      %s88 = sphi 0, %s87
      %s102 = sphi 0, %s88
      %s106 = sphi 0, %s106
      %s108 = sphi 0, %s106
      %s109 = sphi 0, %s108
      %s123 = sphi 0, %s109
      %s127 = sphi 0, %s127
      %s129 = sphi 0, %s127
      %s130 = sphi 0, %s129
      %s144 = sphi 0, %s130
      %s148 = sphi 0, %s148
      %s150 = sphi 0, %s148
      %s151 = sphi 0, %s150
      %s165 = sphi 0, %s151
      %s169 = sphi 0, %s169
      %s171 = sphi 0, %s169
      %s172 = sphi 0, %s171
      %s186 = sphi 0, %s172
      %s190 = sphi 0, %s190
      %s192 = sphi 0, %s190
      %s193 = sphi 0, %s192
      %s207 = sphi 0, %s193
      %s211 = sphi 0, %s211
      %s213 = sphi 0, %s211
      %s214 = sphi 0, %s213
      %s228 = sphi 0, %s214
      %s232 = sphi 0, %s232
      %s234 = sphi 0, %s232
      %s235 = sphi 0, %s234
      %s249 = sphi 0, %s235
      %s253 = sphi 0, %s253
      %s255 = sphi 0, %s253
      %s256 = sphi 0, %s255
      %s270 = sphi 0, %s256
      %s274 = sphi 0, %s274
      %s276 = sphi 0, %s274
      %s277 = sphi 0, %s276
      %s291 = sphi 0, %s277
      %s295 = sphi 0, %s295
      %s297 = sphi 0, %s295
      %s298 = sphi 0, %s297
      %s312 = sphi 0, %s298
      %s316 = sphi 0, %s316
      %s318 = sphi 0, %s316
      %s319 = sphi 0, %s318
      %s333 = sphi 0, %s319
      %s337 = sphi 0, %s337
      %s339 = sphi 0, %s337
      %s340 = sphi 0, %s339
      %s354 = sphi 0, %s340
      %s358 = sphi 0, %s358
      %s360 = sphi 0, %s358
      %s361 = sphi 0, %s360
      %s375 = sphi 0, %s361
      %s379 = sphi 0, %s379
      %s381 = sphi 0, %s379
      %s382 = sphi 0, %s381
      %s396 = sphi 0, %s382
      %s400 = sphi 0, %s400
      %s402 = sphi 0, %s400
      %s403 = sphi 0, %s402
      %s417 = sphi 0, %s403
    $region4: #{tpu_custom_call.1} parent=1 // loop_header_branch
      %28 = sbr.rel (%p26) target = $region8
    $region5: #{tpu_custom_call.1} parent=1 // loop_body
      %s30 = ssub.s32 %s25, 1
      %s31 = ssub.s32 %s25, 2
      %s32 = sadd.s32 %s25, 1
      %s33 = ssub.s32 %s25, %s32
      %p34 = scmp.eq.s32.totalorder %s33, 0
      %s36 = sadd.s32 %s35, 1
      %s37 = scalar_select %p34, %s35, %s36
      %p40 = pneg %p34
      %p41 = scmp.eq.s32.totalorder %s25, 2
      %p42 = por %p40, %p41
      %p43 = scmp.ne.s32.totalorder %s35, %s38
      %p44 = scmp.eq.s32.totalorder %s25, 0
      %p45 = por %p43, %p44
      %p46 = scmp.ne.s32.totalorder %s35, %s38
      %p47 = scmp.eq.s32.totalorder %s30, 2
      %p48 = por %p46, %p47
      %p49 = scmp.ne.s32.totalorder %s38, %s39
      %p50 = scmp.eq.s32.totalorder %s30, 0
      %p51 = por %p49, %p50
      %p52 = scmp.ne.s32.totalorder %s38, %s39
      %p53 = scmp.eq.s32.totalorder %s31, 2
      %p54 = por %p52, %p53
      %p56 = scmp.ne.s32.totalorder %s39, %s55
      %p57 = scmp.eq.s32.totalorder %s31, 0
      %p58 = por %p56, %p57
      %s59 = ssub.s32 %s25, %s32
      %p60 = scmp.eq.s32.totalorder %s59, 0
      %s62 = sadd.s32 %s61, 1
      %s63 = scalar_select %p60, %s61, %s62
      %p66 = pneg %p60
      %p67 = scmp.eq.s32.totalorder %s25, 2
      %p68 = por %p66, %p67
      %p69 = scmp.ne.s32.totalorder %s61, %s64
      %p70 = scmp.eq.s32.totalorder %s25, 0
      %p71 = por %p69, %p70
      %p72 = scmp.ne.s32.totalorder %s61, %s64
      %p73 = scmp.eq.s32.totalorder %s30, 2
      %p74 = por %p72, %p73
      %p75 = scmp.ne.s32.totalorder %s64, %s65
      %p76 = scmp.eq.s32.totalorder %s30, 0
      %p77 = por %p75, %p76
      %p78 = scmp.ne.s32.totalorder %s64, %s65
      %p79 = scmp.eq.s32.totalorder %s31, 2
      %p80 = por %p78, %p79
      %p82 = scmp.ne.s32.totalorder %s65, %s81
      %p83 = scmp.eq.s32.totalorder %s31, 0
      %p84 = por %p82, %p83
      %s86 = sadd.s32 %s85, 1
      %p89 = scmp.eq.s32.totalorder %s25, 2
      %p90 = scmp.ne.s32.totalorder %s85, %s87
      %p91 = scmp.eq.s32.totalorder %s25, 0
      %p92 = por %p90, %p91
      %p93 = scmp.ne.s32.totalorder %s85, %s87
      %p94 = scmp.eq.s32.totalorder %s30, 2
      %p95 = por %p93, %p94
      %p96 = scmp.ne.s32.totalorder %s87, %s88
      %p97 = scmp.eq.s32.totalorder %s30, 0
      %p98 = por %p96, %p97
      %p99 = scmp.ne.s32.totalorder %s87, %s88
      %p100 = scmp.eq.s32.totalorder %s31, 2
      %p101 = por %p99, %p100
      %p103 = scmp.ne.s32.totalorder %s88, %s102
      %p104 = scmp.eq.s32.totalorder %s31, 0
      %p105 = por %p103, %p104
      %s107 = sadd.s32 %s106, 1
      %p110 = scmp.eq.s32.totalorder %s25, 2
      %p111 = scmp.ne.s32.totalorder %s106, %s108
      %p112 = scmp.eq.s32.totalorder %s25, 0
      %p113 = por %p111, %p112
      %p114 = scmp.ne.s32.totalorder %s106, %s108
      %p115 = scmp.eq.s32.totalorder %s30, 2
      %p116 = por %p114, %p115
      %p117 = scmp.ne.s32.totalorder %s108, %s109
      %p118 = scmp.eq.s32.totalorder %s30, 0
      %p119 = por %p117, %p118
      %p120 = scmp.ne.s32.totalorder %s108, %s109
      %p121 = scmp.eq.s32.totalorder %s31, 2
      %p122 = por %p120, %p121
      %p124 = scmp.ne.s32.totalorder %s109, %s123
      %p125 = scmp.eq.s32.totalorder %s31, 0
      %p126 = por %p124, %p125
      %s128 = sadd.s32 %s127, 1
      %p131 = scmp.eq.s32.totalorder %s25, 2
      %p132 = scmp.ne.s32.totalorder %s127, %s129
      %p133 = scmp.eq.s32.totalorder %s25, 0
      %p134 = por %p132, %p133
      %p135 = scmp.ne.s32.totalorder %s127, %s129
      %p136 = scmp.eq.s32.totalorder %s30, 2
      %p137 = por %p135, %p136
      %p138 = scmp.ne.s32.totalorder %s129, %s130
      %p139 = scmp.eq.s32.totalorder %s30, 0
      %p140 = por %p138, %p139
      %p141 = scmp.ne.s32.totalorder %s129, %s130
      %p142 = scmp.eq.s32.totalorder %s31, 2
      %p143 = por %p141, %p142
      %p145 = scmp.ne.s32.totalorder %s130, %s144
      %p146 = scmp.eq.s32.totalorder %s31, 0
      %p147 = por %p145, %p146
      %s149 = sadd.s32 %s148, 1
      %p152 = scmp.eq.s32.totalorder %s25, 2
      %p153 = scmp.ne.s32.totalorder %s148, %s150
      %p154 = scmp.eq.s32.totalorder %s25, 0
      %p155 = por %p153, %p154
      %p156 = scmp.ne.s32.totalorder %s148, %s150
      %p157 = scmp.eq.s32.totalorder %s30, 2
      %p158 = por %p156, %p157
      %p159 = scmp.ne.s32.totalorder %s150, %s151
      %p160 = scmp.eq.s32.totalorder %s30, 0
      %p161 = por %p159, %p160
      %p162 = scmp.ne.s32.totalorder %s150, %s151
      %p163 = scmp.eq.s32.totalorder %s31, 2
      %p164 = por %p162, %p163
      %p166 = scmp.ne.s32.totalorder %s151, %s165
      %p167 = scmp.eq.s32.totalorder %s31, 0
      %p168 = por %p166, %p167
      %s170 = sadd.s32 %s169, 1
      %p173 = scmp.eq.s32.totalorder %s25, 2
      %p174 = scmp.ne.s32.totalorder %s169, %s171
      %p175 = scmp.eq.s32.totalorder %s25, 0
      %p176 = por %p174, %p175
      %p177 = scmp.ne.s32.totalorder %s169, %s171
      %p178 = scmp.eq.s32.totalorder %s30, 2
      %p179 = por %p177, %p178
      %p180 = scmp.ne.s32.totalorder %s171, %s172
      %p181 = scmp.eq.s32.totalorder %s30, 0
      %p182 = por %p180, %p181
      %p183 = scmp.ne.s32.totalorder %s171, %s172
      %p184 = scmp.eq.s32.totalorder %s31, 2
      %p185 = por %p183, %p184
      %p187 = scmp.ne.s32.totalorder %s172, %s186
      %p188 = scmp.eq.s32.totalorder %s31, 0
      %p189 = por %p187, %p188
      %s191 = sadd.s32 %s190, 1
      %p194 = scmp.eq.s32.totalorder %s25, 2
      %p195 = scmp.ne.s32.totalorder %s190, %s192
      %p196 = scmp.eq.s32.totalorder %s25, 0
      %p197 = por %p195, %p196
      %p198 = scmp.ne.s32.totalorder %s190, %s192
      %p199 = scmp.eq.s32.totalorder %s30, 2
      %p200 = por %p198, %p199
      %p201 = scmp.ne.s32.totalorder %s192, %s193
      %p202 = scmp.eq.s32.totalorder %s30, 0
      %p203 = por %p201, %p202
      %p204 = scmp.ne.s32.totalorder %s192, %s193
      %p205 = scmp.eq.s32.totalorder %s31, 2
      %p206 = por %p204, %p205
      %p208 = scmp.ne.s32.totalorder %s193, %s207
      %p209 = scmp.eq.s32.totalorder %s31, 0
      %p210 = por %p208, %p209
      %s212 = sadd.s32 %s211, 1
      %p215 = scmp.eq.s32.totalorder %s25, 2
      %p216 = scmp.ne.s32.totalorder %s211, %s213
      %p217 = scmp.eq.s32.totalorder %s25, 0
      %p218 = por %p216, %p217
      %p219 = scmp.ne.s32.totalorder %s211, %s213
      %p220 = scmp.eq.s32.totalorder %s30, 2
      %p221 = por %p219, %p220
      %p222 = scmp.ne.s32.totalorder %s213, %s214
      %p223 = scmp.eq.s32.totalorder %s30, 0
      %p224 = por %p222, %p223
      %p225 = scmp.ne.s32.totalorder %s213, %s214
      %p226 = scmp.eq.s32.totalorder %s31, 2
      %p227 = por %p225, %p226
      %p229 = scmp.ne.s32.totalorder %s214, %s228
      %p230 = scmp.eq.s32.totalorder %s31, 0
      %p231 = por %p229, %p230
      %s233 = sadd.s32 %s232, 1
      %p236 = scmp.eq.s32.totalorder %s25, 2
      %p237 = scmp.ne.s32.totalorder %s232, %s234
      %p238 = scmp.eq.s32.totalorder %s25, 0
      %p239 = por %p237, %p238
      %p240 = scmp.ne.s32.totalorder %s232, %s234
      %p241 = scmp.eq.s32.totalorder %s30, 2
      %p242 = por %p240, %p241
      %p243 = scmp.ne.s32.totalorder %s234, %s235
      %p244 = scmp.eq.s32.totalorder %s30, 0
      %p245 = por %p243, %p244
      %p246 = scmp.ne.s32.totalorder %s234, %s235
      %p247 = scmp.eq.s32.totalorder %s31, 2
      %p248 = por %p246, %p247
      %p250 = scmp.ne.s32.totalorder %s235, %s249
      %p251 = scmp.eq.s32.totalorder %s31, 0
      %p252 = por %p250, %p251
      %s254 = sadd.s32 %s253, 1
      %p257 = scmp.eq.s32.totalorder %s25, 2
      %p258 = scmp.ne.s32.totalorder %s253, %s255
      %p259 = scmp.eq.s32.totalorder %s25, 0
      %p260 = por %p258, %p259
      %p261 = scmp.ne.s32.totalorder %s253, %s255
      %p262 = scmp.eq.s32.totalorder %s30, 2
      %p263 = por %p261, %p262
      %p264 = scmp.ne.s32.totalorder %s255, %s256
      %p265 = scmp.eq.s32.totalorder %s30, 0
      %p266 = por %p264, %p265
      %p267 = scmp.ne.s32.totalorder %s255, %s256
      %p268 = scmp.eq.s32.totalorder %s31, 2
      %p269 = por %p267, %p268
      %p271 = scmp.ne.s32.totalorder %s256, %s270
      %p272 = scmp.eq.s32.totalorder %s31, 0
      %p273 = por %p271, %p272
      %s275 = sadd.s32 %s274, 1
      %p278 = scmp.eq.s32.totalorder %s25, 2
      %p279 = scmp.ne.s32.totalorder %s274, %s276
      %p280 = scmp.eq.s32.totalorder %s25, 0
      %p281 = por %p279, %p280
      %p282 = scmp.ne.s32.totalorder %s274, %s276
      %p283 = scmp.eq.s32.totalorder %s30, 2
      %p284 = por %p282, %p283
      %p285 = scmp.ne.s32.totalorder %s276, %s277
      %p286 = scmp.eq.s32.totalorder %s30, 0
      %p287 = por %p285, %p286
      %p288 = scmp.ne.s32.totalorder %s276, %s277
      %p289 = scmp.eq.s32.totalorder %s31, 2
      %p290 = por %p288, %p289
      %p292 = scmp.ne.s32.totalorder %s277, %s291
      %p293 = scmp.eq.s32.totalorder %s31, 0
      %p294 = por %p292, %p293
      %s296 = sadd.s32 %s295, 1
      %p299 = scmp.eq.s32.totalorder %s25, 2
      %p300 = scmp.ne.s32.totalorder %s295, %s297
      %p301 = scmp.eq.s32.totalorder %s25, 0
      %p302 = por %p300, %p301
      %p303 = scmp.ne.s32.totalorder %s295, %s297
      %p304 = scmp.eq.s32.totalorder %s30, 2
      %p305 = por %p303, %p304
      %p306 = scmp.ne.s32.totalorder %s297, %s298
      %p307 = scmp.eq.s32.totalorder %s30, 0
      %p308 = por %p306, %p307
      %p309 = scmp.ne.s32.totalorder %s297, %s298
      %p310 = scmp.eq.s32.totalorder %s31, 2
      %p311 = por %p309, %p310
      %p313 = scmp.ne.s32.totalorder %s298, %s312
      %p314 = scmp.eq.s32.totalorder %s31, 0
      %p315 = por %p313, %p314
      %s317 = sadd.s32 %s316, 1
      %p320 = scmp.eq.s32.totalorder %s25, 2
      %p321 = scmp.ne.s32.totalorder %s316, %s318
      %p322 = scmp.eq.s32.totalorder %s25, 0
      %p323 = por %p321, %p322
      %p324 = scmp.ne.s32.totalorder %s316, %s318
      %p325 = scmp.eq.s32.totalorder %s30, 2
      %p326 = por %p324, %p325
      %p327 = scmp.ne.s32.totalorder %s318, %s319
      %p328 = scmp.eq.s32.totalorder %s30, 0
      %p329 = por %p327, %p328
      %p330 = scmp.ne.s32.totalorder %s318, %s319
      %p331 = scmp.eq.s32.totalorder %s31, 2
      %p332 = por %p330, %p331
      %p334 = scmp.ne.s32.totalorder %s319, %s333
      %p335 = scmp.eq.s32.totalorder %s31, 0
      %p336 = por %p334, %p335
      %s338 = sadd.s32 %s337, 1
      %p341 = scmp.eq.s32.totalorder %s25, 2
      %p342 = scmp.ne.s32.totalorder %s337, %s339
      %p343 = scmp.eq.s32.totalorder %s25, 0
      %p344 = por %p342, %p343
      %p345 = scmp.ne.s32.totalorder %s337, %s339
      %p346 = scmp.eq.s32.totalorder %s30, 2
      %p347 = por %p345, %p346
      %p348 = scmp.ne.s32.totalorder %s339, %s340
      %p349 = scmp.eq.s32.totalorder %s30, 0
      %p350 = por %p348, %p349
      %p351 = scmp.ne.s32.totalorder %s339, %s340
      %p352 = scmp.eq.s32.totalorder %s31, 2
      %p353 = por %p351, %p352
      %p355 = scmp.ne.s32.totalorder %s340, %s354
      %p356 = scmp.eq.s32.totalorder %s31, 0
      %p357 = por %p355, %p356
      %s359 = sadd.s32 %s358, 1
      %p362 = scmp.eq.s32.totalorder %s25, 2
      %p363 = scmp.ne.s32.totalorder %s358, %s360
      %p364 = scmp.eq.s32.totalorder %s25, 0
      %p365 = por %p363, %p364
      %p366 = scmp.ne.s32.totalorder %s358, %s360
      %p367 = scmp.eq.s32.totalorder %s30, 2
      %p368 = por %p366, %p367
      %p369 = scmp.ne.s32.totalorder %s360, %s361
      %p370 = scmp.eq.s32.totalorder %s30, 0
      %p371 = por %p369, %p370
      %p372 = scmp.ne.s32.totalorder %s360, %s361
      %p373 = scmp.eq.s32.totalorder %s31, 2
      %p374 = por %p372, %p373
      %p376 = scmp.ne.s32.totalorder %s361, %s375
      %p377 = scmp.eq.s32.totalorder %s31, 0
      %p378 = por %p376, %p377
      %s380 = sadd.s32 %s379, 1
      %p383 = scmp.eq.s32.totalorder %s25, 2
      %p384 = scmp.ne.s32.totalorder %s379, %s381
      %p385 = scmp.eq.s32.totalorder %s25, 0
      %p386 = por %p384, %p385
      %p387 = scmp.ne.s32.totalorder %s379, %s381
      %p388 = scmp.eq.s32.totalorder %s30, 2
      %p389 = por %p387, %p388
      %p390 = scmp.ne.s32.totalorder %s381, %s382
      %p391 = scmp.eq.s32.totalorder %s30, 0
      %p392 = por %p390, %p391
      %p393 = scmp.ne.s32.totalorder %s381, %s382
      %p394 = scmp.eq.s32.totalorder %s31, 2
      %p395 = por %p393, %p394
      %p397 = scmp.ne.s32.totalorder %s382, %s396
      %p398 = scmp.eq.s32.totalorder %s31, 0
      %p399 = por %p397, %p398
      %s401 = sadd.s32 %s400, 1
      %p404 = scmp.eq.s32.totalorder %s25, 2
      %p405 = scmp.ne.s32.totalorder %s400, %s402
      %p406 = scmp.eq.s32.totalorder %s25, 0
      %p407 = por %p405, %p406
      %p408 = scmp.ne.s32.totalorder %s400, %s402
      %p409 = scmp.eq.s32.totalorder %s30, 2
      %p410 = por %p408, %p409
      %p411 = scmp.ne.s32.totalorder %s402, %s403
      %p412 = scmp.eq.s32.totalorder %s30, 0
      %p413 = por %p411, %p412
      %p414 = scmp.ne.s32.totalorder %s402, %s403
      %p415 = scmp.eq.s32.totalorder %s31, 2
      %p416 = por %p414, %p415
      %p418 = scmp.ne.s32.totalorder %s403, %s417
      %p419 = scmp.eq.s32.totalorder %s31, 0
      %p420 = por %p418, %p419
      %p421 = scmp.le.s32.totalorder 1, %s25
      %p422 = scmp.lt.s32.totalorder %s25, 4
      %p423 = pnand %p421, %p422
      %p424 = pneg %p423
      // Predicated region
      $region9: #{tpu_custom_call.1} parent=5 // pred_check
        _
      $region10: #{tpu_custom_call.1} parent=5 // pred_check_branch
        %426 = sbr.rel (%p423) target = $region12
      $region11: #{tpu_custom_call.1} parent=5 // pred_region
        %s427 = ssub.s32 %s25, 1
        // Predicated region
        $region13: #{tpu_custom_call.1} parent=11 // pred_check
          %p428 = pneg %p98
        $region14: #{tpu_custom_call.1} parent=11 // pred_check_branch
          %430 = sbr.rel (%p428) target = $region16
        $region15: #{tpu_custom_call.1} parent=11 // pred_region
          _
        $region16: #{tpu_custom_call.1} parent=11 // pred_fallthru
          _
        // Predicated region
        $region17: #{tpu_custom_call.1} parent=11 // pred_check
          %p431 = pneg %p119
        $region18: #{tpu_custom_call.1} parent=11 // pred_check_branch
          %433 = sbr.rel (%p431) target = $region20
        $region19: #{tpu_custom_call.1} parent=11 // pred_region
          _
        $region20: #{tpu_custom_call.1} parent=11 // pred_fallthru
          _
        // Predicated region
        $region21: #{tpu_custom_call.1} parent=11 // pred_check
          %p434 = pneg %p140
        $region22: #{tpu_custom_call.1} parent=11 // pred_check_branch
          %436 = sbr.rel (%p434) target = $region24
        $region23: #{tpu_custom_call.1} parent=11 // pred_region
          _
        $region24: #{tpu_custom_call.1} parent=11 // pred_fallthru
          _
        // Predicated region
        $region25: #{tpu_custom_call.1} parent=11 // pred_check
          %p437 = pneg %p161
        $region26: #{tpu_custom_call.1} parent=11 // pred_check_branch
          %439 = sbr.rel (%p437) target = $region28
        $region27: #{tpu_custom_call.1} parent=11 // pred_region
          _
        $region28: #{tpu_custom_call.1} parent=11 // pred_fallthru
          _
        // Predicated region
        $region29: #{tpu_custom_call.1} parent=11 // pred_check
          %p440 = pneg %p182
        $region30: #{tpu_custom_call.1} parent=11 // pred_check_branch
          %442 = sbr.rel (%p440) target = $region32
        $region31: #{tpu_custom_call.1} parent=11 // pred_region
          _
        $region32: #{tpu_custom_call.1} parent=11 // pred_fallthru
          _
        // Predicated region
        $region33: #{tpu_custom_call.1} parent=11 // pred_check
          %p443 = pneg %p203
        $region34: #{tpu_custom_call.1} parent=11 // pred_check_branch
          %445 = sbr.rel (%p443) target = $region36
        $region35: #{tpu_custom_call.1} parent=11 // pred_region
          _
        $region36: #{tpu_custom_call.1} parent=11 // pred_fallthru
          _
        // Predicated region
        $region37: #{tpu_custom_call.1} parent=11 // pred_check
          %p446 = pneg %p224
        $region38: #{tpu_custom_call.1} parent=11 // pred_check_branch
          %448 = sbr.rel (%p446) target = $region40
        $region39: #{tpu_custom_call.1} parent=11 // pred_region
          _
        $region40: #{tpu_custom_call.1} parent=11 // pred_fallthru
          _
        // Predicated region
        $region41: #{tpu_custom_call.1} parent=11 // pred_check
          %p449 = pneg %p245
        $region42: #{tpu_custom_call.1} parent=11 // pred_check_branch
          %451 = sbr.rel (%p449) target = $region44
        $region43: #{tpu_custom_call.1} parent=11 // pred_region
          _
        $region44: #{tpu_custom_call.1} parent=11 // pred_fallthru
          _
        // Predicated region
        $region45: #{tpu_custom_call.1} parent=11 // pred_check
          %p452 = pneg %p266
        $region46: #{tpu_custom_call.1} parent=11 // pred_check_branch
          %454 = sbr.rel (%p452) target = $region48
        $region47: #{tpu_custom_call.1} parent=11 // pred_region
          _
        $region48: #{tpu_custom_call.1} parent=11 // pred_fallthru
          _
        // Predicated region
        $region49: #{tpu_custom_call.1} parent=11 // pred_check
          %p455 = pneg %p287
        $region50: #{tpu_custom_call.1} parent=11 // pred_check_branch
          %457 = sbr.rel (%p455) target = $region52
        $region51: #{tpu_custom_call.1} parent=11 // pred_region
          _
        $region52: #{tpu_custom_call.1} parent=11 // pred_fallthru
          _
        // Predicated region
        $region53: #{tpu_custom_call.1} parent=11 // pred_check
          %p458 = pneg %p308
        $region54: #{tpu_custom_call.1} parent=11 // pred_check_branch
          %460 = sbr.rel (%p458) target = $region56
        $region55: #{tpu_custom_call.1} parent=11 // pred_region
          _
        $region56: #{tpu_custom_call.1} parent=11 // pred_fallthru
          _
        // Predicated region
        $region57: #{tpu_custom_call.1} parent=11 // pred_check
          %p461 = pneg %p329
        $region58: #{tpu_custom_call.1} parent=11 // pred_check_branch
          %463 = sbr.rel (%p461) target = $region60
        $region59: #{tpu_custom_call.1} parent=11 // pred_region
          _
        $region60: #{tpu_custom_call.1} parent=11 // pred_fallthru
          _
        // Predicated region
        $region61: #{tpu_custom_call.1} parent=11 // pred_check
          %p464 = pneg %p350
        $region62: #{tpu_custom_call.1} parent=11 // pred_check_branch
          %466 = sbr.rel (%p464) target = $region64
        $region63: #{tpu_custom_call.1} parent=11 // pred_region
          _
        $region64: #{tpu_custom_call.1} parent=11 // pred_fallthru
          _
        // Predicated region
        $region65: #{tpu_custom_call.1} parent=11 // pred_check
          %p467 = pneg %p371
        $region66: #{tpu_custom_call.1} parent=11 // pred_check_branch
          %469 = sbr.rel (%p467) target = $region68
        $region67: #{tpu_custom_call.1} parent=11 // pred_region
          _
        $region68: #{tpu_custom_call.1} parent=11 // pred_fallthru
          _
        // Predicated region
        $region69: #{tpu_custom_call.1} parent=11 // pred_check
          %p470 = pneg %p392
        $region70: #{tpu_custom_call.1} parent=11 // pred_check_branch
          %472 = sbr.rel (%p470) target = $region72
        $region71: #{tpu_custom_call.1} parent=11 // pred_region
          _
        $region72: #{tpu_custom_call.1} parent=11 // pred_fallthru
          _
      $region12: #{tpu_custom_call.1} parent=5 // pred_fallthru
        _
      %p473 = scmp.lt.s32.totalorder %s25, 3
      // Predicated region
      $region73: #{tpu_custom_call.1} parent=5 // pred_check
        %p474 = pneg %p473
      $region74: #{tpu_custom_call.1} parent=5 // pred_check_branch
        %476 = sbr.rel (%p474) target = $region76
      $region75: #{tpu_custom_call.1} parent=5 // pred_region
        // Predicated region
        $region77: #{tpu_custom_call.1} parent=75 // pred_check
          %p477 = pneg %p45
        $region78: #{tpu_custom_call.1} parent=75 // pred_check_branch
          %479 = sbr.rel (%p477) target = $region80
        $region79: #{tpu_custom_call.1} parent=75 // pred_region
          %s480 = smul.u32 32, %s25
          %p481 = scmp.lt.s32.totalorder %s480, 95
          %s482 = scalar_select %p481, %s480, 95
          %s483 = smul.addr %s482, 4
          %s484 = scalar_lea.vmem %s0, %s483
          %s485 = smul.u32 32, %s25
        $region80: #{tpu_custom_call.1} parent=75 // pred_fallthru
          _
        // Predicated region
        $region81: #{tpu_custom_call.1} parent=75 // pred_check
          %p486 = pneg %p71
        $region82: #{tpu_custom_call.1} parent=75 // pred_check_branch
          %488 = sbr.rel (%p486) target = $region84
        $region83: #{tpu_custom_call.1} parent=75 // pred_region
          %s489 = smul.u32 32, %s25
          %p490 = scmp.lt.s32.totalorder %s489, 95
          %s491 = scalar_select %p490, %s489, 95
          %s492 = smul.addr %s491, 8
          %s493 = scalar_lea.vmem %s1, %s492
          %s494 = smul.u32 32, %s25
        $region84: #{tpu_custom_call.1} parent=75 // pred_fallthru
          _
      $region76: #{tpu_custom_call.1} parent=5 // pred_fallthru
        _
      %p495 = scmp.le.s32.totalorder 1, %s25
      %p496 = scmp.lt.s32.totalorder %s25, 4
      %p497 = pnand %p495, %p496
      %p498 = pneg %p497
      // Predicated region
      $region85: #{tpu_custom_call.1} parent=5 // pred_check
        _
      $region86: #{tpu_custom_call.1} parent=5 // pred_check_branch
        %500 = sbr.rel (%p497) target = $region88
      $region87: #{tpu_custom_call.1} parent=5 // pred_region
        %s501 = ssub.s32 %s25, 1
        %s502 = smul.u32 32, %s30
        %p503 = scmp.lt.s32.totalorder %s502, 95
        %s504 = scalar_select %p503, %s502, 95
        %s505 = smul.addr %s504, 4
        %s506 = scalar_lea.vmem %s0, %s505
        %p507 = pneg %p51
        %p508 = pneg %p48
        %s509 = smul.u32 32, %s30
        %p510 = scmp.lt.s32.totalorder %s509, 95
        %s511 = scalar_select %p510, %s509, 95
        %s512 = smul.addr %s511, 8
        %s513 = scalar_lea.vmem %s1, %s512
        %p514 = pneg %p77
        %p515 = pneg %p74
        %p516 = pneg %p98
        %p517 = pneg %p95
        %p518 = pneg %p119
        %p519 = pneg %p116
        %p520 = pneg %p140
        %p521 = pneg %p137
        %p522 = pneg %p161
        %p523 = pneg %p158
        %p524 = pneg %p182
        %p525 = pneg %p179
        %p526 = pneg %p203
        %p527 = pneg %p200
        %p528 = pneg %p224
        %p529 = pneg %p221
        %p530 = pneg %p245
        %p531 = pneg %p242
        %p532 = pneg %p266
        %p533 = pneg %p263
        %p534 = pneg %p287
        %p535 = pneg %p284
        %p536 = pneg %p308
        %p537 = pneg %p305
        %p538 = pneg %p329
        %p539 = pneg %p326
        %p540 = pneg %p350
        %p541 = pneg %p347
        %p542 = pneg %p371
        %p543 = pneg %p368
        %p544 = pneg %p392
        %p545 = pneg %p389
        %p546 = pneg %p413
        %p547 = pneg %p410
        %s548 = smul.u32 32, %s30
        %p549 = scmp.lt.s32.totalorder %s548, 95
        %s550 = scalar_select %p549, %s548, 95
        %s551 = smul.addr %s550, 4
        %s552 = scalar_lea.vmem %s0, %s551
        %s553 = smul.u32 32, %s30
        %s554 = smul.u32 32, %s30
        %p555 = scmp.lt.s32.totalorder %s554, 95
        %s556 = scalar_select %p555, %s554, 95
        %s557 = smul.addr %s556, 8
        %s558 = scalar_lea.vmem %s1, %s557
        %s559 = smul.u32 32, %s30
        %p561 = scmp.eq.s32.totalorder %s30, 0
        // Predicated region
        $region89: #{tpu_custom_call.1} parent=87 // pred_check
          %p562 = pneg %p561
        $region90: #{tpu_custom_call.1} parent=87 // pred_check_branch
          %564 = sbr.rel (%p562) target = $region92
        $region91: #{tpu_custom_call.1} parent=87 // pred_region
          %565 = vst [vmem:[#allocation2] sm:$0xff] -1e+30
        $region92: #{tpu_custom_call.1} parent=87 // pred_fallthru
          _
        %v566 = vld [vmem:[%s552] sm:$0xf]
        %v567 = vld [vmem:[%s552 + $0x4] sm:$0xf]
        %v568 = vld [vmem:[%s552 + $0x8] sm:$0xf]
        %v569 = vld [vmem:[%s552 + $0xc] sm:$0xf]
        %v570 = vld [vmem:[%s552 + $0x10] sm:$0xf]
        %v571 = vld [vmem:[%s552 + $0x14] sm:$0xf]
        %v572 = vld [vmem:[%s552 + $0x18] sm:$0xf]
        %v573 = vld [vmem:[%s552 + $0x1c] sm:$0xf]
        %v574 = vld [vmem:[%s552 + $0x20] sm:$0xf]
        %v575 = vld [vmem:[%s552 + $0x24] sm:$0xf]
        %v576 = vld [vmem:[%s552 + $0x28] sm:$0xf]
        %v577 = vld [vmem:[%s552 + $0x2c] sm:$0xf]
        %v578 = vld [vmem:[%s552 + $0x30] sm:$0xf]
        %v579 = vld [vmem:[%s552 + $0x34] sm:$0xf]
        %v580 = vld [vmem:[%s552 + $0x38] sm:$0xf]
        %v581 = vld [vmem:[%s552 + $0x3c] sm:$0xf]
        %v582 = vld [vmem:[%s552 + $0x40] sm:$0xf]
        %v583 = vld [vmem:[%s552 + $0x44] sm:$0xf]
        %v584 = vld [vmem:[%s552 + $0x48] sm:$0xf]
        %v585 = vld [vmem:[%s552 + $0x4c] sm:$0xf]
        %v586 = vld [vmem:[%s552 + $0x50] sm:$0xf]
        %v587 = vld [vmem:[%s552 + $0x54] sm:$0xf]
        %v588 = vld [vmem:[%s552 + $0x58] sm:$0xf]
        %v589 = vld [vmem:[%s552 + $0x5c] sm:$0xf]
        %v590 = vld [vmem:[%s552 + $0x60] sm:$0xf]
        %v591 = vld [vmem:[%s552 + $0x64] sm:$0xf]
        %v592 = vld [vmem:[%s552 + $0x68] sm:$0xf]
        %v593 = vld [vmem:[%s552 + $0x6c] sm:$0xf]
        %v594 = vld [vmem:[%s552 + $0x70] sm:$0xf]
        %v595 = vld [vmem:[%s552 + $0x74] sm:$0xf]
        %v596 = vld [vmem:[%s552 + $0x78] sm:$0xf]
        %v597 = vld [vmem:[%s552 + $0x7c] sm:$0xf]
        %v598 = vld [vmem:[%s2] sm:$0xff]
        %v599 = vld [vmem:[%s2 + $0x8] sm:$0xff]
        %v600 = vld [vmem:[%s2 + $0x10] sm:$0xff]
        %v601 = vld [vmem:[%s2 + $0x18] sm:$0xff]
        %v602 = vld [vmem:[%s2 + $0x20] sm:$0xff]
        %v603 = vld [vmem:[%s2 + $0x28] sm:$0xff]
        %v604 = vld [vmem:[%s2 + $0x30] sm:$0xff]
        %v605 = vld [vmem:[%s2 + $0x38] sm:$0xff]
        %v606 = vld [vmem:[%s2 + $0x40] sm:$0xff]
        %v607 = vld [vmem:[%s2 + $0x48] sm:$0xff]
        %v608 = vld [vmem:[%s2 + $0x50] sm:$0xff]
        %v609 = vld [vmem:[%s2 + $0x58] sm:$0xff]
        %v610 = vld [vmem:[%s2 + $0x60] sm:$0xff]
        %v611 = vld [vmem:[%s2 + $0x68] sm:$0xff]
        %v612 = vld [vmem:[%s2 + $0x70] sm:$0xff]
        %v613 = vld [vmem:[%s2 + $0x78] sm:$0xff]
        %v614 = vld [vmem:[%s3] sm:$0x3]
        %v616 = vlaneseq
        %v617 = vshrl.u32 %v616, 7
        %v618 = vsub.s32 0, %v617
        %v619 = vrot.slane %v614, %v618
        %v620 = vlaneseq
        %v621 = vshrl.u32 %v620, 7
        %v622 = vsub.s32 1, %v621
        %v623 = vrot.slane %v614, %v622
        %v658 = vunpack.c.l.b16 %v566
        %v659 = vunpack.c.l.b16 %v567
        %v660 = vunpack.c.l.b16 %v568
        %v661 = vunpack.c.l.b16 %v569
        %v662 = vunpack.c.l.b16 %v570
        %v663 = vunpack.c.l.b16 %v571
        %v664 = vunpack.c.l.b16 %v572
        %v665 = vunpack.c.l.b16 %v573
        %v666 = vunpack.c.l.b16 %v574
        %v667 = vunpack.c.l.b16 %v575
        %v668 = vunpack.c.l.b16 %v576
        %v669 = vunpack.c.l.b16 %v577
        %v670 = vunpack.c.l.b16 %v578
        %v671 = vunpack.c.l.b16 %v579
        %v672 = vunpack.c.l.b16 %v580
        %v673 = vunpack.c.l.b16 %v581
        %v674 = vunpack.c.l.b16 %v582
        %v675 = vunpack.c.l.b16 %v583
        %v676 = vunpack.c.l.b16 %v584
        %v677 = vunpack.c.l.b16 %v585
        %v678 = vunpack.c.l.b16 %v586
        %v679 = vunpack.c.l.b16 %v587
        %v680 = vunpack.c.l.b16 %v588
        %v681 = vunpack.c.l.b16 %v589
        %v682 = vunpack.c.l.b16 %v590
        %v683 = vunpack.c.l.b16 %v591
        %v684 = vunpack.c.l.b16 %v592
        %v685 = vunpack.c.l.b16 %v593
        %v686 = vunpack.c.l.b16 %v594
        %v687 = vunpack.c.l.b16 %v595
        %v688 = vunpack.c.l.b16 %v596
        %v689 = vunpack.c.l.b16 %v597
        %v690 = vpack.c.b16 %v659, %v658
        %v691 = vpack.c.b16 %v661, %v660
        %v692 = vpack.c.b16 %v663, %v662
        %v693 = vpack.c.b16 %v665, %v664
        %v694 = vpack.c.b16 %v667, %v666
        %v695 = vpack.c.b16 %v669, %v668
        %v696 = vpack.c.b16 %v671, %v670
        %v697 = vpack.c.b16 %v673, %v672
        %v698 = vpack.c.b16 %v675, %v674
        %v699 = vpack.c.b16 %v677, %v676
        %v700 = vpack.c.b16 %v679, %v678
        %v701 = vpack.c.b16 %v681, %v680
        %v702 = vpack.c.b16 %v683, %v682
        %v703 = vpack.c.b16 %v685, %v684
        %v704 = vpack.c.b16 %v687, %v686
        %v705 = vpack.c.b16 %v689, %v688
        %v738 = vunpack.c.l.b16 %v598
        %v739 = vunpack.c.h.b16 %v598
        %v740 = vunpack.c.l.b16 %v599
        %v741 = vunpack.c.h.b16 %v599
        %v742 = vunpack.c.l.b16 %v600
        %v743 = vunpack.c.h.b16 %v600
        %v744 = vunpack.c.l.b16 %v601
        %v745 = vunpack.c.h.b16 %v601
        %v746 = vunpack.c.l.b16 %v602
        %v747 = vunpack.c.h.b16 %v602
        %v748 = vunpack.c.l.b16 %v603
        %v749 = vunpack.c.h.b16 %v603
        %v750 = vunpack.c.l.b16 %v604
        %v751 = vunpack.c.h.b16 %v604
        %v752 = vunpack.c.l.b16 %v605
        %v753 = vunpack.c.h.b16 %v605
        %v754 = vunpack.c.l.b16 %v606
        %v755 = vunpack.c.h.b16 %v606
        %v756 = vunpack.c.l.b16 %v607
        %v757 = vunpack.c.h.b16 %v607
        %v758 = vunpack.c.l.b16 %v608
        %v759 = vunpack.c.h.b16 %v608
        %v760 = vunpack.c.l.b16 %v609
        %v761 = vunpack.c.h.b16 %v609
        %v762 = vunpack.c.l.b16 %v610
        %v763 = vunpack.c.h.b16 %v610
        %v764 = vunpack.c.l.b16 %v611
        %v765 = vunpack.c.h.b16 %v611
        %v766 = vunpack.c.l.b16 %v612
        %v767 = vunpack.c.h.b16 %v612
        %v768 = vunpack.c.l.b16 %v613
        %v769 = vunpack.c.h.b16 %v613
        %v770 = vpack.c.b16 %v740, %v738
        %v771 = vpack.c.b16 %v741, %v739
        %v772 = vpack.c.b16 %v744, %v742
        %v773 = vpack.c.b16 %v745, %v743
        %v774 = vpack.c.b16 %v748, %v746
        %v775 = vpack.c.b16 %v749, %v747
        %v776 = vpack.c.b16 %v752, %v750
        %v777 = vpack.c.b16 %v753, %v751
        %v778 = vpack.c.b16 %v756, %v754
        %v779 = vpack.c.b16 %v757, %v755
        %v780 = vpack.c.b16 %v760, %v758
        %v781 = vpack.c.b16 %v761, %v759
        %v782 = vpack.c.b16 %v764, %v762
        %v783 = vpack.c.b16 %v765, %v763
        %v784 = vpack.c.b16 %v768, %v766
        %v785 = vpack.c.b16 %v769, %v767
        %802 = vmatprep.subr.bf16.mxu0 %v771
        %803 = vmatpush1.bf16.msra.mxu0 %v770
        %804 = vmatprep.subr.bf16.mxu0 %v773
        %805 = vmatpush1.bf16.msra.mxu0 %v772
        %806 = vmatprep.subr.bf16.mxu0 %v775
        %807 = vmatpush1.bf16.msra.mxu0 %v774
        %808 = vmatprep.subr.bf16.mxu0 %v777
        %809 = vmatpush1.bf16.msra.mxu0 %v776
        %810 = vmatprep.subr.bf16.mxu0 %v779
        %811 = vmatpush1.bf16.msra.mxu0 %v778
        %812 = vmatprep.subr.bf16.mxu0 %v781
        %813 = vmatpush1.bf16.msra.mxu0 %v780
        %814 = vmatprep.subr.bf16.mxu0 %v783
        %815 = vmatpush1.bf16.msra.mxu0 %v782
        %816 = vmatprep.subr.bf16.mxu0 %v785
        %817 = vmatpush1.bf16.msra.mxu0 %v784
        %818 = vmatprep.subr.bf16.mxu0 0
        %819 = vmatpush1.bf16.msra.mxu0 0
        %820 = vmatprep.subr.bf16.mxu0 0
        %821 = vmatpush1.bf16.msra.mxu0 0
        %822 = vmatprep.subr.bf16.mxu0 0
        %823 = vmatpush1.bf16.msra.mxu0 0
        %824 = vmatprep.subr.bf16.mxu0 0
        %825 = vmatpush1.bf16.msra.mxu0 0
        %826 = vmatprep.subr.bf16.mxu0 0
        %827 = vmatpush1.bf16.msra.mxu0 0
        %828 = vmatprep.subr.bf16.mxu0 0
        %829 = vmatpush1.bf16.msra.mxu0 0
        %830 = vmatprep.subr.bf16.mxu0 0
        %831 = vmatpush1.bf16.msra.mxu0 0
        %832 = vmatprep.subr.bf16.mxu0 0
        %833 = vmatpush1.bf16.msra.mxu0 0
        %834 = vmatprep.mubr.bf16.mxu0 0
        %835 = vmatmul.mubr.bf16.gmra.mrb[0].mxu0 %v690
        %v836 = vpop.f32.mrb[0].mxu0
        %v837 = vadd.f32 %v619, %v836
        %v838 = vpop.f32.mrb[0].mxu0
        %v839 = vadd.f32 %v623, %v838
        %v840 = vpop.f32.mrb[0].mxu0
        %v841 = vadd.f32 %v619, %v840
        %v842 = vpop.f32.mrb[0].mxu0
        %v843 = vadd.f32 %v623, %v842
        %844 = vmatprep.mubr.bf16.mxu0 0
        %845 = vmatmul.mubr.bf16.gmra.mrb[0].mxu0 %v691
        %v846 = vpop.f32.mrb[0].mxu0
        %v847 = vadd.f32 %v619, %v846
        %v848 = vpop.f32.mrb[0].mxu0
        %v849 = vadd.f32 %v623, %v848
        %v850 = vpop.f32.mrb[0].mxu0
        %v851 = vadd.f32 %v619, %v850
        %v852 = vpop.f32.mrb[0].mxu0
        %v853 = vadd.f32 %v623, %v852
        %854 = vmatprep.mubr.bf16.mxu0 0
        %855 = vmatmul.mubr.bf16.gmra.mrb[0].mxu0 %v692
        %v856 = vpop.f32.mrb[0].mxu0
        %v857 = vadd.f32 %v619, %v856
        %v858 = vpop.f32.mrb[0].mxu0
        %v859 = vadd.f32 %v623, %v858
        %v860 = vpop.f32.mrb[0].mxu0
        %v861 = vadd.f32 %v619, %v860
        %v862 = vpop.f32.mrb[0].mxu0
        %v863 = vadd.f32 %v623, %v862
        %864 = vmatprep.mubr.bf16.mxu0 0
        %865 = vmatmul.mubr.bf16.gmra.mrb[0].mxu0 %v693
        %v866 = vpop.f32.mrb[0].mxu0
        %v867 = vadd.f32 %v619, %v866
        %v868 = vpop.f32.mrb[0].mxu0
        %v869 = vadd.f32 %v623, %v868
        %v870 = vpop.f32.mrb[0].mxu0
        %v871 = vadd.f32 %v619, %v870
        %v872 = vpop.f32.mrb[0].mxu0
        %v873 = vadd.f32 %v623, %v872
        %874 = vmatprep.mubr.bf16.mxu0 0
        %875 = vmatmul.mubr.bf16.gmra.mrb[0].mxu0 %v694
        %v876 = vpop.f32.mrb[0].mxu0
        %v877 = vadd.f32 %v619, %v876
        %v878 = vpop.f32.mrb[0].mxu0
        %v879 = vadd.f32 %v623, %v878
        %v880 = vpop.f32.mrb[0].mxu0
        %v881 = vadd.f32 %v619, %v880
        %v882 = vpop.f32.mrb[0].mxu0
        %v883 = vadd.f32 %v623, %v882
        %884 = vmatprep.mubr.bf16.mxu0 0
        %885 = vmatmul.mubr.bf16.gmra.mrb[0].mxu0 %v695
        %v886 = vpop.f32.mrb[0].mxu0
        %v887 = vadd.f32 %v619, %v886
        %v888 = vpop.f32.mrb[0].mxu0
        %v889 = vadd.f32 %v623, %v888
        %v890 = vpop.f32.mrb[0].mxu0
        %v891 = vadd.f32 %v619, %v890
        %v892 = vpop.f32.mrb[0].mxu0
        %v893 = vadd.f32 %v623, %v892
        %894 = vmatprep.mubr.bf16.mxu0 0
        %895 = vmatmul.mubr.bf16.gmra.mrb[0].mxu0 %v696
        %v896 = vpop.f32.mrb[0].mxu0
        %v897 = vadd.f32 %v619, %v896
        %v898 = vpop.f32.mrb[0].mxu0
        %v899 = vadd.f32 %v623, %v898
        %v900 = vpop.f32.mrb[0].mxu0
        %v901 = vadd.f32 %v619, %v900
        %v902 = vpop.f32.mrb[0].mxu0
        %v903 = vadd.f32 %v623, %v902
        %904 = vmatprep.mubr.bf16.mxu0 0
        %905 = vmatmul.mubr.bf16.gmra.mrb[0].mxu0 %v697
        %v906 = vpop.f32.mrb[0].mxu0
        %v907 = vadd.f32 %v619, %v906
        %v908 = vpop.f32.mrb[0].mxu0
        %v909 = vadd.f32 %v623, %v908
        %v910 = vpop.f32.mrb[0].mxu0
        %v911 = vadd.f32 %v619, %v910
        %v912 = vpop.f32.mrb[0].mxu0
        %v913 = vadd.f32 %v623, %v912
        %914 = vmatprep.mubr.bf16.mxu0 0
        %915 = vmatmul.mubr.bf16.gmra.mrb[0].mxu0 %v698
        %v916 = vpop.f32.mrb[0].mxu0
        %v917 = vadd.f32 %v619, %v916
        %v918 = vpop.f32.mrb[0].mxu0
        %v919 = vadd.f32 %v623, %v918
        %v920 = vpop.f32.mrb[0].mxu0
        %v921 = vadd.f32 %v619, %v920
        %v922 = vpop.f32.mrb[0].mxu0
        %v923 = vadd.f32 %v623, %v922
        %924 = vmatprep.mubr.bf16.mxu0 0
        %925 = vmatmul.mubr.bf16.gmra.mrb[0].mxu0 %v699
        %v926 = vpop.f32.mrb[0].mxu0
        %v927 = vadd.f32 %v619, %v926
        %v928 = vpop.f32.mrb[0].mxu0
        %v929 = vadd.f32 %v623, %v928
        %v930 = vpop.f32.mrb[0].mxu0
        %v931 = vadd.f32 %v619, %v930
        %v932 = vpop.f32.mrb[0].mxu0
        %v933 = vadd.f32 %v623, %v932
        %934 = vmatprep.mubr.bf16.mxu0 0
        %935 = vmatmul.mubr.bf16.gmra.mrb[0].mxu0 %v700
        %v936 = vpop.f32.mrb[0].mxu0
        %v937 = vadd.f32 %v619, %v936
        %v938 = vpop.f32.mrb[0].mxu0
        %v939 = vadd.f32 %v623, %v938
        %v940 = vpop.f32.mrb[0].mxu0
        %v941 = vadd.f32 %v619, %v940
        %v942 = vpop.f32.mrb[0].mxu0
        %v943 = vadd.f32 %v623, %v942
        %944 = vmatprep.mubr.bf16.mxu0 0
        %945 = vmatmul.mubr.bf16.gmra.mrb[0].mxu0 %v701
        %v946 = vpop.f32.mrb[0].mxu0
        %v947 = vadd.f32 %v619, %v946
        %v948 = vpop.f32.mrb[0].mxu0
        %v949 = vadd.f32 %v623, %v948
        %v950 = vpop.f32.mrb[0].mxu0
        %v951 = vadd.f32 %v619, %v950
        %v952 = vpop.f32.mrb[0].mxu0
        %v953 = vadd.f32 %v623, %v952
        %954 = vmatprep.mubr.bf16.mxu0 0
        %955 = vmatmul.mubr.bf16.gmra.mrb[0].mxu0 %v702
        %v956 = vpop.f32.mrb[0].mxu0
        %v957 = vadd.f32 %v619, %v956
        %v958 = vpop.f32.mrb[0].mxu0
        %v959 = vadd.f32 %v623, %v958
        %v960 = vpop.f32.mrb[0].mxu0
        %v961 = vadd.f32 %v619, %v960
        %v962 = vpop.f32.mrb[0].mxu0
        %v963 = vadd.f32 %v623, %v962
        %964 = vmatprep.mubr.bf16.mxu0 0
        %965 = vmatmul.mubr.bf16.gmra.mrb[0].mxu0 %v703
        %v966 = vpop.f32.mrb[0].mxu0
        %v967 = vadd.f32 %v619, %v966
        %v968 = vpop.f32.mrb[0].mxu0
        %v969 = vadd.f32 %v623, %v968
        %v970 = vpop.f32.mrb[0].mxu0
        %v971 = vadd.f32 %v619, %v970
        %v972 = vpop.f32.mrb[0].mxu0
        %v973 = vadd.f32 %v623, %v972
        %974 = vmatprep.mubr.bf16.mxu0 0
        %975 = vmatmul.mubr.bf16.gmra.mrb[0].mxu0 %v704
        %v976 = vpop.f32.mrb[0].mxu0
        %v977 = vadd.f32 %v619, %v976
        %v978 = vpop.f32.mrb[0].mxu0
        %v979 = vadd.f32 %v623, %v978
        %v980 = vpop.f32.mrb[0].mxu0
        %v981 = vadd.f32 %v619, %v980
        %v982 = vpop.f32.mrb[0].mxu0
        %v983 = vadd.f32 %v623, %v982
        %984 = vmatprep.mubr.bf16.mxu0 0
        %985 = vmatmul.mubr.bf16.gmra.mrb[0].mxu0 %v705
        %v986 = vpop.f32.mrb[0].mxu0
        %v987 = vadd.f32 %v619, %v986
        %v988 = vpop.f32.mrb[0].mxu0
        %v989 = vadd.f32 %v623, %v988
        %v990 = vpop.f32.mrb[0].mxu0
        %v991 = vadd.f32 %v619, %v990
        %v992 = vpop.f32.mrb[0].mxu0
        %v993 = vadd.f32 %v623, %v992
        %994 = vdwg.mxu0
        %v995 = vld [vmem:[%s4] sm:$0x1]
        %v997 = vlaneseq
        %v998 = vshrl.u32 %v997, 7
        %v999 = vsub.s32 0, %v998
        %v1000 = vrot.slane %v995, %v999
        %v1002 = vmul.f32 %v839, %v1000
        %v1003 = vmul.f32 %v843, %v1000
        %v1004 = vmul.f32 %v849, %v1000
        %v1005 = vmul.f32 %v853, %v1000
        %v1006 = vmul.f32 %v859, %v1000
        %v1007 = vmul.f32 %v863, %v1000
        %v1008 = vmul.f32 %v869, %v1000
        %v1009 = vmul.f32 %v873, %v1000
        %v1010 = vmul.f32 %v879, %v1000
        %v1011 = vmul.f32 %v883, %v1000
        %v1012 = vmul.f32 %v889, %v1000
        %v1013 = vmul.f32 %v893, %v1000
        %v1014 = vmul.f32 %v899, %v1000
        %v1015 = vmul.f32 %v903, %v1000
        %v1016 = vmul.f32 %v909, %v1000
        %v1017 = vmul.f32 %v913, %v1000
        %v1018 = vmul.f32 %v919, %v1000
        %v1019 = vmul.f32 %v923, %v1000
        %v1020 = vmul.f32 %v929, %v1000
        %v1021 = vmul.f32 %v933, %v1000
        %v1022 = vmul.f32 %v939, %v1000
        %v1023 = vmul.f32 %v943, %v1000
        %v1024 = vmul.f32 %v949, %v1000
        %v1025 = vmul.f32 %v953, %v1000
        %v1026 = vmul.f32 %v959, %v1000
        %v1027 = vmul.f32 %v963, %v1000
        %v1028 = vmul.f32 %v969, %v1000
        %v1029 = vmul.f32 %v973, %v1000
        %v1030 = vmul.f32 %v979, %v1000
        %v1031 = vmul.f32 %v983, %v1000
        %v1032 = vmul.f32 %v989, %v1000
        %v1033 = vmul.f32 %v993, %v1000
        %v1034 = vld [vmem:[%s5] sm:$0x1]
        %v1036 = vlaneseq
        %v1037 = vshrl.u32 %v1036, 7
        %v1038 = vsub.s32 0, %v1037
        %v1039 = vrot.slane %v1034, %v1038
        %v1041 = vadd.f32 %v1002, %v1039
        %v1042 = vadd.f32 %v1003, %v1039
        %v1043 = vadd.f32 %v1004, %v1039
        %v1044 = vadd.f32 %v1005, %v1039
        %v1045 = vadd.f32 %v1006, %v1039
        %v1046 = vadd.f32 %v1007, %v1039
        %v1047 = vadd.f32 %v1008, %v1039
        %v1048 = vadd.f32 %v1009, %v1039
        %v1049 = vadd.f32 %v1010, %v1039
        %v1050 = vadd.f32 %v1011, %v1039
        %v1051 = vadd.f32 %v1012, %v1039
        %v1052 = vadd.f32 %v1013, %v1039
        %v1053 = vadd.f32 %v1014, %v1039
        %v1054 = vadd.f32 %v1015, %v1039
        %v1055 = vadd.f32 %v1016, %v1039
        %v1056 = vadd.f32 %v1017, %v1039
        %v1057 = vadd.f32 %v1018, %v1039
        %v1058 = vadd.f32 %v1019, %v1039
        %v1059 = vadd.f32 %v1020, %v1039
        %v1060 = vadd.f32 %v1021, %v1039
        %v1061 = vadd.f32 %v1022, %v1039
        %v1062 = vadd.f32 %v1023, %v1039
        %v1063 = vadd.f32 %v1024, %v1039
        %v1064 = vadd.f32 %v1025, %v1039
        %v1065 = vadd.f32 %v1026, %v1039
        %v1066 = vadd.f32 %v1027, %v1039
        %v1067 = vadd.f32 %v1028, %v1039
        %v1068 = vadd.f32 %v1029, %v1039
        %v1069 = vadd.f32 %v1030, %v1039
        %v1070 = vadd.f32 %v1031, %v1039
        %v1071 = vadd.f32 %v1032, %v1039
        %v1072 = vadd.f32 %v1033, %v1039
        %v1073 = vmax.f32 %v1041, 0.0
        %v1074 = vmax.f32 %v1042, 0.0
        %v1075 = vmax.f32 %v1043, 0.0
        %v1076 = vmax.f32 %v1044, 0.0
        %v1077 = vmax.f32 %v1045, 0.0
        %v1078 = vmax.f32 %v1046, 0.0
        %v1079 = vmax.f32 %v1047, 0.0
        %v1080 = vmax.f32 %v1048, 0.0
        %v1081 = vmax.f32 %v1049, 0.0
        %v1082 = vmax.f32 %v1050, 0.0
        %v1083 = vmax.f32 %v1051, 0.0
        %v1084 = vmax.f32 %v1052, 0.0
        %v1085 = vmax.f32 %v1053, 0.0
        %v1086 = vmax.f32 %v1054, 0.0
        %v1087 = vmax.f32 %v1055, 0.0
        %v1088 = vmax.f32 %v1056, 0.0
        %v1089 = vmax.f32 %v1057, 0.0
        %v1090 = vmax.f32 %v1058, 0.0
        %v1091 = vmax.f32 %v1059, 0.0
        %v1092 = vmax.f32 %v1060, 0.0
        %v1093 = vmax.f32 %v1061, 0.0
        %v1094 = vmax.f32 %v1062, 0.0
        %v1095 = vmax.f32 %v1063, 0.0
        %v1096 = vmax.f32 %v1064, 0.0
        %v1097 = vmax.f32 %v1065, 0.0
        %v1098 = vmax.f32 %v1066, 0.0
        %v1099 = vmax.f32 %v1067, 0.0
        %v1100 = vmax.f32 %v1068, 0.0
        %v1101 = vmax.f32 %v1069, 0.0
        %v1102 = vmax.f32 %v1070, 0.0
        %v1103 = vmax.f32 %v1071, 0.0
        %v1104 = vmax.f32 %v1072, 0.0
        %v1105 = vpack.c.bf16 %v1074, %v1073
        %v1106 = vpack.c.bf16 %v1076, %v1075
        %v1107 = vpack.c.bf16 %v1078, %v1077
        %v1108 = vpack.c.bf16 %v1080, %v1079
        %v1109 = vpack.c.bf16 %v1082, %v1081
        %v1110 = vpack.c.bf16 %v1084, %v1083
        %v1111 = vpack.c.bf16 %v1086, %v1085
        %v1112 = vpack.c.bf16 %v1088, %v1087
        %v1113 = vpack.c.bf16 %v1090, %v1089
        %v1114 = vpack.c.bf16 %v1092, %v1091
        %v1115 = vpack.c.bf16 %v1094, %v1093
        %v1116 = vpack.c.bf16 %v1096, %v1095
        %v1117 = vpack.c.bf16 %v1098, %v1097
        %v1118 = vpack.c.bf16 %v1100, %v1099
        %v1119 = vpack.c.bf16 %v1102, %v1101
        %v1120 = vpack.c.bf16 %v1104, %v1103
        %v1121 = vld [vmem:[%s6] sm:$0xf]
        %v1122 = vld [vmem:[%s6 + $0x4] sm:$0xf]
        %v1123 = vld [vmem:[%s6 + $0x8] sm:$0xf]
        %v1124 = vld [vmem:[%s6 + $0xc] sm:$0xf]
        %v1125 = vld [vmem:[%s6 + $0x10] sm:$0xf]
        %v1126 = vld [vmem:[%s6 + $0x14] sm:$0xf]
        %v1127 = vld [vmem:[%s6 + $0x18] sm:$0xf]
        %v1128 = vld [vmem:[%s6 + $0x1c] sm:$0xf]
        %v1129 = vld [vmem:[%s6 + $0x20] sm:$0xf]
        %v1130 = vld [vmem:[%s6 + $0x24] sm:$0xf]
        %v1131 = vld [vmem:[%s6 + $0x28] sm:$0xf]
        %v1132 = vld [vmem:[%s6 + $0x2c] sm:$0xf]
        %v1133 = vld [vmem:[%s6 + $0x30] sm:$0xf]
        %v1134 = vld [vmem:[%s6 + $0x34] sm:$0xf]
        %v1135 = vld [vmem:[%s6 + $0x38] sm:$0xf]
        %v1136 = vld [vmem:[%s6 + $0x3c] sm:$0xf]
        %v1137 = vld [vmem:[%s7] sm:$0x1]
        %v1139 = vlaneseq
        %v1140 = vshrl.u32 %v1139, 7
        %v1141 = vsub.s32 0, %v1140
        %v1142 = vrot.slane %v1137, %v1141
        %v1160 = vunpack.c.l.b16 %v1121
        %v1161 = vunpack.c.l.b16 %v1122
        %v1162 = vunpack.c.l.b16 %v1123
        %v1163 = vunpack.c.l.b16 %v1124
        %v1164 = vunpack.c.l.b16 %v1125
        %v1165 = vunpack.c.l.b16 %v1126
        %v1166 = vunpack.c.l.b16 %v1127
        %v1167 = vunpack.c.l.b16 %v1128
        %v1168 = vunpack.c.l.b16 %v1129
        %v1169 = vunpack.c.l.b16 %v1130
        %v1170 = vunpack.c.l.b16 %v1131
        %v1171 = vunpack.c.l.b16 %v1132
        %v1172 = vunpack.c.l.b16 %v1133
        %v1173 = vunpack.c.l.b16 %v1134
        %v1174 = vunpack.c.l.b16 %v1135
        %v1175 = vunpack.c.l.b16 %v1136
        %v1176 = vpack.c.b16 %v1161, %v1160
        %v1177 = vpack.c.b16 %v1163, %v1162
        %v1178 = vpack.c.b16 %v1165, %v1164
        %v1179 = vpack.c.b16 %v1167, %v1166
        %v1180 = vpack.c.b16 %v1169, %v1168
        %v1181 = vpack.c.b16 %v1171, %v1170
        %v1182 = vpack.c.b16 %v1173, %v1172
        %v1183 = vpack.c.b16 %v1175, %v1174
        %1192 = vmatprep.subr.bf16.mxu0 0
        %1193 = vmatpush1.bf16.msra.mxu0 %v1176
        %1194 = vmatprep.subr.bf16.mxu0 0
        %1195 = vmatpush1.bf16.msra.mxu0 %v1177
        %1196 = vmatprep.subr.bf16.mxu0 0
        %1197 = vmatpush1.bf16.msra.mxu0 %v1178
        %1198 = vmatprep.subr.bf16.mxu0 0
        %1199 = vmatpush1.bf16.msra.mxu0 %v1179
        %1200 = vmatprep.subr.bf16.mxu0 0
        %1201 = vmatpush1.bf16.msra.mxu0 %v1180
        %1202 = vmatprep.subr.bf16.mxu0 0
        %1203 = vmatpush1.bf16.msra.mxu0 %v1181
        %1204 = vmatprep.subr.bf16.mxu0 0
        %1205 = vmatpush1.bf16.msra.mxu0 %v1182
        %1206 = vmatprep.subr.bf16.mxu0 0
        %1207 = vmatpush1.bf16.msra.mxu0 %v1183
        %1208 = vmatprep.subr.bf16.mxu0 0
        %1209 = vmatpush1.bf16.msra.mxu0 0
        %1210 = vmatprep.subr.bf16.mxu0 0
        %1211 = vmatpush1.bf16.msra.mxu0 0
        %1212 = vmatprep.subr.bf16.mxu0 0
        %1213 = vmatpush1.bf16.msra.mxu0 0
        %1214 = vmatprep.subr.bf16.mxu0 0
        %1215 = vmatpush1.bf16.msra.mxu0 0
        %1216 = vmatprep.subr.bf16.mxu0 0
        %1217 = vmatpush1.bf16.msra.mxu0 0
        %1218 = vmatprep.subr.bf16.mxu0 0
        %1219 = vmatpush1.bf16.msra.mxu0 0
        %1220 = vmatprep.subr.bf16.mxu0 0
        %1221 = vmatpush1.bf16.msra.mxu0 0
        %1222 = vmatprep.subr.bf16.mxu0 0
        %1223 = vmatpush1.bf16.msra.mxu0 0
        %1224 = vmatprep.mubr.bf16.mxu0 0
        %1225 = vmatmul.mubr.bf16.gmra.mrb[0].mxu0 %v1105
        %v1226 = vpop.f32.mrb[0].mxu0
        %v1227 = vadd.f32 %v1142, %v1226
        %v1228 = vpop.f32.mrb[0].mxu0
        %v1229 = vpop.f32.mrb[0].mxu0
        %v1230 = vadd.f32 %v1142, %v1229
        %v1231 = vpop.f32.mrb[0].mxu0
        %1232 = vmatprep.mubr.bf16.mxu0 0
        %1233 = vmatmul.mubr.bf16.gmra.mrb[0].mxu0 %v1106
        %v1234 = vpop.f32.mrb[0].mxu0
        %v1235 = vadd.f32 %v1142, %v1234
        %v1236 = vpop.f32.mrb[0].mxu0
        %v1237 = vpop.f32.mrb[0].mxu0
        %v1238 = vadd.f32 %v1142, %v1237
        %v1239 = vpop.f32.mrb[0].mxu0
        %1240 = vmatprep.mubr.bf16.mxu0 0
        %1241 = vmatmul.mubr.bf16.gmra.mrb[0].mxu0 %v1107
        %v1242 = vpop.f32.mrb[0].mxu0
        %v1243 = vadd.f32 %v1142, %v1242
        %v1244 = vpop.f32.mrb[0].mxu0
        %v1245 = vpop.f32.mrb[0].mxu0
        %v1246 = vadd.f32 %v1142, %v1245
        %v1247 = vpop.f32.mrb[0].mxu0
        %1248 = vmatprep.mubr.bf16.mxu0 0
        %1249 = vmatmul.mubr.bf16.gmra.mrb[0].mxu0 %v1108
        %v1250 = vpop.f32.mrb[0].mxu0
        %v1251 = vadd.f32 %v1142, %v1250
        %v1252 = vpop.f32.mrb[0].mxu0
        %v1253 = vpop.f32.mrb[0].mxu0
        %v1254 = vadd.f32 %v1142, %v1253
        %v1255 = vpop.f32.mrb[0].mxu0
        %1256 = vmatprep.mubr.bf16.mxu0 0
        %1257 = vmatmul.mubr.bf16.gmra.mrb[0].mxu0 %v1109
        %v1258 = vpop.f32.mrb[0].mxu0
        %v1259 = vadd.f32 %v1142, %v1258
        %v1260 = vpop.f32.mrb[0].mxu0
        %v1261 = vpop.f32.mrb[0].mxu0
        %v1262 = vadd.f32 %v1142, %v1261
        %v1263 = vpop.f32.mrb[0].mxu0
        %1264 = vmatprep.mubr.bf16.mxu0 0
        %1265 = vmatmul.mubr.bf16.gmra.mrb[0].mxu0 %v1110
        %v1266 = vpop.f32.mrb[0].mxu0
        %v1267 = vadd.f32 %v1142, %v1266
        %v1268 = vpop.f32.mrb[0].mxu0
        %v1269 = vpop.f32.mrb[0].mxu0
        %v1270 = vadd.f32 %v1142, %v1269
        %v1271 = vpop.f32.mrb[0].mxu0
        %1272 = vmatprep.mubr.bf16.mxu0 0
        %1273 = vmatmul.mubr.bf16.gmra.mrb[0].mxu0 %v1111
        %v1274 = vpop.f32.mrb[0].mxu0
        %v1275 = vadd.f32 %v1142, %v1274
        %v1276 = vpop.f32.mrb[0].mxu0
        %v1277 = vpop.f32.mrb[0].mxu0
        %v1278 = vadd.f32 %v1142, %v1277
        %v1279 = vpop.f32.mrb[0].mxu0
        %1280 = vmatprep.mubr.bf16.mxu0 0
        %1281 = vmatmul.mubr.bf16.gmra.mrb[0].mxu0 %v1112
        %v1282 = vpop.f32.mrb[0].mxu0
        %v1283 = vadd.f32 %v1142, %v1282
        %v1284 = vpop.f32.mrb[0].mxu0
        %v1285 = vpop.f32.mrb[0].mxu0
        %v1286 = vadd.f32 %v1142, %v1285
        %v1287 = vpop.f32.mrb[0].mxu0
        %1288 = vmatprep.mubr.bf16.mxu0 0
        %1289 = vmatmul.mubr.bf16.gmra.mrb[0].mxu0 %v1113
        %v1290 = vpop.f32.mrb[0].mxu0
        %v1291 = vadd.f32 %v1142, %v1290
        %v1292 = vpop.f32.mrb[0].mxu0
        %v1293 = vpop.f32.mrb[0].mxu0
        %v1294 = vadd.f32 %v1142, %v1293
        %v1295 = vpop.f32.mrb[0].mxu0
        %1296 = vmatprep.mubr.bf16.mxu0 0
        %1297 = vmatmul.mubr.bf16.gmra.mrb[0].mxu0 %v1114
        %v1298 = vpop.f32.mrb[0].mxu0
        %v1299 = vadd.f32 %v1142, %v1298
        %v1300 = vpop.f32.mrb[0].mxu0
        %v1301 = vpop.f32.mrb[0].mxu0
        %v1302 = vadd.f32 %v1142, %v1301
        %v1303 = vpop.f32.mrb[0].mxu0
        %1304 = vmatprep.mubr.bf16.mxu0 0
        %1305 = vmatmul.mubr.bf16.gmra.mrb[0].mxu0 %v1115
        %v1306 = vpop.f32.mrb[0].mxu0
        %v1307 = vadd.f32 %v1142, %v1306
        %v1308 = vpop.f32.mrb[0].mxu0
        %v1309 = vpop.f32.mrb[0].mxu0
        %v1310 = vadd.f32 %v1142, %v1309
        %v1311 = vpop.f32.mrb[0].mxu0
        %1312 = vmatprep.mubr.bf16.mxu0 0
        %1313 = vmatmul.mubr.bf16.gmra.mrb[0].mxu0 %v1116
        %v1314 = vpop.f32.mrb[0].mxu0
        %v1315 = vadd.f32 %v1142, %v1314
        %v1316 = vpop.f32.mrb[0].mxu0
        %v1317 = vpop.f32.mrb[0].mxu0
        %v1318 = vadd.f32 %v1142, %v1317
        %v1319 = vpop.f32.mrb[0].mxu0
        %1320 = vmatprep.mubr.bf16.mxu0 0
        %1321 = vmatmul.mubr.bf16.gmra.mrb[0].mxu0 %v1117
        %v1322 = vpop.f32.mrb[0].mxu0
        %v1323 = vadd.f32 %v1142, %v1322
        %v1324 = vpop.f32.mrb[0].mxu0
        %v1325 = vpop.f32.mrb[0].mxu0
        %v1326 = vadd.f32 %v1142, %v1325
        %v1327 = vpop.f32.mrb[0].mxu0
        %1328 = vmatprep.mubr.bf16.mxu0 0
        %1329 = vmatmul.mubr.bf16.gmra.mrb[0].mxu0 %v1118
        %v1330 = vpop.f32.mrb[0].mxu0
        %v1331 = vadd.f32 %v1142, %v1330
        %v1332 = vpop.f32.mrb[0].mxu0
        %v1333 = vpop.f32.mrb[0].mxu0
        %v1334 = vadd.f32 %v1142, %v1333
        %v1335 = vpop.f32.mrb[0].mxu0
        %1336 = vmatprep.mubr.bf16.mxu0 0
        %1337 = vmatmul.mubr.bf16.gmra.mrb[0].mxu0 %v1119
        %v1338 = vpop.f32.mrb[0].mxu0
        %v1339 = vadd.f32 %v1142, %v1338
        %v1340 = vpop.f32.mrb[0].mxu0
        %v1341 = vpop.f32.mrb[0].mxu0
        %v1342 = vadd.f32 %v1142, %v1341
        %v1343 = vpop.f32.mrb[0].mxu0
        %1344 = vmatprep.mubr.bf16.mxu0 0
        %1345 = vmatmul.mubr.bf16.gmra.mrb[0].mxu0 %v1120
        %v1346 = vpop.f32.mrb[0].mxu0
        %v1347 = vadd.f32 %v1142, %v1346
        %v1348 = vpop.f32.mrb[0].mxu0
        %v1349 = vpop.f32.mrb[0].mxu0
        %v1350 = vadd.f32 %v1142, %v1349
        %v1351 = vpop.f32.mrb[0].mxu0
        %1352 = vdwg.mxu0
        %v1353 = vld [vmem:[%s8] sm:$0x1]
        %v1355 = vlaneseq
        %v1356 = vshrl.u32 %v1355, 7
        %v1357 = vsub.s32 0, %v1356
        %v1358 = vrot.slane %v1353, %v1357
        %v1360 = vmul.f32 %v1227, %v1358
        %v1361 = vmul.f32 %v1230, %v1358
        %v1362 = vmul.f32 %v1235, %v1358
        %v1363 = vmul.f32 %v1238, %v1358
        %v1364 = vmul.f32 %v1243, %v1358
        %v1365 = vmul.f32 %v1246, %v1358
        %v1366 = vmul.f32 %v1251, %v1358
        %v1367 = vmul.f32 %v1254, %v1358
        %v1368 = vmul.f32 %v1259, %v1358
        %v1369 = vmul.f32 %v1262, %v1358
        %v1370 = vmul.f32 %v1267, %v1358
        %v1371 = vmul.f32 %v1270, %v1358
        %v1372 = vmul.f32 %v1275, %v1358
        %v1373 = vmul.f32 %v1278, %v1358
        %v1374 = vmul.f32 %v1283, %v1358
        %v1375 = vmul.f32 %v1286, %v1358
        %v1376 = vmul.f32 %v1291, %v1358
        %v1377 = vmul.f32 %v1294, %v1358
        %v1378 = vmul.f32 %v1299, %v1358
        %v1379 = vmul.f32 %v1302, %v1358
        %v1380 = vmul.f32 %v1307, %v1358
        %v1381 = vmul.f32 %v1310, %v1358
        %v1382 = vmul.f32 %v1315, %v1358
        %v1383 = vmul.f32 %v1318, %v1358
        %v1384 = vmul.f32 %v1323, %v1358
        %v1385 = vmul.f32 %v1326, %v1358
        %v1386 = vmul.f32 %v1331, %v1358
        %v1387 = vmul.f32 %v1334, %v1358
        %v1388 = vmul.f32 %v1339, %v1358
        %v1389 = vmul.f32 %v1342, %v1358
        %v1390 = vmul.f32 %v1347, %v1358
        %v1391 = vmul.f32 %v1350, %v1358
        %v1392 = vld [vmem:[%s9] sm:$0x1]
        %v1394 = vlaneseq
        %v1395 = vshrl.u32 %v1394, 7
        %v1396 = vsub.s32 0, %v1395
        %v1397 = vrot.slane %v1392, %v1396
        %v1399 = vadd.f32 %v1360, %v1397
        %v1400 = vadd.f32 %v1361, %v1397
        %v1401 = vadd.f32 %v1362, %v1397
        %v1402 = vadd.f32 %v1363, %v1397
        %v1403 = vadd.f32 %v1364, %v1397
        %v1404 = vadd.f32 %v1365, %v1397
        %v1405 = vadd.f32 %v1366, %v1397
        %v1406 = vadd.f32 %v1367, %v1397
        %v1407 = vadd.f32 %v1368, %v1397
        %v1408 = vadd.f32 %v1369, %v1397
        %v1409 = vadd.f32 %v1370, %v1397
        %v1410 = vadd.f32 %v1371, %v1397
        %v1411 = vadd.f32 %v1372, %v1397
        %v1412 = vadd.f32 %v1373, %v1397
        %v1413 = vadd.f32 %v1374, %v1397
        %v1414 = vadd.f32 %v1375, %v1397
        %v1415 = vadd.f32 %v1376, %v1397
        %v1416 = vadd.f32 %v1377, %v1397
        %v1417 = vadd.f32 %v1378, %v1397
        %v1418 = vadd.f32 %v1379, %v1397
        %v1419 = vadd.f32 %v1380, %v1397
        %v1420 = vadd.f32 %v1381, %v1397
        %v1421 = vadd.f32 %v1382, %v1397
        %v1422 = vadd.f32 %v1383, %v1397
        %v1423 = vadd.f32 %v1384, %v1397
        %v1424 = vadd.f32 %v1385, %v1397
        %v1425 = vadd.f32 %v1386, %v1397
        %v1426 = vadd.f32 %v1387, %v1397
        %v1427 = vadd.f32 %v1388, %v1397
        %v1428 = vadd.f32 %v1389, %v1397
        %v1429 = vadd.f32 %v1390, %v1397
        %v1430 = vadd.f32 %v1391, %v1397
        %v1431 = vmax.f32 %v1399, 0.0
        %v1432 = vmax.f32 %v1400, 0.0
        %v1433 = vmax.f32 %v1401, 0.0
        %v1434 = vmax.f32 %v1402, 0.0
        %v1435 = vmax.f32 %v1403, 0.0
        %v1436 = vmax.f32 %v1404, 0.0
        %v1437 = vmax.f32 %v1405, 0.0
        %v1438 = vmax.f32 %v1406, 0.0
        %v1439 = vmax.f32 %v1407, 0.0
        %v1440 = vmax.f32 %v1408, 0.0
        %v1441 = vmax.f32 %v1409, 0.0
        %v1442 = vmax.f32 %v1410, 0.0
        %v1443 = vmax.f32 %v1411, 0.0
        %v1444 = vmax.f32 %v1412, 0.0
        %v1445 = vmax.f32 %v1413, 0.0
        %v1446 = vmax.f32 %v1414, 0.0
        %v1447 = vmax.f32 %v1415, 0.0
        %v1448 = vmax.f32 %v1416, 0.0
        %v1449 = vmax.f32 %v1417, 0.0
        %v1450 = vmax.f32 %v1418, 0.0
        %v1451 = vmax.f32 %v1419, 0.0
        %v1452 = vmax.f32 %v1420, 0.0
        %v1453 = vmax.f32 %v1421, 0.0
        %v1454 = vmax.f32 %v1422, 0.0
        %v1455 = vmax.f32 %v1423, 0.0
        %v1456 = vmax.f32 %v1424, 0.0
        %v1457 = vmax.f32 %v1425, 0.0
        %v1458 = vmax.f32 %v1426, 0.0
        %v1459 = vmax.f32 %v1427, 0.0
        %v1460 = vmax.f32 %v1428, 0.0
        %v1461 = vmax.f32 %v1429, 0.0
        %v1462 = vmax.f32 %v1430, 0.0
        %v1463 = vpack.c.bf16 %v1432, %v1431
        %v1464 = vpack.c.bf16 %v1434, %v1433
        %v1465 = vpack.c.bf16 %v1436, %v1435
        %v1466 = vpack.c.bf16 %v1438, %v1437
        %v1467 = vpack.c.bf16 %v1440, %v1439
        %v1468 = vpack.c.bf16 %v1442, %v1441
        %v1469 = vpack.c.bf16 %v1444, %v1443
        %v1470 = vpack.c.bf16 %v1446, %v1445
        %v1471 = vpack.c.bf16 %v1448, %v1447
        %v1472 = vpack.c.bf16 %v1450, %v1449
        %v1473 = vpack.c.bf16 %v1452, %v1451
        %v1474 = vpack.c.bf16 %v1454, %v1453
        %v1475 = vpack.c.bf16 %v1456, %v1455
        %v1476 = vpack.c.bf16 %v1458, %v1457
        %v1477 = vpack.c.bf16 %v1460, %v1459
        %v1478 = vpack.c.bf16 %v1462, %v1461
        %v1479 = vld [vmem:[%s10] sm:$0xf]
        %v1480 = vld [vmem:[%s10 + $0x4] sm:$0xf]
        %v1481 = vld [vmem:[%s10 + $0x8] sm:$0xf]
        %v1482 = vld [vmem:[%s10 + $0xc] sm:$0xf]
        %v1483 = vld [vmem:[%s10 + $0x10] sm:$0xf]
        %v1484 = vld [vmem:[%s10 + $0x14] sm:$0xf]
        %v1485 = vld [vmem:[%s10 + $0x18] sm:$0xf]
        %v1486 = vld [vmem:[%s10 + $0x1c] sm:$0xf]
        %v1487 = vld [vmem:[%s10 + $0x20] sm:$0xf]
        %v1488 = vld [vmem:[%s10 + $0x24] sm:$0xf]
        %v1489 = vld [vmem:[%s10 + $0x28] sm:$0xf]
        %v1490 = vld [vmem:[%s10 + $0x2c] sm:$0xf]
        %v1491 = vld [vmem:[%s10 + $0x30] sm:$0xf]
        %v1492 = vld [vmem:[%s10 + $0x34] sm:$0xf]
        %v1493 = vld [vmem:[%s10 + $0x38] sm:$0xf]
        %v1494 = vld [vmem:[%s10 + $0x3c] sm:$0xf]
        %v1495 = vld [vmem:[%s11] sm:$0x1]
        %v1497 = vlaneseq
        %v1498 = vshrl.u32 %v1497, 7
        %v1499 = vsub.s32 0, %v1498
        %v1500 = vrot.slane %v1495, %v1499
        %v1518 = vunpack.c.l.b16 %v1479
        %v1519 = vunpack.c.l.b16 %v1480
        %v1520 = vunpack.c.l.b16 %v1481
        %v1521 = vunpack.c.l.b16 %v1482
        %v1522 = vunpack.c.l.b16 %v1483
        %v1523 = vunpack.c.l.b16 %v1484
        %v1524 = vunpack.c.l.b16 %v1485
        %v1525 = vunpack.c.l.b16 %v1486
        %v1526 = vunpack.c.l.b16 %v1487
        %v1527 = vunpack.c.l.b16 %v1488
        %v1528 = vunpack.c.l.b16 %v1489
        %v1529 = vunpack.c.l.b16 %v1490
        %v1530 = vunpack.c.l.b16 %v1491
        %v1531 = vunpack.c.l.b16 %v1492
        %v1532 = vunpack.c.l.b16 %v1493
        %v1533 = vunpack.c.l.b16 %v1494
        %v1534 = vpack.c.b16 %v1519, %v1518
        %v1535 = vpack.c.b16 %v1521, %v1520
        %v1536 = vpack.c.b16 %v1523, %v1522
        %v1537 = vpack.c.b16 %v1525, %v1524
        %v1538 = vpack.c.b16 %v1527, %v1526
        %v1539 = vpack.c.b16 %v1529, %v1528
        %v1540 = vpack.c.b16 %v1531, %v1530
        %v1541 = vpack.c.b16 %v1533, %v1532
        %1550 = vmatprep.subr.bf16.mxu0 0
        %1551 = vmatpush1.bf16.msra.mxu0 %v1534
        %1552 = vmatprep.subr.bf16.mxu0 0
        %1553 = vmatpush1.bf16.msra.mxu0 %v1535
        %1554 = vmatprep.subr.bf16.mxu0 0
        %1555 = vmatpush1.bf16.msra.mxu0 %v1536
        %1556 = vmatprep.subr.bf16.mxu0 0
        %1557 = vmatpush1.bf16.msra.mxu0 %v1537
        %1558 = vmatprep.subr.bf16.mxu0 0
        %1559 = vmatpush1.bf16.msra.mxu0 %v1538
        %1560 = vmatprep.subr.bf16.mxu0 0
        %1561 = vmatpush1.bf16.msra.mxu0 %v1539
        %1562 = vmatprep.subr.bf16.mxu0 0
        %1563 = vmatpush1.bf16.msra.mxu0 %v1540
        %1564 = vmatprep.subr.bf16.mxu0 0
        %1565 = vmatpush1.bf16.msra.mxu0 %v1541
        %1566 = vmatprep.subr.bf16.mxu0 0
        %1567 = vmatpush1.bf16.msra.mxu0 0
        %1568 = vmatprep.subr.bf16.mxu0 0
        %1569 = vmatpush1.bf16.msra.mxu0 0
        %1570 = vmatprep.subr.bf16.mxu0 0
        %1571 = vmatpush1.bf16.msra.mxu0 0
        %1572 = vmatprep.subr.bf16.mxu0 0
        %1573 = vmatpush1.bf16.msra.mxu0 0
        %1574 = vmatprep.subr.bf16.mxu0 0
        %1575 = vmatpush1.bf16.msra.mxu0 0
        %1576 = vmatprep.subr.bf16.mxu0 0
        %1577 = vmatpush1.bf16.msra.mxu0 0
        %1578 = vmatprep.subr.bf16.mxu0 0
        %1579 = vmatpush1.bf16.msra.mxu0 0
        %1580 = vmatprep.subr.bf16.mxu0 0
        %1581 = vmatpush1.bf16.msra.mxu0 0
        %1582 = vmatprep.mubr.bf16.mxu0 0
        %1583 = vmatmul.mubr.bf16.gmra.mrb[0].mxu0 %v1463
        %v1584 = vpop.f32.mrb[0].mxu0
        %v1585 = vadd.f32 %v1500, %v1584
        %v1586 = vpop.f32.mrb[0].mxu0
        %v1587 = vpop.f32.mrb[0].mxu0
        %v1588 = vadd.f32 %v1500, %v1587
        %v1589 = vpop.f32.mrb[0].mxu0
        %1590 = vmatprep.mubr.bf16.mxu0 0
        %1591 = vmatmul.mubr.bf16.gmra.mrb[0].mxu0 %v1464
        %v1592 = vpop.f32.mrb[0].mxu0
        %v1593 = vadd.f32 %v1500, %v1592
        %v1594 = vpop.f32.mrb[0].mxu0
        %v1595 = vpop.f32.mrb[0].mxu0
        %v1596 = vadd.f32 %v1500, %v1595
        %v1597 = vpop.f32.mrb[0].mxu0
        %1598 = vmatprep.mubr.bf16.mxu0 0
        %1599 = vmatmul.mubr.bf16.gmra.mrb[0].mxu0 %v1465
        %v1600 = vpop.f32.mrb[0].mxu0
        %v1601 = vadd.f32 %v1500, %v1600
        %v1602 = vpop.f32.mrb[0].mxu0
        %v1603 = vpop.f32.mrb[0].mxu0
        %v1604 = vadd.f32 %v1500, %v1603
        %v1605 = vpop.f32.mrb[0].mxu0
        %1606 = vmatprep.mubr.bf16.mxu0 0
        %1607 = vmatmul.mubr.bf16.gmra.mrb[0].mxu0 %v1466
        %v1608 = vpop.f32.mrb[0].mxu0
        %v1609 = vadd.f32 %v1500, %v1608
        %v1610 = vpop.f32.mrb[0].mxu0
        %v1611 = vpop.f32.mrb[0].mxu0
        %v1612 = vadd.f32 %v1500, %v1611
        %v1613 = vpop.f32.mrb[0].mxu0
        %1614 = vmatprep.mubr.bf16.mxu0 0
        %1615 = vmatmul.mubr.bf16.gmra.mrb[0].mxu0 %v1467
        %v1616 = vpop.f32.mrb[0].mxu0
        %v1617 = vadd.f32 %v1500, %v1616
        %v1618 = vpop.f32.mrb[0].mxu0
        %v1619 = vpop.f32.mrb[0].mxu0
        %v1620 = vadd.f32 %v1500, %v1619
        %v1621 = vpop.f32.mrb[0].mxu0
        %1622 = vmatprep.mubr.bf16.mxu0 0
        %1623 = vmatmul.mubr.bf16.gmra.mrb[0].mxu0 %v1468
        %v1624 = vpop.f32.mrb[0].mxu0
        %v1625 = vadd.f32 %v1500, %v1624
        %v1626 = vpop.f32.mrb[0].mxu0
        %v1627 = vpop.f32.mrb[0].mxu0
        %v1628 = vadd.f32 %v1500, %v1627
        %v1629 = vpop.f32.mrb[0].mxu0
        %1630 = vmatprep.mubr.bf16.mxu0 0
        %1631 = vmatmul.mubr.bf16.gmra.mrb[0].mxu0 %v1469
        %v1632 = vpop.f32.mrb[0].mxu0
        %v1633 = vadd.f32 %v1500, %v1632
        %v1634 = vpop.f32.mrb[0].mxu0
        %v1635 = vpop.f32.mrb[0].mxu0
        %v1636 = vadd.f32 %v1500, %v1635
        %v1637 = vpop.f32.mrb[0].mxu0
        %1638 = vmatprep.mubr.bf16.mxu0 0
        %1639 = vmatmul.mubr.bf16.gmra.mrb[0].mxu0 %v1470
        %v1640 = vpop.f32.mrb[0].mxu0
        %v1641 = vadd.f32 %v1500, %v1640
        %v1642 = vpop.f32.mrb[0].mxu0
        %v1643 = vpop.f32.mrb[0].mxu0
        %v1644 = vadd.f32 %v1500, %v1643
        %v1645 = vpop.f32.mrb[0].mxu0
        %1646 = vmatprep.mubr.bf16.mxu0 0
        %1647 = vmatmul.mubr.bf16.gmra.mrb[0].mxu0 %v1471
        %v1648 = vpop.f32.mrb[0].mxu0
        %v1649 = vadd.f32 %v1500, %v1648
        %v1650 = vpop.f32.mrb[0].mxu0
        %v1651 = vpop.f32.mrb[0].mxu0
        %v1652 = vadd.f32 %v1500, %v1651
        %v1653 = vpop.f32.mrb[0].mxu0
        %1654 = vmatprep.mubr.bf16.mxu0 0
        %1655 = vmatmul.mubr.bf16.gmra.mrb[0].mxu0 %v1472
        %v1656 = vpop.f32.mrb[0].mxu0
        %v1657 = vadd.f32 %v1500, %v1656
        %v1658 = vpop.f32.mrb[0].mxu0
        %v1659 = vpop.f32.mrb[0].mxu0
        %v1660 = vadd.f32 %v1500, %v1659
        %v1661 = vpop.f32.mrb[0].mxu0
        %1662 = vmatprep.mubr.bf16.mxu0 0
        %1663 = vmatmul.mubr.bf16.gmra.mrb[0].mxu0 %v1473
        %v1664 = vpop.f32.mrb[0].mxu0
        %v1665 = vadd.f32 %v1500, %v1664
        %v1666 = vpop.f32.mrb[0].mxu0
        %v1667 = vpop.f32.mrb[0].mxu0
        %v1668 = vadd.f32 %v1500, %v1667
        %v1669 = vpop.f32.mrb[0].mxu0
        %1670 = vmatprep.mubr.bf16.mxu0 0
        %1671 = vmatmul.mubr.bf16.gmra.mrb[0].mxu0 %v1474
        %v1672 = vpop.f32.mrb[0].mxu0
        %v1673 = vadd.f32 %v1500, %v1672
        %v1674 = vpop.f32.mrb[0].mxu0
        %v1675 = vpop.f32.mrb[0].mxu0
        %v1676 = vadd.f32 %v1500, %v1675
        %v1677 = vpop.f32.mrb[0].mxu0
        %1678 = vmatprep.mubr.bf16.mxu0 0
        %1679 = vmatmul.mubr.bf16.gmra.mrb[0].mxu0 %v1475
        %v1680 = vpop.f32.mrb[0].mxu0
        %v1681 = vadd.f32 %v1500, %v1680
        %v1682 = vpop.f32.mrb[0].mxu0
        %v1683 = vpop.f32.mrb[0].mxu0
        %v1684 = vadd.f32 %v1500, %v1683
        %v1685 = vpop.f32.mrb[0].mxu0
        %1686 = vmatprep.mubr.bf16.mxu0 0
        %1687 = vmatmul.mubr.bf16.gmra.mrb[0].mxu0 %v1476
        %v1688 = vpop.f32.mrb[0].mxu0
        %v1689 = vadd.f32 %v1500, %v1688
        %v1690 = vpop.f32.mrb[0].mxu0
        %v1691 = vpop.f32.mrb[0].mxu0
        %v1692 = vadd.f32 %v1500, %v1691
        %v1693 = vpop.f32.mrb[0].mxu0
        %1694 = vmatprep.mubr.bf16.mxu0 0
        %1695 = vmatmul.mubr.bf16.gmra.mrb[0].mxu0 %v1477
        %v1696 = vpop.f32.mrb[0].mxu0
        %v1697 = vadd.f32 %v1500, %v1696
        %v1698 = vpop.f32.mrb[0].mxu0
        %v1699 = vpop.f32.mrb[0].mxu0
        %v1700 = vadd.f32 %v1500, %v1699
        %v1701 = vpop.f32.mrb[0].mxu0
        %1702 = vmatprep.mubr.bf16.mxu0 0
        %1703 = vmatmul.mubr.bf16.gmra.mrb[0].mxu0 %v1478
        %v1704 = vpop.f32.mrb[0].mxu0
        %v1705 = vadd.f32 %v1500, %v1704
        %v1706 = vpop.f32.mrb[0].mxu0
        %v1707 = vpop.f32.mrb[0].mxu0
        %v1708 = vadd.f32 %v1500, %v1707
        %v1709 = vpop.f32.mrb[0].mxu0
        %1710 = vdwg.mxu0
        %v1711 = vld [vmem:[%s12] sm:$0x1]
        %v1713 = vlaneseq
        %v1714 = vshrl.u32 %v1713, 7
        %v1715 = vsub.s32 0, %v1714
        %v1716 = vrot.slane %v1711, %v1715
        %v1718 = vmul.f32 %v1585, %v1716
        %v1719 = vmul.f32 %v1588, %v1716
        %v1720 = vmul.f32 %v1593, %v1716
        %v1721 = vmul.f32 %v1596, %v1716
        %v1722 = vmul.f32 %v1601, %v1716
        %v1723 = vmul.f32 %v1604, %v1716
        %v1724 = vmul.f32 %v1609, %v1716
        %v1725 = vmul.f32 %v1612, %v1716
        %v1726 = vmul.f32 %v1617, %v1716
        %v1727 = vmul.f32 %v1620, %v1716
        %v1728 = vmul.f32 %v1625, %v1716
        %v1729 = vmul.f32 %v1628, %v1716
        %v1730 = vmul.f32 %v1633, %v1716
        %v1731 = vmul.f32 %v1636, %v1716
        %v1732 = vmul.f32 %v1641, %v1716
        %v1733 = vmul.f32 %v1644, %v1716
        %v1734 = vmul.f32 %v1649, %v1716
        %v1735 = vmul.f32 %v1652, %v1716
        %v1736 = vmul.f32 %v1657, %v1716
        %v1737 = vmul.f32 %v1660, %v1716
        %v1738 = vmul.f32 %v1665, %v1716
        %v1739 = vmul.f32 %v1668, %v1716
        %v1740 = vmul.f32 %v1673, %v1716
        %v1741 = vmul.f32 %v1676, %v1716
        %v1742 = vmul.f32 %v1681, %v1716
        %v1743 = vmul.f32 %v1684, %v1716
        %v1744 = vmul.f32 %v1689, %v1716
        %v1745 = vmul.f32 %v1692, %v1716
        %v1746 = vmul.f32 %v1697, %v1716
        %v1747 = vmul.f32 %v1700, %v1716
        %v1748 = vmul.f32 %v1705, %v1716
        %v1749 = vmul.f32 %v1708, %v1716
        %v1750 = vld [vmem:[%s13] sm:$0x1]
        %v1752 = vlaneseq
        %v1753 = vshrl.u32 %v1752, 7
        %v1754 = vsub.s32 0, %v1753
        %v1755 = vrot.slane %v1750, %v1754
        %v1757 = vadd.f32 %v1718, %v1755
        %v1758 = vadd.f32 %v1719, %v1755
        %v1759 = vadd.f32 %v1720, %v1755
        %v1760 = vadd.f32 %v1721, %v1755
        %v1761 = vadd.f32 %v1722, %v1755
        %v1762 = vadd.f32 %v1723, %v1755
        %v1763 = vadd.f32 %v1724, %v1755
        %v1764 = vadd.f32 %v1725, %v1755
        %v1765 = vadd.f32 %v1726, %v1755
        %v1766 = vadd.f32 %v1727, %v1755
        %v1767 = vadd.f32 %v1728, %v1755
        %v1768 = vadd.f32 %v1729, %v1755
        %v1769 = vadd.f32 %v1730, %v1755
        %v1770 = vadd.f32 %v1731, %v1755
        %v1771 = vadd.f32 %v1732, %v1755
        %v1772 = vadd.f32 %v1733, %v1755
        %v1773 = vadd.f32 %v1734, %v1755
        %v1774 = vadd.f32 %v1735, %v1755
        %v1775 = vadd.f32 %v1736, %v1755
        %v1776 = vadd.f32 %v1737, %v1755
        %v1777 = vadd.f32 %v1738, %v1755
        %v1778 = vadd.f32 %v1739, %v1755
        %v1779 = vadd.f32 %v1740, %v1755
        %v1780 = vadd.f32 %v1741, %v1755
        %v1781 = vadd.f32 %v1742, %v1755
        %v1782 = vadd.f32 %v1743, %v1755
        %v1783 = vadd.f32 %v1744, %v1755
        %v1784 = vadd.f32 %v1745, %v1755
        %v1785 = vadd.f32 %v1746, %v1755
        %v1786 = vadd.f32 %v1747, %v1755
        %v1787 = vadd.f32 %v1748, %v1755
        %v1788 = vadd.f32 %v1749, %v1755
        %s1789 = sld [smem:[#allocation3]]
        %s1790 = ssub.f32 1.0, %s1789
        %v1791 = vstv %s1790
        %v1792 = vmul.f32 %v1791, %v837
        %v1793 = vmul.f32 %v1791, %v841
        %v1794 = vmul.f32 %v1791, %v847
        %v1795 = vmul.f32 %v1791, %v851
        %v1796 = vmul.f32 %v1791, %v857
        %v1797 = vmul.f32 %v1791, %v861
        %v1798 = vmul.f32 %v1791, %v867
        %v1799 = vmul.f32 %v1791, %v871
        %v1800 = vmul.f32 %v1791, %v877
        %v1801 = vmul.f32 %v1791, %v881
        %v1802 = vmul.f32 %v1791, %v887
        %v1803 = vmul.f32 %v1791, %v891
        %v1804 = vmul.f32 %v1791, %v897
        %v1805 = vmul.f32 %v1791, %v901
        %v1806 = vmul.f32 %v1791, %v907
        %v1807 = vmul.f32 %v1791, %v911
        %v1808 = vmul.f32 %v1791, %v917
        %v1809 = vmul.f32 %v1791, %v921
        %v1810 = vmul.f32 %v1791, %v927
        %v1811 = vmul.f32 %v1791, %v931
        %v1812 = vmul.f32 %v1791, %v937
        %v1813 = vmul.f32 %v1791, %v941
        %v1814 = vmul.f32 %v1791, %v947
        %v1815 = vmul.f32 %v1791, %v951
        %v1816 = vmul.f32 %v1791, %v957
        %v1817 = vmul.f32 %v1791, %v961
        %v1818 = vmul.f32 %v1791, %v967
        %v1819 = vmul.f32 %v1791, %v971
        %v1820 = vmul.f32 %v1791, %v977
        %v1821 = vmul.f32 %v1791, %v981
        %v1822 = vmul.f32 %v1791, %v987
        %v1823 = vmul.f32 %v1791, %v991
        %v1824 = vstv %s1789
        %v1825 = vmul.f32 %v1824, %v1757
        %v1826 = vmul.f32 %v1824, %v1758
        %v1827 = vmul.f32 %v1824, %v1759
        %v1828 = vmul.f32 %v1824, %v1760
        %v1829 = vmul.f32 %v1824, %v1761
        %v1830 = vmul.f32 %v1824, %v1762
        %v1831 = vmul.f32 %v1824, %v1763
        %v1832 = vmul.f32 %v1824, %v1764
        %v1833 = vmul.f32 %v1824, %v1765
        %v1834 = vmul.f32 %v1824, %v1766
        %v1835 = vmul.f32 %v1824, %v1767
        %v1836 = vmul.f32 %v1824, %v1768
        %v1837 = vmul.f32 %v1824, %v1769
        %v1838 = vmul.f32 %v1824, %v1770
        %v1839 = vmul.f32 %v1824, %v1771
        %v1840 = vmul.f32 %v1824, %v1772
        %v1841 = vmul.f32 %v1824, %v1773
        %v1842 = vmul.f32 %v1824, %v1774
        %v1843 = vmul.f32 %v1824, %v1775
        %v1844 = vmul.f32 %v1824, %v1776
        %v1845 = vmul.f32 %v1824, %v1777
        %v1846 = vmul.f32 %v1824, %v1778
        %v1847 = vmul.f32 %v1824, %v1779
        %v1848 = vmul.f32 %v1824, %v1780
        %v1849 = vmul.f32 %v1824, %v1781
        %v1850 = vmul.f32 %v1824, %v1782
        %v1851 = vmul.f32 %v1824, %v1783
        %v1852 = vmul.f32 %v1824, %v1784
        %v1853 = vmul.f32 %v1824, %v1785
        %v1854 = vmul.f32 %v1824, %v1786
        %v1855 = vmul.f32 %v1824, %v1787
        %v1856 = vmul.f32 %v1824, %v1788
        %v1857 = vadd.f32 %v1792, %v1825
        %v1858 = vadd.f32 %v1793, %v1826
        %v1859 = vadd.f32 %v1794, %v1827
        %v1860 = vadd.f32 %v1795, %v1828
        %v1861 = vadd.f32 %v1796, %v1829
        %v1862 = vadd.f32 %v1797, %v1830
        %v1863 = vadd.f32 %v1798, %v1831
        %v1864 = vadd.f32 %v1799, %v1832
        %v1865 = vadd.f32 %v1800, %v1833
        %v1866 = vadd.f32 %v1801, %v1834
        %v1867 = vadd.f32 %v1802, %v1835
        %v1868 = vadd.f32 %v1803, %v1836
        %v1869 = vadd.f32 %v1804, %v1837
        %v1870 = vadd.f32 %v1805, %v1838
        %v1871 = vadd.f32 %v1806, %v1839
        %v1872 = vadd.f32 %v1807, %v1840
        %v1873 = vadd.f32 %v1808, %v1841
        %v1874 = vadd.f32 %v1809, %v1842
        %v1875 = vadd.f32 %v1810, %v1843
        %v1876 = vadd.f32 %v1811, %v1844
        %v1877 = vadd.f32 %v1812, %v1845
        %v1878 = vadd.f32 %v1813, %v1846
        %v1879 = vadd.f32 %v1814, %v1847
        %v1880 = vadd.f32 %v1815, %v1848
        %v1881 = vadd.f32 %v1816, %v1849
        %v1882 = vadd.f32 %v1817, %v1850
        %v1883 = vadd.f32 %v1818, %v1851
        %v1884 = vadd.f32 %v1819, %v1852
        %v1885 = vadd.f32 %v1820, %v1853
        %v1886 = vadd.f32 %v1821, %v1854
        %v1887 = vadd.f32 %v1822, %v1855
        %v1888 = vadd.f32 %v1823, %v1856
        %v1889 = vld [vmem:[%s558] sm:$0xff]
        %v1890 = vld [vmem:[%s558 + $0x8] sm:$0xff]
        %v1891 = vld [vmem:[%s558 + $0x10] sm:$0xff]
        %v1892 = vld [vmem:[%s558 + $0x18] sm:$0xff]
        %v1893 = vld [vmem:[%s558 + $0x20] sm:$0xff]
        %v1894 = vld [vmem:[%s558 + $0x28] sm:$0xff]
        %v1895 = vld [vmem:[%s558 + $0x30] sm:$0xff]
        %v1896 = vld [vmem:[%s558 + $0x38] sm:$0xff]
        %v1897 = vld [vmem:[%s558 + $0x40] sm:$0xff]
        %v1898 = vld [vmem:[%s558 + $0x48] sm:$0xff]
        %v1899 = vld [vmem:[%s558 + $0x50] sm:$0xff]
        %v1900 = vld [vmem:[%s558 + $0x58] sm:$0xff]
        %v1901 = vld [vmem:[%s558 + $0x60] sm:$0xff]
        %v1902 = vld [vmem:[%s558 + $0x68] sm:$0xff]
        %v1903 = vld [vmem:[%s558 + $0x70] sm:$0xff]
        %v1904 = vld [vmem:[%s558 + $0x78] sm:$0xff]
        %v1905 = vld [vmem:[%s558 + $0x80] sm:$0xff]
        %v1906 = vld [vmem:[%s558 + $0x88] sm:$0xff]
        %v1907 = vld [vmem:[%s558 + $0x90] sm:$0xff]
        %v1908 = vld [vmem:[%s558 + $0x98] sm:$0xff]
        %v1909 = vld [vmem:[%s558 + $0xa0] sm:$0xff]
        %v1910 = vld [vmem:[%s558 + $0xa8] sm:$0xff]
        %v1911 = vld [vmem:[%s558 + $0xb0] sm:$0xff]
        %v1912 = vld [vmem:[%s558 + $0xb8] sm:$0xff]
        %v1913 = vld [vmem:[%s558 + $0xc0] sm:$0xff]
        %v1914 = vld [vmem:[%s558 + $0xc8] sm:$0xff]
        %v1915 = vld [vmem:[%s558 + $0xd0] sm:$0xff]
        %v1916 = vld [vmem:[%s558 + $0xd8] sm:$0xff]
        %v1917 = vld [vmem:[%s558 + $0xe0] sm:$0xff]
        %v1918 = vld [vmem:[%s558 + $0xe8] sm:$0xff]
        %v1919 = vld [vmem:[%s558 + $0xf0] sm:$0xff]
        %v1920 = vld [vmem:[%s558 + $0xf8] sm:$0xff]
        %vm1921 = vcmp.eq.s32.totalorder %v1889, 0
        %vm1922 = vcmp.eq.s32.totalorder %v1890, 0
        %vm1923 = vcmp.eq.s32.totalorder %v1891, 0
        %vm1924 = vcmp.eq.s32.totalorder %v1892, 0
        %vm1925 = vcmp.eq.s32.totalorder %v1893, 0
        %vm1926 = vcmp.eq.s32.totalorder %v1894, 0
        %vm1927 = vcmp.eq.s32.totalorder %v1895, 0
        %vm1928 = vcmp.eq.s32.totalorder %v1896, 0
        %vm1929 = vcmp.eq.s32.totalorder %v1897, 0
        %vm1930 = vcmp.eq.s32.totalorder %v1898, 0
        %vm1931 = vcmp.eq.s32.totalorder %v1899, 0
        %vm1932 = vcmp.eq.s32.totalorder %v1900, 0
        %vm1933 = vcmp.eq.s32.totalorder %v1901, 0
        %vm1934 = vcmp.eq.s32.totalorder %v1902, 0
        %vm1935 = vcmp.eq.s32.totalorder %v1903, 0
        %vm1936 = vcmp.eq.s32.totalorder %v1904, 0
        %vm1937 = vcmp.eq.s32.totalorder %v1905, 0
        %vm1938 = vcmp.eq.s32.totalorder %v1906, 0
        %vm1939 = vcmp.eq.s32.totalorder %v1907, 0
        %vm1940 = vcmp.eq.s32.totalorder %v1908, 0
        %vm1941 = vcmp.eq.s32.totalorder %v1909, 0
        %vm1942 = vcmp.eq.s32.totalorder %v1910, 0
        %vm1943 = vcmp.eq.s32.totalorder %v1911, 0
        %vm1944 = vcmp.eq.s32.totalorder %v1912, 0
        %vm1945 = vcmp.eq.s32.totalorder %v1913, 0
        %vm1946 = vcmp.eq.s32.totalorder %v1914, 0
        %vm1947 = vcmp.eq.s32.totalorder %v1915, 0
        %vm1948 = vcmp.eq.s32.totalorder %v1916, 0
        %vm1949 = vcmp.eq.s32.totalorder %v1917, 0
        %vm1950 = vcmp.eq.s32.totalorder %v1918, 0
        %vm1951 = vcmp.eq.s32.totalorder %v1919, 0
        %vm1952 = vcmp.eq.s32.totalorder %v1920, 0
        %v1953 = vsel %vm1921, 0.0, -1e+30
        %v1954 = vsel %vm1922, 0.0, -1e+30
        %v1955 = vsel %vm1923, 0.0, -1e+30
        %v1956 = vsel %vm1924, 0.0, -1e+30
        %v1957 = vsel %vm1925, 0.0, -1e+30
        %v1958 = vsel %vm1926, 0.0, -1e+30
        %v1959 = vsel %vm1927, 0.0, -1e+30
        %v1960 = vsel %vm1928, 0.0, -1e+30
        %v1961 = vsel %vm1929, 0.0, -1e+30
        %v1962 = vsel %vm1930, 0.0, -1e+30
        %v1963 = vsel %vm1931, 0.0, -1e+30
        %v1964 = vsel %vm1932, 0.0, -1e+30
        %v1965 = vsel %vm1933, 0.0, -1e+30
        %v1966 = vsel %vm1934, 0.0, -1e+30
        %v1967 = vsel %vm1935, 0.0, -1e+30
        %v1968 = vsel %vm1936, 0.0, -1e+30
        %v1969 = vsel %vm1937, 0.0, -1e+30
        %v1970 = vsel %vm1938, 0.0, -1e+30
        %v1971 = vsel %vm1939, 0.0, -1e+30
        %v1972 = vsel %vm1940, 0.0, -1e+30
        %v1973 = vsel %vm1941, 0.0, -1e+30
        %v1974 = vsel %vm1942, 0.0, -1e+30
        %v1975 = vsel %vm1943, 0.0, -1e+30
        %v1976 = vsel %vm1944, 0.0, -1e+30
        %v1977 = vsel %vm1945, 0.0, -1e+30
        %v1978 = vsel %vm1946, 0.0, -1e+30
        %v1979 = vsel %vm1947, 0.0, -1e+30
        %v1980 = vsel %vm1948, 0.0, -1e+30
        %v1981 = vsel %vm1949, 0.0, -1e+30
        %v1982 = vsel %vm1950, 0.0, -1e+30
        %v1983 = vsel %vm1951, 0.0, -1e+30
        %v1984 = vsel %vm1952, 0.0, -1e+30
        %1986 = vset.pattern.permute.xlu0 0
        %1987 = vperm.xlu0 %1986, %v1953
        %v1988 = vpop.permute.xlu0 %1987
        %1991 = vset.pattern.permute.xlu0 0
        %1992 = vperm.xlu0 %1991, %v1954
        %v1993 = vpop.permute.xlu0 %1992
        %1996 = vset.pattern.permute.xlu0 0
        %1997 = vperm.xlu0 %1996, %v1955
        %v1998 = vpop.permute.xlu0 %1997
        %2001 = vset.pattern.permute.xlu0 0
        %2002 = vperm.xlu0 %2001, %v1956
        %v2003 = vpop.permute.xlu0 %2002
        %2006 = vset.pattern.permute.xlu0 0
        %2007 = vperm.xlu0 %2006, %v1957
        %v2008 = vpop.permute.xlu0 %2007
        %2011 = vset.pattern.permute.xlu0 0
        %2012 = vperm.xlu0 %2011, %v1958
        %v2013 = vpop.permute.xlu0 %2012
        %2016 = vset.pattern.permute.xlu0 0
        %2017 = vperm.xlu0 %2016, %v1959
        %v2018 = vpop.permute.xlu0 %2017
        %2021 = vset.pattern.permute.xlu0 0
        %2022 = vperm.xlu0 %2021, %v1960
        %v2023 = vpop.permute.xlu0 %2022
        %2026 = vset.pattern.permute.xlu0 0
        %2027 = vperm.xlu0 %2026, %v1961
        %v2028 = vpop.permute.xlu0 %2027
        %2031 = vset.pattern.permute.xlu0 0
        %2032 = vperm.xlu0 %2031, %v1962
        %v2033 = vpop.permute.xlu0 %2032
        %2036 = vset.pattern.permute.xlu0 0
        %2037 = vperm.xlu0 %2036, %v1963
        %v2038 = vpop.permute.xlu0 %2037
        %2041 = vset.pattern.permute.xlu0 0
        %2042 = vperm.xlu0 %2041, %v1964
        %v2043 = vpop.permute.xlu0 %2042
        %2046 = vset.pattern.permute.xlu0 0
        %2047 = vperm.xlu0 %2046, %v1965
        %v2048 = vpop.permute.xlu0 %2047
        %2051 = vset.pattern.permute.xlu0 0
        %2052 = vperm.xlu0 %2051, %v1966
        %v2053 = vpop.permute.xlu0 %2052
        %2056 = vset.pattern.permute.xlu0 0
        %2057 = vperm.xlu0 %2056, %v1967
        %v2058 = vpop.permute.xlu0 %2057
        %2061 = vset.pattern.permute.xlu0 0
        %2062 = vperm.xlu0 %2061, %v1968
        %v2063 = vpop.permute.xlu0 %2062
        %2066 = vset.pattern.permute.xlu0 0
        %2067 = vperm.xlu0 %2066, %v1969
        %v2068 = vpop.permute.xlu0 %2067
        %2071 = vset.pattern.permute.xlu0 0
        %2072 = vperm.xlu0 %2071, %v1970
        %v2073 = vpop.permute.xlu0 %2072
        %2076 = vset.pattern.permute.xlu0 0
        %2077 = vperm.xlu0 %2076, %v1971
        %v2078 = vpop.permute.xlu0 %2077
        %2081 = vset.pattern.permute.xlu0 0
        %2082 = vperm.xlu0 %2081, %v1972
        %v2083 = vpop.permute.xlu0 %2082
        %2086 = vset.pattern.permute.xlu0 0
        %2087 = vperm.xlu0 %2086, %v1973
        %v2088 = vpop.permute.xlu0 %2087
        %2091 = vset.pattern.permute.xlu0 0
        %2092 = vperm.xlu0 %2091, %v1974
        %v2093 = vpop.permute.xlu0 %2092
        %2096 = vset.pattern.permute.xlu0 0
        %2097 = vperm.xlu0 %2096, %v1975
        %v2098 = vpop.permute.xlu0 %2097
        %2101 = vset.pattern.permute.xlu0 0
        %2102 = vperm.xlu0 %2101, %v1976
        %v2103 = vpop.permute.xlu0 %2102
        %2106 = vset.pattern.permute.xlu0 0
        %2107 = vperm.xlu0 %2106, %v1977
        %v2108 = vpop.permute.xlu0 %2107
        %2111 = vset.pattern.permute.xlu0 0
        %2112 = vperm.xlu0 %2111, %v1978
        %v2113 = vpop.permute.xlu0 %2112
        %2116 = vset.pattern.permute.xlu0 0
        %2117 = vperm.xlu0 %2116, %v1979
        %v2118 = vpop.permute.xlu0 %2117
        %2121 = vset.pattern.permute.xlu0 0
        %2122 = vperm.xlu0 %2121, %v1980
        %v2123 = vpop.permute.xlu0 %2122
        %2126 = vset.pattern.permute.xlu0 0
        %2127 = vperm.xlu0 %2126, %v1981
        %v2128 = vpop.permute.xlu0 %2127
        %2131 = vset.pattern.permute.xlu0 0
        %2132 = vperm.xlu0 %2131, %v1982
        %v2133 = vpop.permute.xlu0 %2132
        %2136 = vset.pattern.permute.xlu0 0
        %2137 = vperm.xlu0 %2136, %v1983
        %v2138 = vpop.permute.xlu0 %2137
        %2141 = vset.pattern.permute.xlu0 0
        %2142 = vperm.xlu0 %2141, %v1984
        %v2143 = vpop.permute.xlu0 %2142
        %v2145 = vadd.f32 %v1857, %v1988
        %v2146 = vadd.f32 %v1858, %v1993
        %v2147 = vadd.f32 %v1859, %v1998
        %v2148 = vadd.f32 %v1860, %v2003
        %v2149 = vadd.f32 %v1861, %v2008
        %v2150 = vadd.f32 %v1862, %v2013
        %v2151 = vadd.f32 %v1863, %v2018
        %v2152 = vadd.f32 %v1864, %v2023
        %v2153 = vadd.f32 %v1865, %v2028
        %v2154 = vadd.f32 %v1866, %v2033
        %v2155 = vadd.f32 %v1867, %v2038
        %v2156 = vadd.f32 %v1868, %v2043
        %v2157 = vadd.f32 %v1869, %v2048
        %v2158 = vadd.f32 %v1870, %v2053
        %v2159 = vadd.f32 %v1871, %v2058
        %v2160 = vadd.f32 %v1872, %v2063
        %v2161 = vadd.f32 %v1873, %v2068
        %v2162 = vadd.f32 %v1874, %v2073
        %v2163 = vadd.f32 %v1875, %v2078
        %v2164 = vadd.f32 %v1876, %v2083
        %v2165 = vadd.f32 %v1877, %v2088
        %v2166 = vadd.f32 %v1878, %v2093
        %v2167 = vadd.f32 %v1879, %v2098
        %v2168 = vadd.f32 %v1880, %v2103
        %v2169 = vadd.f32 %v1881, %v2108
        %v2170 = vadd.f32 %v1882, %v2113
        %v2171 = vadd.f32 %v1883, %v2118
        %v2172 = vadd.f32 %v1884, %v2123
        %v2173 = vadd.f32 %v1885, %v2128
        %v2174 = vadd.f32 %v1886, %v2133
        %v2175 = vadd.f32 %v1887, %v2138
        %v2176 = vadd.f32 %v1888, %v2143
        %v2177 = vmax.f32 %v2145, %v2149
        %v2178 = vmax.f32 %v2146, %v2150
        %v2179 = vmax.f32 %v2147, %v2151
        %v2180 = vmax.f32 %v2148, %v2152
        %v2181 = vmax.f32 %v2177, %v2153
        %v2182 = vmax.f32 %v2178, %v2154
        %v2183 = vmax.f32 %v2179, %v2155
        %v2184 = vmax.f32 %v2180, %v2156
        %v2185 = vmax.f32 %v2181, %v2157
        %v2186 = vmax.f32 %v2182, %v2158
        %v2187 = vmax.f32 %v2183, %v2159
        %v2188 = vmax.f32 %v2184, %v2160
        %v2189 = vmax.f32 %v2185, %v2161
        %v2190 = vmax.f32 %v2186, %v2162
        %v2191 = vmax.f32 %v2187, %v2163
        %v2192 = vmax.f32 %v2188, %v2164
        %v2193 = vmax.f32 %v2189, %v2165
        %v2194 = vmax.f32 %v2190, %v2166
        %v2195 = vmax.f32 %v2191, %v2167
        %v2196 = vmax.f32 %v2192, %v2168
        %v2197 = vmax.f32 %v2193, %v2169
        %v2198 = vmax.f32 %v2194, %v2170
        %v2199 = vmax.f32 %v2195, %v2171
        %v2200 = vmax.f32 %v2196, %v2172
        %v2201 = vmax.f32 %v2197, %v2173
        %v2202 = vmax.f32 %v2198, %v2174
        %v2203 = vmax.f32 %v2199, %v2175
        %v2204 = vmax.f32 %v2200, %v2176
        %v2205 = vmax.f32 %v2201, %v2202
        %v2206 = vmax.f32 %v2203, %v2204
        %v2207 = vmax.f32 %v2205, %v2206
        %v2208 = vrot.slane %v2207, 4
        %v2209 = vmax.f32 %v2207, %v2208
        %v2210 = vrot.slane %v2209, 2
        %v2211 = vmax.f32 %v2209, %v2210
        %v2212 = vrot.slane %v2211, 1
        %v2213 = vmax.f32 %v2211, %v2212
        %vm2214 = vcmp.eq.s32.totalorder %v1889, 1
        %vm2215 = vcmp.eq.s32.totalorder %v1890, 1
        %vm2216 = vcmp.eq.s32.totalorder %v1891, 1
        %vm2217 = vcmp.eq.s32.totalorder %v1892, 1
        %vm2218 = vcmp.eq.s32.totalorder %v1893, 1
        %vm2219 = vcmp.eq.s32.totalorder %v1894, 1
        %vm2220 = vcmp.eq.s32.totalorder %v1895, 1
        %vm2221 = vcmp.eq.s32.totalorder %v1896, 1
        %vm2222 = vcmp.eq.s32.totalorder %v1897, 1
        %vm2223 = vcmp.eq.s32.totalorder %v1898, 1
        %vm2224 = vcmp.eq.s32.totalorder %v1899, 1
        %vm2225 = vcmp.eq.s32.totalorder %v1900, 1
        %vm2226 = vcmp.eq.s32.totalorder %v1901, 1
        %vm2227 = vcmp.eq.s32.totalorder %v1902, 1
        %vm2228 = vcmp.eq.s32.totalorder %v1903, 1
        %vm2229 = vcmp.eq.s32.totalorder %v1904, 1
        %vm2230 = vcmp.eq.s32.totalorder %v1905, 1
        %vm2231 = vcmp.eq.s32.totalorder %v1906, 1
        %vm2232 = vcmp.eq.s32.totalorder %v1907, 1
        %vm2233 = vcmp.eq.s32.totalorder %v1908, 1
        %vm2234 = vcmp.eq.s32.totalorder %v1909, 1
        %vm2235 = vcmp.eq.s32.totalorder %v1910, 1
        %vm2236 = vcmp.eq.s32.totalorder %v1911, 1
        %vm2237 = vcmp.eq.s32.totalorder %v1912, 1
        %vm2238 = vcmp.eq.s32.totalorder %v1913, 1
        %vm2239 = vcmp.eq.s32.totalorder %v1914, 1
        %vm2240 = vcmp.eq.s32.totalorder %v1915, 1
        %vm2241 = vcmp.eq.s32.totalorder %v1916, 1
        %vm2242 = vcmp.eq.s32.totalorder %v1917, 1
        %vm2243 = vcmp.eq.s32.totalorder %v1918, 1
        %vm2244 = vcmp.eq.s32.totalorder %v1919, 1
        %vm2245 = vcmp.eq.s32.totalorder %v1920, 1
        %v2246 = vsel %vm2214, 0.0, -1e+30
        %v2247 = vsel %vm2215, 0.0, -1e+30
        %v2248 = vsel %vm2216, 0.0, -1e+30
        %v2249 = vsel %vm2217, 0.0, -1e+30
        %v2250 = vsel %vm2218, 0.0, -1e+30
        %v2251 = vsel %vm2219, 0.0, -1e+30
        %v2252 = vsel %vm2220, 0.0, -1e+30
        %v2253 = vsel %vm2221, 0.0, -1e+30
        %v2254 = vsel %vm2222, 0.0, -1e+30
        %v2255 = vsel %vm2223, 0.0, -1e+30
        %v2256 = vsel %vm2224, 0.0, -1e+30
        %v2257 = vsel %vm2225, 0.0, -1e+30
        %v2258 = vsel %vm2226, 0.0, -1e+30
        %v2259 = vsel %vm2227, 0.0, -1e+30
        %v2260 = vsel %vm2228, 0.0, -1e+30
        %v2261 = vsel %vm2229, 0.0, -1e+30
        %v2262 = vsel %vm2230, 0.0, -1e+30
        %v2263 = vsel %vm2231, 0.0, -1e+30
        %v2264 = vsel %vm2232, 0.0, -1e+30
        %v2265 = vsel %vm2233, 0.0, -1e+30
        %v2266 = vsel %vm2234, 0.0, -1e+30
        %v2267 = vsel %vm2235, 0.0, -1e+30
        %v2268 = vsel %vm2236, 0.0, -1e+30
        %v2269 = vsel %vm2237, 0.0, -1e+30
        %v2270 = vsel %vm2238, 0.0, -1e+30
        %v2271 = vsel %vm2239, 0.0, -1e+30
        %v2272 = vsel %vm2240, 0.0, -1e+30
        %v2273 = vsel %vm2241, 0.0, -1e+30
        %v2274 = vsel %vm2242, 0.0, -1e+30
        %v2275 = vsel %vm2243, 0.0, -1e+30
        %v2276 = vsel %vm2244, 0.0, -1e+30
        %v2277 = vsel %vm2245, 0.0, -1e+30
        %2279 = vset.pattern.permute.xlu0 0
        %2280 = vperm.xlu0 %2279, %v2246
        %v2281 = vpop.permute.xlu0 %2280
        %2284 = vset.pattern.permute.xlu0 0
        %2285 = vperm.xlu0 %2284, %v2247
        %v2286 = vpop.permute.xlu0 %2285
        %2289 = vset.pattern.permute.xlu0 0
        %2290 = vperm.xlu0 %2289, %v2248
        %v2291 = vpop.permute.xlu0 %2290
        %2294 = vset.pattern.permute.xlu0 0
        %2295 = vperm.xlu0 %2294, %v2249
        %v2296 = vpop.permute.xlu0 %2295
        %2299 = vset.pattern.permute.xlu0 0
        %2300 = vperm.xlu0 %2299, %v2250
        %v2301 = vpop.permute.xlu0 %2300
        %2304 = vset.pattern.permute.xlu0 0
        %2305 = vperm.xlu0 %2304, %v2251
        %v2306 = vpop.permute.xlu0 %2305
        %2309 = vset.pattern.permute.xlu0 0
        %2310 = vperm.xlu0 %2309, %v2252
        %v2311 = vpop.permute.xlu0 %2310
        %2314 = vset.pattern.permute.xlu0 0
        %2315 = vperm.xlu0 %2314, %v2253
        %v2316 = vpop.permute.xlu0 %2315
        %2319 = vset.pattern.permute.xlu0 0
        %2320 = vperm.xlu0 %2319, %v2254
        %v2321 = vpop.permute.xlu0 %2320
        %2324 = vset.pattern.permute.xlu0 0
        %2325 = vperm.xlu0 %2324, %v2255
        %v2326 = vpop.permute.xlu0 %2325
        %2329 = vset.pattern.permute.xlu0 0
        %2330 = vperm.xlu0 %2329, %v2256
        %v2331 = vpop.permute.xlu0 %2330
        %2334 = vset.pattern.permute.xlu0 0
        %2335 = vperm.xlu0 %2334, %v2257
        %v2336 = vpop.permute.xlu0 %2335
        %2339 = vset.pattern.permute.xlu0 0
        %2340 = vperm.xlu0 %2339, %v2258
        %v2341 = vpop.permute.xlu0 %2340
        %2344 = vset.pattern.permute.xlu0 0
        %2345 = vperm.xlu0 %2344, %v2259
        %v2346 = vpop.permute.xlu0 %2345
        %2349 = vset.pattern.permute.xlu0 0
        %2350 = vperm.xlu0 %2349, %v2260
        %v2351 = vpop.permute.xlu0 %2350
        %2354 = vset.pattern.permute.xlu0 0
        %2355 = vperm.xlu0 %2354, %v2261
        %v2356 = vpop.permute.xlu0 %2355
        %2359 = vset.pattern.permute.xlu0 0
        %2360 = vperm.xlu0 %2359, %v2262
        %v2361 = vpop.permute.xlu0 %2360
        %2364 = vset.pattern.permute.xlu0 0
        %2365 = vperm.xlu0 %2364, %v2263
        %v2366 = vpop.permute.xlu0 %2365
        %2369 = vset.pattern.permute.xlu0 0
        %2370 = vperm.xlu0 %2369, %v2264
        %v2371 = vpop.permute.xlu0 %2370
        %2374 = vset.pattern.permute.xlu0 0
        %2375 = vperm.xlu0 %2374, %v2265
        %v2376 = vpop.permute.xlu0 %2375
        %2379 = vset.pattern.permute.xlu0 0
        %2380 = vperm.xlu0 %2379, %v2266
        %v2381 = vpop.permute.xlu0 %2380
        %2384 = vset.pattern.permute.xlu0 0
        %2385 = vperm.xlu0 %2384, %v2267
        %v2386 = vpop.permute.xlu0 %2385
        %2389 = vset.pattern.permute.xlu0 0
        %2390 = vperm.xlu0 %2389, %v2268
        %v2391 = vpop.permute.xlu0 %2390
        %2394 = vset.pattern.permute.xlu0 0
        %2395 = vperm.xlu0 %2394, %v2269
        %v2396 = vpop.permute.xlu0 %2395
        %2399 = vset.pattern.permute.xlu0 0
        %2400 = vperm.xlu0 %2399, %v2270
        %v2401 = vpop.permute.xlu0 %2400
        %2404 = vset.pattern.permute.xlu0 0
        %2405 = vperm.xlu0 %2404, %v2271
        %v2406 = vpop.permute.xlu0 %2405
        %2409 = vset.pattern.permute.xlu0 0
        %2410 = vperm.xlu0 %2409, %v2272
        %v2411 = vpop.permute.xlu0 %2410
        %2414 = vset.pattern.permute.xlu0 0
        %2415 = vperm.xlu0 %2414, %v2273
        %v2416 = vpop.permute.xlu0 %2415
        %2419 = vset.pattern.permute.xlu0 0
        %2420 = vperm.xlu0 %2419, %v2274
        %v2421 = vpop.permute.xlu0 %2420
        %2424 = vset.pattern.permute.xlu0 0
        %2425 = vperm.xlu0 %2424, %v2275
        %v2426 = vpop.permute.xlu0 %2425
        %2429 = vset.pattern.permute.xlu0 0
        %2430 = vperm.xlu0 %2429, %v2276
        %v2431 = vpop.permute.xlu0 %2430
        %2434 = vset.pattern.permute.xlu0 0
        %2435 = vperm.xlu0 %2434, %v2277
        %v2436 = vpop.permute.xlu0 %2435
        %v2438 = vadd.f32 %v1857, %v2281
        %v2439 = vadd.f32 %v1858, %v2286
        %v2440 = vadd.f32 %v1859, %v2291
        %v2441 = vadd.f32 %v1860, %v2296
        %v2442 = vadd.f32 %v1861, %v2301
        %v2443 = vadd.f32 %v1862, %v2306
        %v2444 = vadd.f32 %v1863, %v2311
        %v2445 = vadd.f32 %v1864, %v2316
        %v2446 = vadd.f32 %v1865, %v2321
        %v2447 = vadd.f32 %v1866, %v2326
        %v2448 = vadd.f32 %v1867, %v2331
        %v2449 = vadd.f32 %v1868, %v2336
        %v2450 = vadd.f32 %v1869, %v2341
        %v2451 = vadd.f32 %v1870, %v2346
        %v2452 = vadd.f32 %v1871, %v2351
        %v2453 = vadd.f32 %v1872, %v2356
        %v2454 = vadd.f32 %v1873, %v2361
        %v2455 = vadd.f32 %v1874, %v2366
        %v2456 = vadd.f32 %v1875, %v2371
        %v2457 = vadd.f32 %v1876, %v2376
        %v2458 = vadd.f32 %v1877, %v2381
        %v2459 = vadd.f32 %v1878, %v2386
        %v2460 = vadd.f32 %v1879, %v2391
        %v2461 = vadd.f32 %v1880, %v2396
        %v2462 = vadd.f32 %v1881, %v2401
        %v2463 = vadd.f32 %v1882, %v2406
        %v2464 = vadd.f32 %v1883, %v2411
        %v2465 = vadd.f32 %v1884, %v2416
        %v2466 = vadd.f32 %v1885, %v2421
        %v2467 = vadd.f32 %v1886, %v2426
        %v2468 = vadd.f32 %v1887, %v2431
        %v2469 = vadd.f32 %v1888, %v2436
        %v2470 = vmax.f32 %v2438, %v2442
        %v2471 = vmax.f32 %v2439, %v2443
        %v2472 = vmax.f32 %v2440, %v2444
        %v2473 = vmax.f32 %v2441, %v2445
        %v2474 = vmax.f32 %v2470, %v2446
        %v2475 = vmax.f32 %v2471, %v2447
        %v2476 = vmax.f32 %v2472, %v2448
        %v2477 = vmax.f32 %v2473, %v2449
        %v2478 = vmax.f32 %v2474, %v2450
        %v2479 = vmax.f32 %v2475, %v2451
        %v2480 = vmax.f32 %v2476, %v2452
        %v2481 = vmax.f32 %v2477, %v2453
        %v2482 = vmax.f32 %v2478, %v2454
        %v2483 = vmax.f32 %v2479, %v2455
        %v2484 = vmax.f32 %v2480, %v2456
        %v2485 = vmax.f32 %v2481, %v2457
        %v2486 = vmax.f32 %v2482, %v2458
        %v2487 = vmax.f32 %v2483, %v2459
        %v2488 = vmax.f32 %v2484, %v2460
        %v2489 = vmax.f32 %v2485, %v2461
        %v2490 = vmax.f32 %v2486, %v2462
        %v2491 = vmax.f32 %v2487, %v2463
        %v2492 = vmax.f32 %v2488, %v2464
        %v2493 = vmax.f32 %v2489, %v2465
        %v2494 = vmax.f32 %v2490, %v2466
        %v2495 = vmax.f32 %v2491, %v2467
        %v2496 = vmax.f32 %v2492, %v2468
        %v2497 = vmax.f32 %v2493, %v2469
        %v2498 = vmax.f32 %v2494, %v2495
        %v2499 = vmax.f32 %v2496, %v2497
        %v2500 = vmax.f32 %v2498, %v2499
        %v2501 = vrot.slane %v2500, 4
        %v2502 = vmax.f32 %v2500, %v2501
        %v2503 = vrot.slane %v2502, 2
        %v2504 = vmax.f32 %v2502, %v2503
        %v2505 = vrot.slane %v2504, 1
        %v2506 = vmax.f32 %v2504, %v2505
        %vm2507 = vcmp.eq.s32.totalorder %v1889, 2
        %vm2508 = vcmp.eq.s32.totalorder %v1890, 2
        %vm2509 = vcmp.eq.s32.totalorder %v1891, 2
        %vm2510 = vcmp.eq.s32.totalorder %v1892, 2
        %vm2511 = vcmp.eq.s32.totalorder %v1893, 2
        %vm2512 = vcmp.eq.s32.totalorder %v1894, 2
        %vm2513 = vcmp.eq.s32.totalorder %v1895, 2
        %vm2514 = vcmp.eq.s32.totalorder %v1896, 2
        %vm2515 = vcmp.eq.s32.totalorder %v1897, 2
        %vm2516 = vcmp.eq.s32.totalorder %v1898, 2
        %vm2517 = vcmp.eq.s32.totalorder %v1899, 2
        %vm2518 = vcmp.eq.s32.totalorder %v1900, 2
        %vm2519 = vcmp.eq.s32.totalorder %v1901, 2
        %vm2520 = vcmp.eq.s32.totalorder %v1902, 2
        %vm2521 = vcmp.eq.s32.totalorder %v1903, 2
        %vm2522 = vcmp.eq.s32.totalorder %v1904, 2
        %vm2523 = vcmp.eq.s32.totalorder %v1905, 2
        %vm2524 = vcmp.eq.s32.totalorder %v1906, 2
        %vm2525 = vcmp.eq.s32.totalorder %v1907, 2
        %vm2526 = vcmp.eq.s32.totalorder %v1908, 2
        %vm2527 = vcmp.eq.s32.totalorder %v1909, 2
        %vm2528 = vcmp.eq.s32.totalorder %v1910, 2
        %vm2529 = vcmp.eq.s32.totalorder %v1911, 2
        %vm2530 = vcmp.eq.s32.totalorder %v1912, 2
        %vm2531 = vcmp.eq.s32.totalorder %v1913, 2
        %vm2532 = vcmp.eq.s32.totalorder %v1914, 2
        %vm2533 = vcmp.eq.s32.totalorder %v1915, 2
        %vm2534 = vcmp.eq.s32.totalorder %v1916, 2
        %vm2535 = vcmp.eq.s32.totalorder %v1917, 2
        %vm2536 = vcmp.eq.s32.totalorder %v1918, 2
        %vm2537 = vcmp.eq.s32.totalorder %v1919, 2
        %vm2538 = vcmp.eq.s32.totalorder %v1920, 2
        %v2539 = vsel %vm2507, 0.0, -1e+30
        %v2540 = vsel %vm2508, 0.0, -1e+30
        %v2541 = vsel %vm2509, 0.0, -1e+30
        %v2542 = vsel %vm2510, 0.0, -1e+30
        %v2543 = vsel %vm2511, 0.0, -1e+30
        %v2544 = vsel %vm2512, 0.0, -1e+30
        %v2545 = vsel %vm2513, 0.0, -1e+30
        %v2546 = vsel %vm2514, 0.0, -1e+30
        %v2547 = vsel %vm2515, 0.0, -1e+30
        %v2548 = vsel %vm2516, 0.0, -1e+30
        %v2549 = vsel %vm2517, 0.0, -1e+30
        %v2550 = vsel %vm2518, 0.0, -1e+30
        %v2551 = vsel %vm2519, 0.0, -1e+30
        %v2552 = vsel %vm2520, 0.0, -1e+30
        %v2553 = vsel %vm2521, 0.0, -1e+30
        %v2554 = vsel %vm2522, 0.0, -1e+30
        %v2555 = vsel %vm2523, 0.0, -1e+30
        %v2556 = vsel %vm2524, 0.0, -1e+30
        %v2557 = vsel %vm2525, 0.0, -1e+30
        %v2558 = vsel %vm2526, 0.0, -1e+30
        %v2559 = vsel %vm2527, 0.0, -1e+30
        %v2560 = vsel %vm2528, 0.0, -1e+30
        %v2561 = vsel %vm2529, 0.0, -1e+30
        %v2562 = vsel %vm2530, 0.0, -1e+30
        %v2563 = vsel %vm2531, 0.0, -1e+30
        %v2564 = vsel %vm2532, 0.0, -1e+30
        %v2565 = vsel %vm2533, 0.0, -1e+30
        %v2566 = vsel %vm2534, 0.0, -1e+30
        %v2567 = vsel %vm2535, 0.0, -1e+30
        %v2568 = vsel %vm2536, 0.0, -1e+30
        %v2569 = vsel %vm2537, 0.0, -1e+30
        %v2570 = vsel %vm2538, 0.0, -1e+30
        %2572 = vset.pattern.permute.xlu0 0
        %2573 = vperm.xlu0 %2572, %v2539
        %v2574 = vpop.permute.xlu0 %2573
        %2577 = vset.pattern.permute.xlu0 0
        %2578 = vperm.xlu0 %2577, %v2540
        %v2579 = vpop.permute.xlu0 %2578
        %2582 = vset.pattern.permute.xlu0 0
        %2583 = vperm.xlu0 %2582, %v2541
        %v2584 = vpop.permute.xlu0 %2583
        %2587 = vset.pattern.permute.xlu0 0
        %2588 = vperm.xlu0 %2587, %v2542
        %v2589 = vpop.permute.xlu0 %2588
        %2592 = vset.pattern.permute.xlu0 0
        %2593 = vperm.xlu0 %2592, %v2543
        %v2594 = vpop.permute.xlu0 %2593
        %2597 = vset.pattern.permute.xlu0 0
        %2598 = vperm.xlu0 %2597, %v2544
        %v2599 = vpop.permute.xlu0 %2598
        %2602 = vset.pattern.permute.xlu0 0
        %2603 = vperm.xlu0 %2602, %v2545
        %v2604 = vpop.permute.xlu0 %2603
        %2607 = vset.pattern.permute.xlu0 0
        %2608 = vperm.xlu0 %2607, %v2546
        %v2609 = vpop.permute.xlu0 %2608
        %2612 = vset.pattern.permute.xlu0 0
        %2613 = vperm.xlu0 %2612, %v2547
        %v2614 = vpop.permute.xlu0 %2613
        %2617 = vset.pattern.permute.xlu0 0
        %2618 = vperm.xlu0 %2617, %v2548
        %v2619 = vpop.permute.xlu0 %2618
        %2622 = vset.pattern.permute.xlu0 0
        %2623 = vperm.xlu0 %2622, %v2549
        %v2624 = vpop.permute.xlu0 %2623
        %2627 = vset.pattern.permute.xlu0 0
        %2628 = vperm.xlu0 %2627, %v2550
        %v2629 = vpop.permute.xlu0 %2628
        %2632 = vset.pattern.permute.xlu0 0
        %2633 = vperm.xlu0 %2632, %v2551
        %v2634 = vpop.permute.xlu0 %2633
        %2637 = vset.pattern.permute.xlu0 0
        %2638 = vperm.xlu0 %2637, %v2552
        %v2639 = vpop.permute.xlu0 %2638
        %2642 = vset.pattern.permute.xlu0 0
        %2643 = vperm.xlu0 %2642, %v2553
        %v2644 = vpop.permute.xlu0 %2643
        %2647 = vset.pattern.permute.xlu0 0
        %2648 = vperm.xlu0 %2647, %v2554
        %v2649 = vpop.permute.xlu0 %2648
        %2652 = vset.pattern.permute.xlu0 0
        %2653 = vperm.xlu0 %2652, %v2555
        %v2654 = vpop.permute.xlu0 %2653
        %2657 = vset.pattern.permute.xlu0 0
        %2658 = vperm.xlu0 %2657, %v2556
        %v2659 = vpop.permute.xlu0 %2658
        %2662 = vset.pattern.permute.xlu0 0
        %2663 = vperm.xlu0 %2662, %v2557
        %v2664 = vpop.permute.xlu0 %2663
        %2667 = vset.pattern.permute.xlu0 0
        %2668 = vperm.xlu0 %2667, %v2558
        %v2669 = vpop.permute.xlu0 %2668
        %2672 = vset.pattern.permute.xlu0 0
        %2673 = vperm.xlu0 %2672, %v2559
        %v2674 = vpop.permute.xlu0 %2673
        %2677 = vset.pattern.permute.xlu0 0
        %2678 = vperm.xlu0 %2677, %v2560
        %v2679 = vpop.permute.xlu0 %2678
        %2682 = vset.pattern.permute.xlu0 0
        %2683 = vperm.xlu0 %2682, %v2561
        %v2684 = vpop.permute.xlu0 %2683
        %2687 = vset.pattern.permute.xlu0 0
        %2688 = vperm.xlu0 %2687, %v2562
        %v2689 = vpop.permute.xlu0 %2688
        %2692 = vset.pattern.permute.xlu0 0
        %2693 = vperm.xlu0 %2692, %v2563
        %v2694 = vpop.permute.xlu0 %2693
        %2697 = vset.pattern.permute.xlu0 0
        %2698 = vperm.xlu0 %2697, %v2564
        %v2699 = vpop.permute.xlu0 %2698
        %2702 = vset.pattern.permute.xlu0 0
        %2703 = vperm.xlu0 %2702, %v2565
        %v2704 = vpop.permute.xlu0 %2703
        %2707 = vset.pattern.permute.xlu0 0
        %2708 = vperm.xlu0 %2707, %v2566
        %v2709 = vpop.permute.xlu0 %2708
        %2712 = vset.pattern.permute.xlu0 0
        %2713 = vperm.xlu0 %2712, %v2567
        %v2714 = vpop.permute.xlu0 %2713
        %2717 = vset.pattern.permute.xlu0 0
        %2718 = vperm.xlu0 %2717, %v2568
        %v2719 = vpop.permute.xlu0 %2718
        %2722 = vset.pattern.permute.xlu0 0
        %2723 = vperm.xlu0 %2722, %v2569
        %v2724 = vpop.permute.xlu0 %2723
        %2727 = vset.pattern.permute.xlu0 0
        %2728 = vperm.xlu0 %2727, %v2570
        %v2729 = vpop.permute.xlu0 %2728
        %v2731 = vadd.f32 %v1857, %v2574
        %v2732 = vadd.f32 %v1858, %v2579
        %v2733 = vadd.f32 %v1859, %v2584
        %v2734 = vadd.f32 %v1860, %v2589
        %v2735 = vadd.f32 %v1861, %v2594
        %v2736 = vadd.f32 %v1862, %v2599
        %v2737 = vadd.f32 %v1863, %v2604
        %v2738 = vadd.f32 %v1864, %v2609
        %v2739 = vadd.f32 %v1865, %v2614
        %v2740 = vadd.f32 %v1866, %v2619
        %v2741 = vadd.f32 %v1867, %v2624
        %v2742 = vadd.f32 %v1868, %v2629
        %v2743 = vadd.f32 %v1869, %v2634
        %v2744 = vadd.f32 %v1870, %v2639
        %v2745 = vadd.f32 %v1871, %v2644
        %v2746 = vadd.f32 %v1872, %v2649
        %v2747 = vadd.f32 %v1873, %v2654
        %v2748 = vadd.f32 %v1874, %v2659
        %v2749 = vadd.f32 %v1875, %v2664
        %v2750 = vadd.f32 %v1876, %v2669
        %v2751 = vadd.f32 %v1877, %v2674
        %v2752 = vadd.f32 %v1878, %v2679
        %v2753 = vadd.f32 %v1879, %v2684
        %v2754 = vadd.f32 %v1880, %v2689
        %v2755 = vadd.f32 %v1881, %v2694
        %v2756 = vadd.f32 %v1882, %v2699
        %v2757 = vadd.f32 %v1883, %v2704
        %v2758 = vadd.f32 %v1884, %v2709
        %v2759 = vadd.f32 %v1885, %v2714
        %v2760 = vadd.f32 %v1886, %v2719
        %v2761 = vadd.f32 %v1887, %v2724
        %v2762 = vadd.f32 %v1888, %v2729
        %v2763 = vmax.f32 %v2731, %v2735
        %v2764 = vmax.f32 %v2732, %v2736
        %v2765 = vmax.f32 %v2733, %v2737
        %v2766 = vmax.f32 %v2734, %v2738
        %v2767 = vmax.f32 %v2763, %v2739
        %v2768 = vmax.f32 %v2764, %v2740
        %v2769 = vmax.f32 %v2765, %v2741
        %v2770 = vmax.f32 %v2766, %v2742
        %v2771 = vmax.f32 %v2767, %v2743
        %v2772 = vmax.f32 %v2768, %v2744
        %v2773 = vmax.f32 %v2769, %v2745
        %v2774 = vmax.f32 %v2770, %v2746
        %v2775 = vmax.f32 %v2771, %v2747
        %v2776 = vmax.f32 %v2772, %v2748
        %v2777 = vmax.f32 %v2773, %v2749
        %v2778 = vmax.f32 %v2774, %v2750
        %v2779 = vmax.f32 %v2775, %v2751
        %v2780 = vmax.f32 %v2776, %v2752
        %v2781 = vmax.f32 %v2777, %v2753
        %v2782 = vmax.f32 %v2778, %v2754
        %v2783 = vmax.f32 %v2779, %v2755
        %v2784 = vmax.f32 %v2780, %v2756
        %v2785 = vmax.f32 %v2781, %v2757
        %v2786 = vmax.f32 %v2782, %v2758
        %v2787 = vmax.f32 %v2783, %v2759
        %v2788 = vmax.f32 %v2784, %v2760
        %v2789 = vmax.f32 %v2785, %v2761
        %v2790 = vmax.f32 %v2786, %v2762
        %v2791 = vmax.f32 %v2787, %v2788
        %v2792 = vmax.f32 %v2789, %v2790
        %v2793 = vmax.f32 %v2791, %v2792
        %v2794 = vrot.slane %v2793, 4
        %v2795 = vmax.f32 %v2793, %v2794
        %v2796 = vrot.slane %v2795, 2
        %v2797 = vmax.f32 %v2795, %v2796
        %v2798 = vrot.slane %v2797, 1
        %v2799 = vmax.f32 %v2797, %v2798
        %vm2800 = vcmp.eq.s32.totalorder %v1889, 3
        %vm2801 = vcmp.eq.s32.totalorder %v1890, 3
        %vm2802 = vcmp.eq.s32.totalorder %v1891, 3
        %vm2803 = vcmp.eq.s32.totalorder %v1892, 3
        %vm2804 = vcmp.eq.s32.totalorder %v1893, 3
        %vm2805 = vcmp.eq.s32.totalorder %v1894, 3
        %vm2806 = vcmp.eq.s32.totalorder %v1895, 3
        %vm2807 = vcmp.eq.s32.totalorder %v1896, 3
        %vm2808 = vcmp.eq.s32.totalorder %v1897, 3
        %vm2809 = vcmp.eq.s32.totalorder %v1898, 3
        %vm2810 = vcmp.eq.s32.totalorder %v1899, 3
        %vm2811 = vcmp.eq.s32.totalorder %v1900, 3
        %vm2812 = vcmp.eq.s32.totalorder %v1901, 3
        %vm2813 = vcmp.eq.s32.totalorder %v1902, 3
        %vm2814 = vcmp.eq.s32.totalorder %v1903, 3
        %vm2815 = vcmp.eq.s32.totalorder %v1904, 3
        %vm2816 = vcmp.eq.s32.totalorder %v1905, 3
        %vm2817 = vcmp.eq.s32.totalorder %v1906, 3
        %vm2818 = vcmp.eq.s32.totalorder %v1907, 3
        %vm2819 = vcmp.eq.s32.totalorder %v1908, 3
        %vm2820 = vcmp.eq.s32.totalorder %v1909, 3
        %vm2821 = vcmp.eq.s32.totalorder %v1910, 3
        %vm2822 = vcmp.eq.s32.totalorder %v1911, 3
        %vm2823 = vcmp.eq.s32.totalorder %v1912, 3
        %vm2824 = vcmp.eq.s32.totalorder %v1913, 3
        %vm2825 = vcmp.eq.s32.totalorder %v1914, 3
        %vm2826 = vcmp.eq.s32.totalorder %v1915, 3
        %vm2827 = vcmp.eq.s32.totalorder %v1916, 3
        %vm2828 = vcmp.eq.s32.totalorder %v1917, 3
        %vm2829 = vcmp.eq.s32.totalorder %v1918, 3
        %vm2830 = vcmp.eq.s32.totalorder %v1919, 3
        %vm2831 = vcmp.eq.s32.totalorder %v1920, 3
        %v2832 = vsel %vm2800, 0.0, -1e+30
        %v2833 = vsel %vm2801, 0.0, -1e+30
        %v2834 = vsel %vm2802, 0.0, -1e+30
        %v2835 = vsel %vm2803, 0.0, -1e+30
        %v2836 = vsel %vm2804, 0.0, -1e+30
        %v2837 = vsel %vm2805, 0.0, -1e+30
        %v2838 = vsel %vm2806, 0.0, -1e+30
        %v2839 = vsel %vm2807, 0.0, -1e+30
        %v2840 = vsel %vm2808, 0.0, -1e+30
        %v2841 = vsel %vm2809, 0.0, -1e+30
        %v2842 = vsel %vm2810, 0.0, -1e+30
        %v2843 = vsel %vm2811, 0.0, -1e+30
        %v2844 = vsel %vm2812, 0.0, -1e+30
        %v2845 = vsel %vm2813, 0.0, -1e+30
        %v2846 = vsel %vm2814, 0.0, -1e+30
        %v2847 = vsel %vm2815, 0.0, -1e+30
        %v2848 = vsel %vm2816, 0.0, -1e+30
        %v2849 = vsel %vm2817, 0.0, -1e+30
        %v2850 = vsel %vm2818, 0.0, -1e+30
        %v2851 = vsel %vm2819, 0.0, -1e+30
        %v2852 = vsel %vm2820, 0.0, -1e+30
        %v2853 = vsel %vm2821, 0.0, -1e+30
        %v2854 = vsel %vm2822, 0.0, -1e+30
        %v2855 = vsel %vm2823, 0.0, -1e+30
        %v2856 = vsel %vm2824, 0.0, -1e+30
        %v2857 = vsel %vm2825, 0.0, -1e+30
        %v2858 = vsel %vm2826, 0.0, -1e+30
        %v2859 = vsel %vm2827, 0.0, -1e+30
        %v2860 = vsel %vm2828, 0.0, -1e+30
        %v2861 = vsel %vm2829, 0.0, -1e+30
        %v2862 = vsel %vm2830, 0.0, -1e+30
        %v2863 = vsel %vm2831, 0.0, -1e+30
        %2865 = vset.pattern.permute.xlu0 0
        %2866 = vperm.xlu0 %2865, %v2832
        %v2867 = vpop.permute.xlu0 %2866
        %2870 = vset.pattern.permute.xlu0 0
        %2871 = vperm.xlu0 %2870, %v2833
        %v2872 = vpop.permute.xlu0 %2871
        %2875 = vset.pattern.permute.xlu0 0
        %2876 = vperm.xlu0 %2875, %v2834
        %v2877 = vpop.permute.xlu0 %2876
        %2880 = vset.pattern.permute.xlu0 0
        %2881 = vperm.xlu0 %2880, %v2835
        %v2882 = vpop.permute.xlu0 %2881
        %2885 = vset.pattern.permute.xlu0 0
        %2886 = vperm.xlu0 %2885, %v2836
        %v2887 = vpop.permute.xlu0 %2886
        %2890 = vset.pattern.permute.xlu0 0
        %2891 = vperm.xlu0 %2890, %v2837
        %v2892 = vpop.permute.xlu0 %2891
        %2895 = vset.pattern.permute.xlu0 0
        %2896 = vperm.xlu0 %2895, %v2838
        %v2897 = vpop.permute.xlu0 %2896
        %2900 = vset.pattern.permute.xlu0 0
        %2901 = vperm.xlu0 %2900, %v2839
        %v2902 = vpop.permute.xlu0 %2901
        %2905 = vset.pattern.permute.xlu0 0
        %2906 = vperm.xlu0 %2905, %v2840
        %v2907 = vpop.permute.xlu0 %2906
        %2910 = vset.pattern.permute.xlu0 0
        %2911 = vperm.xlu0 %2910, %v2841
        %v2912 = vpop.permute.xlu0 %2911
        %2915 = vset.pattern.permute.xlu0 0
        %2916 = vperm.xlu0 %2915, %v2842
        %v2917 = vpop.permute.xlu0 %2916
        %2920 = vset.pattern.permute.xlu0 0
        %2921 = vperm.xlu0 %2920, %v2843
        %v2922 = vpop.permute.xlu0 %2921
        %2925 = vset.pattern.permute.xlu0 0
        %2926 = vperm.xlu0 %2925, %v2844
        %v2927 = vpop.permute.xlu0 %2926
        %2930 = vset.pattern.permute.xlu0 0
        %2931 = vperm.xlu0 %2930, %v2845
        %v2932 = vpop.permute.xlu0 %2931
        %2935 = vset.pattern.permute.xlu0 0
        %2936 = vperm.xlu0 %2935, %v2846
        %v2937 = vpop.permute.xlu0 %2936
        %2940 = vset.pattern.permute.xlu0 0
        %2941 = vperm.xlu0 %2940, %v2847
        %v2942 = vpop.permute.xlu0 %2941
        %2945 = vset.pattern.permute.xlu0 0
        %2946 = vperm.xlu0 %2945, %v2848
        %v2947 = vpop.permute.xlu0 %2946
        %2950 = vset.pattern.permute.xlu0 0
        %2951 = vperm.xlu0 %2950, %v2849
        %v2952 = vpop.permute.xlu0 %2951
        %2955 = vset.pattern.permute.xlu0 0
        %2956 = vperm.xlu0 %2955, %v2850
        %v2957 = vpop.permute.xlu0 %2956
        %2960 = vset.pattern.permute.xlu0 0
        %2961 = vperm.xlu0 %2960, %v2851
        %v2962 = vpop.permute.xlu0 %2961
        %2965 = vset.pattern.permute.xlu0 0
        %2966 = vperm.xlu0 %2965, %v2852
        %v2967 = vpop.permute.xlu0 %2966
        %2970 = vset.pattern.permute.xlu0 0
        %2971 = vperm.xlu0 %2970, %v2853
        %v2972 = vpop.permute.xlu0 %2971
        %2975 = vset.pattern.permute.xlu0 0
        %2976 = vperm.xlu0 %2975, %v2854
        %v2977 = vpop.permute.xlu0 %2976
        %2980 = vset.pattern.permute.xlu0 0
        %2981 = vperm.xlu0 %2980, %v2855
        %v2982 = vpop.permute.xlu0 %2981
        %2985 = vset.pattern.permute.xlu0 0
        %2986 = vperm.xlu0 %2985, %v2856
        %v2987 = vpop.permute.xlu0 %2986
        %2990 = vset.pattern.permute.xlu0 0
        %2991 = vperm.xlu0 %2990, %v2857
        %v2992 = vpop.permute.xlu0 %2991
        %2995 = vset.pattern.permute.xlu0 0
        %2996 = vperm.xlu0 %2995, %v2858
        %v2997 = vpop.permute.xlu0 %2996
        %3000 = vset.pattern.permute.xlu0 0
        %3001 = vperm.xlu0 %3000, %v2859
        %v3002 = vpop.permute.xlu0 %3001
        %3005 = vset.pattern.permute.xlu0 0
        %3006 = vperm.xlu0 %3005, %v2860
        %v3007 = vpop.permute.xlu0 %3006
        %3010 = vset.pattern.permute.xlu0 0
        %3011 = vperm.xlu0 %3010, %v2861
        %v3012 = vpop.permute.xlu0 %3011
        %3015 = vset.pattern.permute.xlu0 0
        %3016 = vperm.xlu0 %3015, %v2862
        %v3017 = vpop.permute.xlu0 %3016
        %3020 = vset.pattern.permute.xlu0 0
        %3021 = vperm.xlu0 %3020, %v2863
        %v3022 = vpop.permute.xlu0 %3021
        %v3024 = vadd.f32 %v1857, %v2867
        %v3025 = vadd.f32 %v1858, %v2872
        %v3026 = vadd.f32 %v1859, %v2877
        %v3027 = vadd.f32 %v1860, %v2882
        %v3028 = vadd.f32 %v1861, %v2887
        %v3029 = vadd.f32 %v1862, %v2892
        %v3030 = vadd.f32 %v1863, %v2897
        %v3031 = vadd.f32 %v1864, %v2902
        %v3032 = vadd.f32 %v1865, %v2907
        %v3033 = vadd.f32 %v1866, %v2912
        %v3034 = vadd.f32 %v1867, %v2917
        %v3035 = vadd.f32 %v1868, %v2922
        %v3036 = vadd.f32 %v1869, %v2927
        %v3037 = vadd.f32 %v1870, %v2932
        %v3038 = vadd.f32 %v1871, %v2937
        %v3039 = vadd.f32 %v1872, %v2942
        %v3040 = vadd.f32 %v1873, %v2947
        %v3041 = vadd.f32 %v1874, %v2952
        %v3042 = vadd.f32 %v1875, %v2957
        %v3043 = vadd.f32 %v1876, %v2962
        %v3044 = vadd.f32 %v1877, %v2967
        %v3045 = vadd.f32 %v1878, %v2972
        %v3046 = vadd.f32 %v1879, %v2977
        %v3047 = vadd.f32 %v1880, %v2982
        %v3048 = vadd.f32 %v1881, %v2987
        %v3049 = vadd.f32 %v1882, %v2992
        %v3050 = vadd.f32 %v1883, %v2997
        %v3051 = vadd.f32 %v1884, %v3002
        %v3052 = vadd.f32 %v1885, %v3007
        %v3053 = vadd.f32 %v1886, %v3012
        %v3054 = vadd.f32 %v1887, %v3017
        %v3055 = vadd.f32 %v1888, %v3022
        %v3056 = vmax.f32 %v3024, %v3028
        %v3057 = vmax.f32 %v3025, %v3029
        %v3058 = vmax.f32 %v3026, %v3030
        %v3059 = vmax.f32 %v3027, %v3031
        %v3060 = vmax.f32 %v3056, %v3032
        %v3061 = vmax.f32 %v3057, %v3033
        %v3062 = vmax.f32 %v3058, %v3034
        %v3063 = vmax.f32 %v3059, %v3035
        %v3064 = vmax.f32 %v3060, %v3036
        %v3065 = vmax.f32 %v3061, %v3037
        %v3066 = vmax.f32 %v3062, %v3038
        %v3067 = vmax.f32 %v3063, %v3039
        %v3068 = vmax.f32 %v3064, %v3040
        %v3069 = vmax.f32 %v3065, %v3041
        %v3070 = vmax.f32 %v3066, %v3042
        %v3071 = vmax.f32 %v3067, %v3043
        %v3072 = vmax.f32 %v3068, %v3044
        %v3073 = vmax.f32 %v3069, %v3045
        %v3074 = vmax.f32 %v3070, %v3046
        %v3075 = vmax.f32 %v3071, %v3047
        %v3076 = vmax.f32 %v3072, %v3048
        %v3077 = vmax.f32 %v3073, %v3049
        %v3078 = vmax.f32 %v3074, %v3050
        %v3079 = vmax.f32 %v3075, %v3051
        %v3080 = vmax.f32 %v3076, %v3052
        %v3081 = vmax.f32 %v3077, %v3053
        %v3082 = vmax.f32 %v3078, %v3054
        %v3083 = vmax.f32 %v3079, %v3055
        %v3084 = vmax.f32 %v3080, %v3081
        %v3085 = vmax.f32 %v3082, %v3083
        %v3086 = vmax.f32 %v3084, %v3085
        %v3087 = vrot.slane %v3086, 4
        %v3088 = vmax.f32 %v3086, %v3087
        %v3089 = vrot.slane %v3088, 2
        %v3090 = vmax.f32 %v3088, %v3089
        %v3091 = vrot.slane %v3090, 1
        %v3092 = vmax.f32 %v3090, %v3091
        %vm3093 = vcmp.eq.s32.totalorder %v1889, 4
        %vm3094 = vcmp.eq.s32.totalorder %v1890, 4
        %vm3095 = vcmp.eq.s32.totalorder %v1891, 4
        %vm3096 = vcmp.eq.s32.totalorder %v1892, 4
        %vm3097 = vcmp.eq.s32.totalorder %v1893, 4
        %vm3098 = vcmp.eq.s32.totalorder %v1894, 4
        %vm3099 = vcmp.eq.s32.totalorder %v1895, 4
        %vm3100 = vcmp.eq.s32.totalorder %v1896, 4
        %vm3101 = vcmp.eq.s32.totalorder %v1897, 4
        %vm3102 = vcmp.eq.s32.totalorder %v1898, 4
        %vm3103 = vcmp.eq.s32.totalorder %v1899, 4
        %vm3104 = vcmp.eq.s32.totalorder %v1900, 4
        %vm3105 = vcmp.eq.s32.totalorder %v1901, 4
        %vm3106 = vcmp.eq.s32.totalorder %v1902, 4
        %vm3107 = vcmp.eq.s32.totalorder %v1903, 4
        %vm3108 = vcmp.eq.s32.totalorder %v1904, 4
        %vm3109 = vcmp.eq.s32.totalorder %v1905, 4
        %vm3110 = vcmp.eq.s32.totalorder %v1906, 4
        %vm3111 = vcmp.eq.s32.totalorder %v1907, 4
        %vm3112 = vcmp.eq.s32.totalorder %v1908, 4
        %vm3113 = vcmp.eq.s32.totalorder %v1909, 4
        %vm3114 = vcmp.eq.s32.totalorder %v1910, 4
        %vm3115 = vcmp.eq.s32.totalorder %v1911, 4
        %vm3116 = vcmp.eq.s32.totalorder %v1912, 4
        %vm3117 = vcmp.eq.s32.totalorder %v1913, 4
        %vm3118 = vcmp.eq.s32.totalorder %v1914, 4
        %vm3119 = vcmp.eq.s32.totalorder %v1915, 4
        %vm3120 = vcmp.eq.s32.totalorder %v1916, 4
        %vm3121 = vcmp.eq.s32.totalorder %v1917, 4
        %vm3122 = vcmp.eq.s32.totalorder %v1918, 4
        %vm3123 = vcmp.eq.s32.totalorder %v1919, 4
        %vm3124 = vcmp.eq.s32.totalorder %v1920, 4
        %v3125 = vsel %vm3093, 0.0, -1e+30
        %v3126 = vsel %vm3094, 0.0, -1e+30
        %v3127 = vsel %vm3095, 0.0, -1e+30
        %v3128 = vsel %vm3096, 0.0, -1e+30
        %v3129 = vsel %vm3097, 0.0, -1e+30
        %v3130 = vsel %vm3098, 0.0, -1e+30
        %v3131 = vsel %vm3099, 0.0, -1e+30
        %v3132 = vsel %vm3100, 0.0, -1e+30
        %v3133 = vsel %vm3101, 0.0, -1e+30
        %v3134 = vsel %vm3102, 0.0, -1e+30
        %v3135 = vsel %vm3103, 0.0, -1e+30
        %v3136 = vsel %vm3104, 0.0, -1e+30
        %v3137 = vsel %vm3105, 0.0, -1e+30
        %v3138 = vsel %vm3106, 0.0, -1e+30
        %v3139 = vsel %vm3107, 0.0, -1e+30
        %v3140 = vsel %vm3108, 0.0, -1e+30
        %v3141 = vsel %vm3109, 0.0, -1e+30
        %v3142 = vsel %vm3110, 0.0, -1e+30
        %v3143 = vsel %vm3111, 0.0, -1e+30
        %v3144 = vsel %vm3112, 0.0, -1e+30
        %v3145 = vsel %vm3113, 0.0, -1e+30
        %v3146 = vsel %vm3114, 0.0, -1e+30
        %v3147 = vsel %vm3115, 0.0, -1e+30
        %v3148 = vsel %vm3116, 0.0, -1e+30
        %v3149 = vsel %vm3117, 0.0, -1e+30
        %v3150 = vsel %vm3118, 0.0, -1e+30
        %v3151 = vsel %vm3119, 0.0, -1e+30
        %v3152 = vsel %vm3120, 0.0, -1e+30
        %v3153 = vsel %vm3121, 0.0, -1e+30
        %v3154 = vsel %vm3122, 0.0, -1e+30
        %v3155 = vsel %vm3123, 0.0, -1e+30
        %v3156 = vsel %vm3124, 0.0, -1e+30
        %3158 = vset.pattern.permute.xlu0 0
        %3159 = vperm.xlu0 %3158, %v3125
        %v3160 = vpop.permute.xlu0 %3159
        %3163 = vset.pattern.permute.xlu0 0
        %3164 = vperm.xlu0 %3163, %v3126
        %v3165 = vpop.permute.xlu0 %3164
        %3168 = vset.pattern.permute.xlu0 0
        %3169 = vperm.xlu0 %3168, %v3127
        %v3170 = vpop.permute.xlu0 %3169
        %3173 = vset.pattern.permute.xlu0 0
        %3174 = vperm.xlu0 %3173, %v3128
        %v3175 = vpop.permute.xlu0 %3174
        %3178 = vset.pattern.permute.xlu0 0
        %3179 = vperm.xlu0 %3178, %v3129
        %v3180 = vpop.permute.xlu0 %3179
        %3183 = vset.pattern.permute.xlu0 0
        %3184 = vperm.xlu0 %3183, %v3130
        %v3185 = vpop.permute.xlu0 %3184
        %3188 = vset.pattern.permute.xlu0 0
        %3189 = vperm.xlu0 %3188, %v3131
        %v3190 = vpop.permute.xlu0 %3189
        %3193 = vset.pattern.permute.xlu0 0
        %3194 = vperm.xlu0 %3193, %v3132
        %v3195 = vpop.permute.xlu0 %3194
        %3198 = vset.pattern.permute.xlu0 0
        %3199 = vperm.xlu0 %3198, %v3133
        %v3200 = vpop.permute.xlu0 %3199
        %3203 = vset.pattern.permute.xlu0 0
        %3204 = vperm.xlu0 %3203, %v3134
        %v3205 = vpop.permute.xlu0 %3204
        %3208 = vset.pattern.permute.xlu0 0
        %3209 = vperm.xlu0 %3208, %v3135
        %v3210 = vpop.permute.xlu0 %3209
        %3213 = vset.pattern.permute.xlu0 0
        %3214 = vperm.xlu0 %3213, %v3136
        %v3215 = vpop.permute.xlu0 %3214
        %3218 = vset.pattern.permute.xlu0 0
        %3219 = vperm.xlu0 %3218, %v3137
        %v3220 = vpop.permute.xlu0 %3219
        %3223 = vset.pattern.permute.xlu0 0
        %3224 = vperm.xlu0 %3223, %v3138
        %v3225 = vpop.permute.xlu0 %3224
        %3228 = vset.pattern.permute.xlu0 0
        %3229 = vperm.xlu0 %3228, %v3139
        %v3230 = vpop.permute.xlu0 %3229
        %3233 = vset.pattern.permute.xlu0 0
        %3234 = vperm.xlu0 %3233, %v3140
        %v3235 = vpop.permute.xlu0 %3234
        %3238 = vset.pattern.permute.xlu0 0
        %3239 = vperm.xlu0 %3238, %v3141
        %v3240 = vpop.permute.xlu0 %3239
        %3243 = vset.pattern.permute.xlu0 0
        %3244 = vperm.xlu0 %3243, %v3142
        %v3245 = vpop.permute.xlu0 %3244
        %3248 = vset.pattern.permute.xlu0 0
        %3249 = vperm.xlu0 %3248, %v3143
        %v3250 = vpop.permute.xlu0 %3249
        %3253 = vset.pattern.permute.xlu0 0
        %3254 = vperm.xlu0 %3253, %v3144
        %v3255 = vpop.permute.xlu0 %3254
        %3258 = vset.pattern.permute.xlu0 0
        %3259 = vperm.xlu0 %3258, %v3145
        %v3260 = vpop.permute.xlu0 %3259
        %3263 = vset.pattern.permute.xlu0 0
        %3264 = vperm.xlu0 %3263, %v3146
        %v3265 = vpop.permute.xlu0 %3264
        %3268 = vset.pattern.permute.xlu0 0
        %3269 = vperm.xlu0 %3268, %v3147
        %v3270 = vpop.permute.xlu0 %3269
        %3273 = vset.pattern.permute.xlu0 0
        %3274 = vperm.xlu0 %3273, %v3148
        %v3275 = vpop.permute.xlu0 %3274
        %3278 = vset.pattern.permute.xlu0 0
        %3279 = vperm.xlu0 %3278, %v3149
        %v3280 = vpop.permute.xlu0 %3279
        %3283 = vset.pattern.permute.xlu0 0
        %3284 = vperm.xlu0 %3283, %v3150
        %v3285 = vpop.permute.xlu0 %3284
        %3288 = vset.pattern.permute.xlu0 0
        %3289 = vperm.xlu0 %3288, %v3151
        %v3290 = vpop.permute.xlu0 %3289
        %3293 = vset.pattern.permute.xlu0 0
        %3294 = vperm.xlu0 %3293, %v3152
        %v3295 = vpop.permute.xlu0 %3294
        %3298 = vset.pattern.permute.xlu0 0
        %3299 = vperm.xlu0 %3298, %v3153
        %v3300 = vpop.permute.xlu0 %3299
        %3303 = vset.pattern.permute.xlu0 0
        %3304 = vperm.xlu0 %3303, %v3154
        %v3305 = vpop.permute.xlu0 %3304
        %3308 = vset.pattern.permute.xlu0 0
        %3309 = vperm.xlu0 %3308, %v3155
        %v3310 = vpop.permute.xlu0 %3309
        %3313 = vset.pattern.permute.xlu0 0
        %3314 = vperm.xlu0 %3313, %v3156
        %v3315 = vpop.permute.xlu0 %3314
        %v3317 = vadd.f32 %v1857, %v3160
        %v3318 = vadd.f32 %v1858, %v3165
        %v3319 = vadd.f32 %v1859, %v3170
        %v3320 = vadd.f32 %v1860, %v3175
        %v3321 = vadd.f32 %v1861, %v3180
        %v3322 = vadd.f32 %v1862, %v3185
        %v3323 = vadd.f32 %v1863, %v3190
        %v3324 = vadd.f32 %v1864, %v3195
        %v3325 = vadd.f32 %v1865, %v3200
        %v3326 = vadd.f32 %v1866, %v3205
        %v3327 = vadd.f32 %v1867, %v3210
        %v3328 = vadd.f32 %v1868, %v3215
        %v3329 = vadd.f32 %v1869, %v3220
        %v3330 = vadd.f32 %v1870, %v3225
        %v3331 = vadd.f32 %v1871, %v3230
        %v3332 = vadd.f32 %v1872, %v3235
        %v3333 = vadd.f32 %v1873, %v3240
        %v3334 = vadd.f32 %v1874, %v3245
        %v3335 = vadd.f32 %v1875, %v3250
        %v3336 = vadd.f32 %v1876, %v3255
        %v3337 = vadd.f32 %v1877, %v3260
        %v3338 = vadd.f32 %v1878, %v3265
        %v3339 = vadd.f32 %v1879, %v3270
        %v3340 = vadd.f32 %v1880, %v3275
        %v3341 = vadd.f32 %v1881, %v3280
        %v3342 = vadd.f32 %v1882, %v3285
        %v3343 = vadd.f32 %v1883, %v3290
        %v3344 = vadd.f32 %v1884, %v3295
        %v3345 = vadd.f32 %v1885, %v3300
        %v3346 = vadd.f32 %v1886, %v3305
        %v3347 = vadd.f32 %v1887, %v3310
        %v3348 = vadd.f32 %v1888, %v3315
        %v3349 = vmax.f32 %v3317, %v3321
        %v3350 = vmax.f32 %v3318, %v3322
        %v3351 = vmax.f32 %v3319, %v3323
        %v3352 = vmax.f32 %v3320, %v3324
        %v3353 = vmax.f32 %v3349, %v3325
        %v3354 = vmax.f32 %v3350, %v3326
        %v3355 = vmax.f32 %v3351, %v3327
        %v3356 = vmax.f32 %v3352, %v3328
        %v3357 = vmax.f32 %v3353, %v3329
        %v3358 = vmax.f32 %v3354, %v3330
        %v3359 = vmax.f32 %v3355, %v3331
        %v3360 = vmax.f32 %v3356, %v3332
        %v3361 = vmax.f32 %v3357, %v3333
        %v3362 = vmax.f32 %v3358, %v3334
        %v3363 = vmax.f32 %v3359, %v3335
        %v3364 = vmax.f32 %v3360, %v3336
        %v3365 = vmax.f32 %v3361, %v3337
        %v3366 = vmax.f32 %v3362, %v3338
        %v3367 = vmax.f32 %v3363, %v3339
        %v3368 = vmax.f32 %v3364, %v3340
        %v3369 = vmax.f32 %v3365, %v3341
        %v3370 = vmax.f32 %v3366, %v3342
        %v3371 = vmax.f32 %v3367, %v3343
        %v3372 = vmax.f32 %v3368, %v3344
        %v3373 = vmax.f32 %v3369, %v3345
        %v3374 = vmax.f32 %v3370, %v3346
        %v3375 = vmax.f32 %v3371, %v3347
        %v3376 = vmax.f32 %v3372, %v3348
        %v3377 = vmax.f32 %v3373, %v3374
        %v3378 = vmax.f32 %v3375, %v3376
        %v3379 = vmax.f32 %v3377, %v3378
        %v3380 = vrot.slane %v3379, 4
        %v3381 = vmax.f32 %v3379, %v3380
        %v3382 = vrot.slane %v3381, 2
        %v3383 = vmax.f32 %v3381, %v3382
        %v3384 = vrot.slane %v3383, 1
        %v3385 = vmax.f32 %v3383, %v3384
        %vm3386 = vcmp.eq.s32.totalorder %v1889, 5
        %vm3387 = vcmp.eq.s32.totalorder %v1890, 5
        %vm3388 = vcmp.eq.s32.totalorder %v1891, 5
        %vm3389 = vcmp.eq.s32.totalorder %v1892, 5
        %vm3390 = vcmp.eq.s32.totalorder %v1893, 5
        %vm3391 = vcmp.eq.s32.totalorder %v1894, 5
        %vm3392 = vcmp.eq.s32.totalorder %v1895, 5
        %vm3393 = vcmp.eq.s32.totalorder %v1896, 5
        %vm3394 = vcmp.eq.s32.totalorder %v1897, 5
        %vm3395 = vcmp.eq.s32.totalorder %v1898, 5
        %vm3396 = vcmp.eq.s32.totalorder %v1899, 5
        %vm3397 = vcmp.eq.s32.totalorder %v1900, 5
        %vm3398 = vcmp.eq.s32.totalorder %v1901, 5
        %vm3399 = vcmp.eq.s32.totalorder %v1902, 5
        %vm3400 = vcmp.eq.s32.totalorder %v1903, 5
        %vm3401 = vcmp.eq.s32.totalorder %v1904, 5
        %vm3402 = vcmp.eq.s32.totalorder %v1905, 5
        %vm3403 = vcmp.eq.s32.totalorder %v1906, 5
        %vm3404 = vcmp.eq.s32.totalorder %v1907, 5
        %vm3405 = vcmp.eq.s32.totalorder %v1908, 5
        %vm3406 = vcmp.eq.s32.totalorder %v1909, 5
        %vm3407 = vcmp.eq.s32.totalorder %v1910, 5
        %vm3408 = vcmp.eq.s32.totalorder %v1911, 5
        %vm3409 = vcmp.eq.s32.totalorder %v1912, 5
        %vm3410 = vcmp.eq.s32.totalorder %v1913, 5
        %vm3411 = vcmp.eq.s32.totalorder %v1914, 5
        %vm3412 = vcmp.eq.s32.totalorder %v1915, 5
        %vm3413 = vcmp.eq.s32.totalorder %v1916, 5
        %vm3414 = vcmp.eq.s32.totalorder %v1917, 5
        %vm3415 = vcmp.eq.s32.totalorder %v1918, 5
        %vm3416 = vcmp.eq.s32.totalorder %v1919, 5
        %vm3417 = vcmp.eq.s32.totalorder %v1920, 5
        %v3418 = vsel %vm3386, 0.0, -1e+30
        %v3419 = vsel %vm3387, 0.0, -1e+30
        %v3420 = vsel %vm3388, 0.0, -1e+30
        %v3421 = vsel %vm3389, 0.0, -1e+30
        %v3422 = vsel %vm3390, 0.0, -1e+30
        %v3423 = vsel %vm3391, 0.0, -1e+30
        %v3424 = vsel %vm3392, 0.0, -1e+30
        %v3425 = vsel %vm3393, 0.0, -1e+30
        %v3426 = vsel %vm3394, 0.0, -1e+30
        %v3427 = vsel %vm3395, 0.0, -1e+30
        %v3428 = vsel %vm3396, 0.0, -1e+30
        %v3429 = vsel %vm3397, 0.0, -1e+30
        %v3430 = vsel %vm3398, 0.0, -1e+30
        %v3431 = vsel %vm3399, 0.0, -1e+30
        %v3432 = vsel %vm3400, 0.0, -1e+30
        %v3433 = vsel %vm3401, 0.0, -1e+30
        %v3434 = vsel %vm3402, 0.0, -1e+30
        %v3435 = vsel %vm3403, 0.0, -1e+30
        %v3436 = vsel %vm3404, 0.0, -1e+30
        %v3437 = vsel %vm3405, 0.0, -1e+30
        %v3438 = vsel %vm3406, 0.0, -1e+30
        %v3439 = vsel %vm3407, 0.0, -1e+30
        %v3440 = vsel %vm3408, 0.0, -1e+30
        %v3441 = vsel %vm3409, 0.0, -1e+30
        %v3442 = vsel %vm3410, 0.0, -1e+30
        %v3443 = vsel %vm3411, 0.0, -1e+30
        %v3444 = vsel %vm3412, 0.0, -1e+30
        %v3445 = vsel %vm3413, 0.0, -1e+30
        %v3446 = vsel %vm3414, 0.0, -1e+30
        %v3447 = vsel %vm3415, 0.0, -1e+30
        %v3448 = vsel %vm3416, 0.0, -1e+30
        %v3449 = vsel %vm3417, 0.0, -1e+30
        %3451 = vset.pattern.permute.xlu0 0
        %3452 = vperm.xlu0 %3451, %v3418
        %v3453 = vpop.permute.xlu0 %3452
        %3456 = vset.pattern.permute.xlu0 0
        %3457 = vperm.xlu0 %3456, %v3419
        %v3458 = vpop.permute.xlu0 %3457
        %3461 = vset.pattern.permute.xlu0 0
        %3462 = vperm.xlu0 %3461, %v3420
        %v3463 = vpop.permute.xlu0 %3462
        %3466 = vset.pattern.permute.xlu0 0
        %3467 = vperm.xlu0 %3466, %v3421
        %v3468 = vpop.permute.xlu0 %3467
        %3471 = vset.pattern.permute.xlu0 0
        %3472 = vperm.xlu0 %3471, %v3422
        %v3473 = vpop.permute.xlu0 %3472
        %3476 = vset.pattern.permute.xlu0 0
        %3477 = vperm.xlu0 %3476, %v3423
        %v3478 = vpop.permute.xlu0 %3477
        %3481 = vset.pattern.permute.xlu0 0
        %3482 = vperm.xlu0 %3481, %v3424
        %v3483 = vpop.permute.xlu0 %3482
        %3486 = vset.pattern.permute.xlu0 0
        %3487 = vperm.xlu0 %3486, %v3425
        %v3488 = vpop.permute.xlu0 %3487
        %3491 = vset.pattern.permute.xlu0 0
        %3492 = vperm.xlu0 %3491, %v3426
        %v3493 = vpop.permute.xlu0 %3492
        %3496 = vset.pattern.permute.xlu0 0
        %3497 = vperm.xlu0 %3496, %v3427
        %v3498 = vpop.permute.xlu0 %3497
        %3501 = vset.pattern.permute.xlu0 0
        %3502 = vperm.xlu0 %3501, %v3428
        %v3503 = vpop.permute.xlu0 %3502
        %3506 = vset.pattern.permute.xlu0 0
        %3507 = vperm.xlu0 %3506, %v3429
        %v3508 = vpop.permute.xlu0 %3507
        %3511 = vset.pattern.permute.xlu0 0
        %3512 = vperm.xlu0 %3511, %v3430
        %v3513 = vpop.permute.xlu0 %3512
        %3516 = vset.pattern.permute.xlu0 0
        %3517 = vperm.xlu0 %3516, %v3431
        %v3518 = vpop.permute.xlu0 %3517
        %3521 = vset.pattern.permute.xlu0 0
        %3522 = vperm.xlu0 %3521, %v3432
        %v3523 = vpop.permute.xlu0 %3522
        %3526 = vset.pattern.permute.xlu0 0
        %3527 = vperm.xlu0 %3526, %v3433
        %v3528 = vpop.permute.xlu0 %3527
        %3531 = vset.pattern.permute.xlu0 0
        %3532 = vperm.xlu0 %3531, %v3434
        %v3533 = vpop.permute.xlu0 %3532
        %3536 = vset.pattern.permute.xlu0 0
        %3537 = vperm.xlu0 %3536, %v3435
        %v3538 = vpop.permute.xlu0 %3537
        %3541 = vset.pattern.permute.xlu0 0
        %3542 = vperm.xlu0 %3541, %v3436
        %v3543 = vpop.permute.xlu0 %3542
        %3546 = vset.pattern.permute.xlu0 0
        %3547 = vperm.xlu0 %3546, %v3437
        %v3548 = vpop.permute.xlu0 %3547
        %3551 = vset.pattern.permute.xlu0 0
        %3552 = vperm.xlu0 %3551, %v3438
        %v3553 = vpop.permute.xlu0 %3552
        %3556 = vset.pattern.permute.xlu0 0
        %3557 = vperm.xlu0 %3556, %v3439
        %v3558 = vpop.permute.xlu0 %3557
        %3561 = vset.pattern.permute.xlu0 0
        %3562 = vperm.xlu0 %3561, %v3440
        %v3563 = vpop.permute.xlu0 %3562
        %3566 = vset.pattern.permute.xlu0 0
        %3567 = vperm.xlu0 %3566, %v3441
        %v3568 = vpop.permute.xlu0 %3567
        %3571 = vset.pattern.permute.xlu0 0
        %3572 = vperm.xlu0 %3571, %v3442
        %v3573 = vpop.permute.xlu0 %3572
        %3576 = vset.pattern.permute.xlu0 0
        %3577 = vperm.xlu0 %3576, %v3443
        %v3578 = vpop.permute.xlu0 %3577
        %3581 = vset.pattern.permute.xlu0 0
        %3582 = vperm.xlu0 %3581, %v3444
        %v3583 = vpop.permute.xlu0 %3582
        %3586 = vset.pattern.permute.xlu0 0
        %3587 = vperm.xlu0 %3586, %v3445
        %v3588 = vpop.permute.xlu0 %3587
        %3591 = vset.pattern.permute.xlu0 0
        %3592 = vperm.xlu0 %3591, %v3446
        %v3593 = vpop.permute.xlu0 %3592
        %3596 = vset.pattern.permute.xlu0 0
        %3597 = vperm.xlu0 %3596, %v3447
        %v3598 = vpop.permute.xlu0 %3597
        %3601 = vset.pattern.permute.xlu0 0
        %3602 = vperm.xlu0 %3601, %v3448
        %v3603 = vpop.permute.xlu0 %3602
        %3606 = vset.pattern.permute.xlu0 0
        %3607 = vperm.xlu0 %3606, %v3449
        %v3608 = vpop.permute.xlu0 %3607
        %v3610 = vadd.f32 %v1857, %v3453
        %v3611 = vadd.f32 %v1858, %v3458
        %v3612 = vadd.f32 %v1859, %v3463
        %v3613 = vadd.f32 %v1860, %v3468
        %v3614 = vadd.f32 %v1861, %v3473
        %v3615 = vadd.f32 %v1862, %v3478
        %v3616 = vadd.f32 %v1863, %v3483
        %v3617 = vadd.f32 %v1864, %v3488
        %v3618 = vadd.f32 %v1865, %v3493
        %v3619 = vadd.f32 %v1866, %v3498
        %v3620 = vadd.f32 %v1867, %v3503
        %v3621 = vadd.f32 %v1868, %v3508
        %v3622 = vadd.f32 %v1869, %v3513
        %v3623 = vadd.f32 %v1870, %v3518
        %v3624 = vadd.f32 %v1871, %v3523
        %v3625 = vadd.f32 %v1872, %v3528
        %v3626 = vadd.f32 %v1873, %v3533
        %v3627 = vadd.f32 %v1874, %v3538
        %v3628 = vadd.f32 %v1875, %v3543
        %v3629 = vadd.f32 %v1876, %v3548
        %v3630 = vadd.f32 %v1877, %v3553
        %v3631 = vadd.f32 %v1878, %v3558
        %v3632 = vadd.f32 %v1879, %v3563
        %v3633 = vadd.f32 %v1880, %v3568
        %v3634 = vadd.f32 %v1881, %v3573
        %v3635 = vadd.f32 %v1882, %v3578
        %v3636 = vadd.f32 %v1883, %v3583
        %v3637 = vadd.f32 %v1884, %v3588
        %v3638 = vadd.f32 %v1885, %v3593
        %v3639 = vadd.f32 %v1886, %v3598
        %v3640 = vadd.f32 %v1887, %v3603
        %v3641 = vadd.f32 %v1888, %v3608
        %v3642 = vmax.f32 %v3610, %v3614
        %v3643 = vmax.f32 %v3611, %v3615
        %v3644 = vmax.f32 %v3612, %v3616
        %v3645 = vmax.f32 %v3613, %v3617
        %v3646 = vmax.f32 %v3642, %v3618
        %v3647 = vmax.f32 %v3643, %v3619
        %v3648 = vmax.f32 %v3644, %v3620
        %v3649 = vmax.f32 %v3645, %v3621
        %v3650 = vmax.f32 %v3646, %v3622
        %v3651 = vmax.f32 %v3647, %v3623
        %v3652 = vmax.f32 %v3648, %v3624
        %v3653 = vmax.f32 %v3649, %v3625
        %v3654 = vmax.f32 %v3650, %v3626
        %v3655 = vmax.f32 %v3651, %v3627
        %v3656 = vmax.f32 %v3652, %v3628
        %v3657 = vmax.f32 %v3653, %v3629
        %v3658 = vmax.f32 %v3654, %v3630
        %v3659 = vmax.f32 %v3655, %v3631
        %v3660 = vmax.f32 %v3656, %v3632
        %v3661 = vmax.f32 %v3657, %v3633
        %v3662 = vmax.f32 %v3658, %v3634
        %v3663 = vmax.f32 %v3659, %v3635
        %v3664 = vmax.f32 %v3660, %v3636
        %v3665 = vmax.f32 %v3661, %v3637
        %v3666 = vmax.f32 %v3662, %v3638
        %v3667 = vmax.f32 %v3663, %v3639
        %v3668 = vmax.f32 %v3664, %v3640
        %v3669 = vmax.f32 %v3665, %v3641
        %v3670 = vmax.f32 %v3666, %v3667
        %v3671 = vmax.f32 %v3668, %v3669
        %v3672 = vmax.f32 %v3670, %v3671
        %v3673 = vrot.slane %v3672, 4
        %v3674 = vmax.f32 %v3672, %v3673
        %v3675 = vrot.slane %v3674, 2
        %v3676 = vmax.f32 %v3674, %v3675
        %v3677 = vrot.slane %v3676, 1
        %v3678 = vmax.f32 %v3676, %v3677
        %vm3679 = vcmp.eq.s32.totalorder %v1889, 6
        %vm3680 = vcmp.eq.s32.totalorder %v1890, 6
        %vm3681 = vcmp.eq.s32.totalorder %v1891, 6
        %vm3682 = vcmp.eq.s32.totalorder %v1892, 6
        %vm3683 = vcmp.eq.s32.totalorder %v1893, 6
        %vm3684 = vcmp.eq.s32.totalorder %v1894, 6
        %vm3685 = vcmp.eq.s32.totalorder %v1895, 6
        %vm3686 = vcmp.eq.s32.totalorder %v1896, 6
        %vm3687 = vcmp.eq.s32.totalorder %v1897, 6
        %vm3688 = vcmp.eq.s32.totalorder %v1898, 6
        %vm3689 = vcmp.eq.s32.totalorder %v1899, 6
        %vm3690 = vcmp.eq.s32.totalorder %v1900, 6
        %vm3691 = vcmp.eq.s32.totalorder %v1901, 6
        %vm3692 = vcmp.eq.s32.totalorder %v1902, 6
        %vm3693 = vcmp.eq.s32.totalorder %v1903, 6
        %vm3694 = vcmp.eq.s32.totalorder %v1904, 6
        %vm3695 = vcmp.eq.s32.totalorder %v1905, 6
        %vm3696 = vcmp.eq.s32.totalorder %v1906, 6
        %vm3697 = vcmp.eq.s32.totalorder %v1907, 6
        %vm3698 = vcmp.eq.s32.totalorder %v1908, 6
        %vm3699 = vcmp.eq.s32.totalorder %v1909, 6
        %vm3700 = vcmp.eq.s32.totalorder %v1910, 6
        %vm3701 = vcmp.eq.s32.totalorder %v1911, 6
        %vm3702 = vcmp.eq.s32.totalorder %v1912, 6
        %vm3703 = vcmp.eq.s32.totalorder %v1913, 6
        %vm3704 = vcmp.eq.s32.totalorder %v1914, 6
        %vm3705 = vcmp.eq.s32.totalorder %v1915, 6
        %vm3706 = vcmp.eq.s32.totalorder %v1916, 6
        %vm3707 = vcmp.eq.s32.totalorder %v1917, 6
        %vm3708 = vcmp.eq.s32.totalorder %v1918, 6
        %vm3709 = vcmp.eq.s32.totalorder %v1919, 6
        %vm3710 = vcmp.eq.s32.totalorder %v1920, 6
        %v3711 = vsel %vm3679, 0.0, -1e+30
        %v3712 = vsel %vm3680, 0.0, -1e+30
        %v3713 = vsel %vm3681, 0.0, -1e+30
        %v3714 = vsel %vm3682, 0.0, -1e+30
        %v3715 = vsel %vm3683, 0.0, -1e+30
        %v3716 = vsel %vm3684, 0.0, -1e+30
        %v3717 = vsel %vm3685, 0.0, -1e+30
        %v3718 = vsel %vm3686, 0.0, -1e+30
        %v3719 = vsel %vm3687, 0.0, -1e+30
        %v3720 = vsel %vm3688, 0.0, -1e+30
        %v3721 = vsel %vm3689, 0.0, -1e+30
        %v3722 = vsel %vm3690, 0.0, -1e+30
        %v3723 = vsel %vm3691, 0.0, -1e+30
        %v3724 = vsel %vm3692, 0.0, -1e+30
        %v3725 = vsel %vm3693, 0.0, -1e+30
        %v3726 = vsel %vm3694, 0.0, -1e+30
        %v3727 = vsel %vm3695, 0.0, -1e+30
        %v3728 = vsel %vm3696, 0.0, -1e+30
        %v3729 = vsel %vm3697, 0.0, -1e+30
        %v3730 = vsel %vm3698, 0.0, -1e+30
        %v3731 = vsel %vm3699, 0.0, -1e+30
        %v3732 = vsel %vm3700, 0.0, -1e+30
        %v3733 = vsel %vm3701, 0.0, -1e+30
        %v3734 = vsel %vm3702, 0.0, -1e+30
        %v3735 = vsel %vm3703, 0.0, -1e+30
        %v3736 = vsel %vm3704, 0.0, -1e+30
        %v3737 = vsel %vm3705, 0.0, -1e+30
        %v3738 = vsel %vm3706, 0.0, -1e+30
        %v3739 = vsel %vm3707, 0.0, -1e+30
        %v3740 = vsel %vm3708, 0.0, -1e+30
        %v3741 = vsel %vm3709, 0.0, -1e+30
        %v3742 = vsel %vm3710, 0.0, -1e+30
        %3744 = vset.pattern.permute.xlu0 0
        %3745 = vperm.xlu0 %3744, %v3711
        %v3746 = vpop.permute.xlu0 %3745
        %3749 = vset.pattern.permute.xlu0 0
        %3750 = vperm.xlu0 %3749, %v3712
        %v3751 = vpop.permute.xlu0 %3750
        %3754 = vset.pattern.permute.xlu0 0
        %3755 = vperm.xlu0 %3754, %v3713
        %v3756 = vpop.permute.xlu0 %3755
        %3759 = vset.pattern.permute.xlu0 0
        %3760 = vperm.xlu0 %3759, %v3714
        %v3761 = vpop.permute.xlu0 %3760
        %3764 = vset.pattern.permute.xlu0 0
        %3765 = vperm.xlu0 %3764, %v3715
        %v3766 = vpop.permute.xlu0 %3765
        %3769 = vset.pattern.permute.xlu0 0
        %3770 = vperm.xlu0 %3769, %v3716
        %v3771 = vpop.permute.xlu0 %3770
        %3774 = vset.pattern.permute.xlu0 0
        %3775 = vperm.xlu0 %3774, %v3717
        %v3776 = vpop.permute.xlu0 %3775
        %3779 = vset.pattern.permute.xlu0 0
        %3780 = vperm.xlu0 %3779, %v3718
        %v3781 = vpop.permute.xlu0 %3780
        %3784 = vset.pattern.permute.xlu0 0
        %3785 = vperm.xlu0 %3784, %v3719
        %v3786 = vpop.permute.xlu0 %3785
        %3789 = vset.pattern.permute.xlu0 0
        %3790 = vperm.xlu0 %3789, %v3720
        %v3791 = vpop.permute.xlu0 %3790
        %3794 = vset.pattern.permute.xlu0 0
        %3795 = vperm.xlu0 %3794, %v3721
        %v3796 = vpop.permute.xlu0 %3795
        %3799 = vset.pattern.permute.xlu0 0
        %3800 = vperm.xlu0 %3799, %v3722
        %v3801 = vpop.permute.xlu0 %3800
        %3804 = vset.pattern.permute.xlu0 0
        %3805 = vperm.xlu0 %3804, %v3723
        %v3806 = vpop.permute.xlu0 %3805
        %3809 = vset.pattern.permute.xlu0 0
        %3810 = vperm.xlu0 %3809, %v3724
        %v3811 = vpop.permute.xlu0 %3810
        %3814 = vset.pattern.permute.xlu0 0
        %3815 = vperm.xlu0 %3814, %v3725
        %v3816 = vpop.permute.xlu0 %3815
        %3819 = vset.pattern.permute.xlu0 0
        %3820 = vperm.xlu0 %3819, %v3726
        %v3821 = vpop.permute.xlu0 %3820
        %3824 = vset.pattern.permute.xlu0 0
        %3825 = vperm.xlu0 %3824, %v3727
        %v3826 = vpop.permute.xlu0 %3825
        %3829 = vset.pattern.permute.xlu0 0
        %3830 = vperm.xlu0 %3829, %v3728
        %v3831 = vpop.permute.xlu0 %3830
        %3834 = vset.pattern.permute.xlu0 0
        %3835 = vperm.xlu0 %3834, %v3729
        %v3836 = vpop.permute.xlu0 %3835
        %3839 = vset.pattern.permute.xlu0 0
        %3840 = vperm.xlu0 %3839, %v3730
        %v3841 = vpop.permute.xlu0 %3840
        %3844 = vset.pattern.permute.xlu0 0
        %3845 = vperm.xlu0 %3844, %v3731
        %v3846 = vpop.permute.xlu0 %3845
        %3849 = vset.pattern.permute.xlu0 0
        %3850 = vperm.xlu0 %3849, %v3732
        %v3851 = vpop.permute.xlu0 %3850
        %3854 = vset.pattern.permute.xlu0 0
        %3855 = vperm.xlu0 %3854, %v3733
        %v3856 = vpop.permute.xlu0 %3855
        %3859 = vset.pattern.permute.xlu0 0
        %3860 = vperm.xlu0 %3859, %v3734
        %v3861 = vpop.permute.xlu0 %3860
        %3864 = vset.pattern.permute.xlu0 0
        %3865 = vperm.xlu0 %3864, %v3735
        %v3866 = vpop.permute.xlu0 %3865
        %3869 = vset.pattern.permute.xlu0 0
        %3870 = vperm.xlu0 %3869, %v3736
        %v3871 = vpop.permute.xlu0 %3870
        %3874 = vset.pattern.permute.xlu0 0
        %3875 = vperm.xlu0 %3874, %v3737
        %v3876 = vpop.permute.xlu0 %3875
        %3879 = vset.pattern.permute.xlu0 0
        %3880 = vperm.xlu0 %3879, %v3738
        %v3881 = vpop.permute.xlu0 %3880
        %3884 = vset.pattern.permute.xlu0 0
        %3885 = vperm.xlu0 %3884, %v3739
        %v3886 = vpop.permute.xlu0 %3885
        %3889 = vset.pattern.permute.xlu0 0
        %3890 = vperm.xlu0 %3889, %v3740
        %v3891 = vpop.permute.xlu0 %3890
        %3894 = vset.pattern.permute.xlu0 0
        %3895 = vperm.xlu0 %3894, %v3741
        %v3896 = vpop.permute.xlu0 %3895
        %3899 = vset.pattern.permute.xlu0 0
        %3900 = vperm.xlu0 %3899, %v3742
        %v3901 = vpop.permute.xlu0 %3900
        %v3903 = vadd.f32 %v1857, %v3746
        %v3904 = vadd.f32 %v1858, %v3751
        %v3905 = vadd.f32 %v1859, %v3756
        %v3906 = vadd.f32 %v1860, %v3761
        %v3907 = vadd.f32 %v1861, %v3766
        %v3908 = vadd.f32 %v1862, %v3771
        %v3909 = vadd.f32 %v1863, %v3776
        %v3910 = vadd.f32 %v1864, %v3781
        %v3911 = vadd.f32 %v1865, %v3786
        %v3912 = vadd.f32 %v1866, %v3791
        %v3913 = vadd.f32 %v1867, %v3796
        %v3914 = vadd.f32 %v1868, %v3801
        %v3915 = vadd.f32 %v1869, %v3806
        %v3916 = vadd.f32 %v1870, %v3811
        %v3917 = vadd.f32 %v1871, %v3816
        %v3918 = vadd.f32 %v1872, %v3821
        %v3919 = vadd.f32 %v1873, %v3826
        %v3920 = vadd.f32 %v1874, %v3831
        %v3921 = vadd.f32 %v1875, %v3836
        %v3922 = vadd.f32 %v1876, %v3841
        %v3923 = vadd.f32 %v1877, %v3846
        %v3924 = vadd.f32 %v1878, %v3851
        %v3925 = vadd.f32 %v1879, %v3856
        %v3926 = vadd.f32 %v1880, %v3861
        %v3927 = vadd.f32 %v1881, %v3866
        %v3928 = vadd.f32 %v1882, %v3871
        %v3929 = vadd.f32 %v1883, %v3876
        %v3930 = vadd.f32 %v1884, %v3881
        %v3931 = vadd.f32 %v1885, %v3886
        %v3932 = vadd.f32 %v1886, %v3891
        %v3933 = vadd.f32 %v1887, %v3896
        %v3934 = vadd.f32 %v1888, %v3901
        %v3935 = vmax.f32 %v3903, %v3907
        %v3936 = vmax.f32 %v3904, %v3908
        %v3937 = vmax.f32 %v3905, %v3909
        %v3938 = vmax.f32 %v3906, %v3910
        %v3939 = vmax.f32 %v3935, %v3911
        %v3940 = vmax.f32 %v3936, %v3912
        %v3941 = vmax.f32 %v3937, %v3913
        %v3942 = vmax.f32 %v3938, %v3914
        %v3943 = vmax.f32 %v3939, %v3915
        %v3944 = vmax.f32 %v3940, %v3916
        %v3945 = vmax.f32 %v3941, %v3917
        %v3946 = vmax.f32 %v3942, %v3918
        %v3947 = vmax.f32 %v3943, %v3919
        %v3948 = vmax.f32 %v3944, %v3920
        %v3949 = vmax.f32 %v3945, %v3921
        %v3950 = vmax.f32 %v3946, %v3922
        %v3951 = vmax.f32 %v3947, %v3923
        %v3952 = vmax.f32 %v3948, %v3924
        %v3953 = vmax.f32 %v3949, %v3925
        %v3954 = vmax.f32 %v3950, %v3926
        %v3955 = vmax.f32 %v3951, %v3927
        %v3956 = vmax.f32 %v3952, %v3928
        %v3957 = vmax.f32 %v3953, %v3929
        %v3958 = vmax.f32 %v3954, %v3930
        %v3959 = vmax.f32 %v3955, %v3931
        %v3960 = vmax.f32 %v3956, %v3932
        %v3961 = vmax.f32 %v3957, %v3933
        %v3962 = vmax.f32 %v3958, %v3934
        %v3963 = vmax.f32 %v3959, %v3960
        %v3964 = vmax.f32 %v3961, %v3962
        %v3965 = vmax.f32 %v3963, %v3964
        %v3966 = vrot.slane %v3965, 4
        %v3967 = vmax.f32 %v3965, %v3966
        %v3968 = vrot.slane %v3967, 2
        %v3969 = vmax.f32 %v3967, %v3968
        %v3970 = vrot.slane %v3969, 1
        %v3971 = vmax.f32 %v3969, %v3970
        %vm3972 = vcmp.eq.s32.totalorder %v1889, 7
        %vm3973 = vcmp.eq.s32.totalorder %v1890, 7
        %vm3974 = vcmp.eq.s32.totalorder %v1891, 7
        %vm3975 = vcmp.eq.s32.totalorder %v1892, 7
        %vm3976 = vcmp.eq.s32.totalorder %v1893, 7
        %vm3977 = vcmp.eq.s32.totalorder %v1894, 7
        %vm3978 = vcmp.eq.s32.totalorder %v1895, 7
        %vm3979 = vcmp.eq.s32.totalorder %v1896, 7
        %vm3980 = vcmp.eq.s32.totalorder %v1897, 7
        %vm3981 = vcmp.eq.s32.totalorder %v1898, 7
        %vm3982 = vcmp.eq.s32.totalorder %v1899, 7
        %vm3983 = vcmp.eq.s32.totalorder %v1900, 7
        %vm3984 = vcmp.eq.s32.totalorder %v1901, 7
        %vm3985 = vcmp.eq.s32.totalorder %v1902, 7
        %vm3986 = vcmp.eq.s32.totalorder %v1903, 7
        %vm3987 = vcmp.eq.s32.totalorder %v1904, 7
        %vm3988 = vcmp.eq.s32.totalorder %v1905, 7
        %vm3989 = vcmp.eq.s32.totalorder %v1906, 7
        %vm3990 = vcmp.eq.s32.totalorder %v1907, 7
        %vm3991 = vcmp.eq.s32.totalorder %v1908, 7
        %vm3992 = vcmp.eq.s32.totalorder %v1909, 7
        %vm3993 = vcmp.eq.s32.totalorder %v1910, 7
        %vm3994 = vcmp.eq.s32.totalorder %v1911, 7
        %vm3995 = vcmp.eq.s32.totalorder %v1912, 7
        %vm3996 = vcmp.eq.s32.totalorder %v1913, 7
        %vm3997 = vcmp.eq.s32.totalorder %v1914, 7
        %vm3998 = vcmp.eq.s32.totalorder %v1915, 7
        %vm3999 = vcmp.eq.s32.totalorder %v1916, 7
        %vm4000 = vcmp.eq.s32.totalorder %v1917, 7
        %vm4001 = vcmp.eq.s32.totalorder %v1918, 7
        %vm4002 = vcmp.eq.s32.totalorder %v1919, 7
        %vm4003 = vcmp.eq.s32.totalorder %v1920, 7
        %v4004 = vsel %vm3972, 0.0, -1e+30
        %v4005 = vsel %vm3973, 0.0, -1e+30
        %v4006 = vsel %vm3974, 0.0, -1e+30
        %v4007 = vsel %vm3975, 0.0, -1e+30
        %v4008 = vsel %vm3976, 0.0, -1e+30
        %v4009 = vsel %vm3977, 0.0, -1e+30
        %v4010 = vsel %vm3978, 0.0, -1e+30
        %v4011 = vsel %vm3979, 0.0, -1e+30
        %v4012 = vsel %vm3980, 0.0, -1e+30
        %v4013 = vsel %vm3981, 0.0, -1e+30
        %v4014 = vsel %vm3982, 0.0, -1e+30
        %v4015 = vsel %vm3983, 0.0, -1e+30
        %v4016 = vsel %vm3984, 0.0, -1e+30
        %v4017 = vsel %vm3985, 0.0, -1e+30
        %v4018 = vsel %vm3986, 0.0, -1e+30
        %v4019 = vsel %vm3987, 0.0, -1e+30
        %v4020 = vsel %vm3988, 0.0, -1e+30
        %v4021 = vsel %vm3989, 0.0, -1e+30
        %v4022 = vsel %vm3990, 0.0, -1e+30
        %v4023 = vsel %vm3991, 0.0, -1e+30
        %v4024 = vsel %vm3992, 0.0, -1e+30
        %v4025 = vsel %vm3993, 0.0, -1e+30
        %v4026 = vsel %vm3994, 0.0, -1e+30
        %v4027 = vsel %vm3995, 0.0, -1e+30
        %v4028 = vsel %vm3996, 0.0, -1e+30
        %v4029 = vsel %vm3997, 0.0, -1e+30
        %v4030 = vsel %vm3998, 0.0, -1e+30
        %v4031 = vsel %vm3999, 0.0, -1e+30
        %v4032 = vsel %vm4000, 0.0, -1e+30
        %v4033 = vsel %vm4001, 0.0, -1e+30
        %v4034 = vsel %vm4002, 0.0, -1e+30
        %v4035 = vsel %vm4003, 0.0, -1e+30
        %4037 = vset.pattern.permute.xlu0 0
        %4038 = vperm.xlu0 %4037, %v4004
        %v4039 = vpop.permute.xlu0 %4038
        %4042 = vset.pattern.permute.xlu0 0
        %4043 = vperm.xlu0 %4042, %v4005
        %v4044 = vpop.permute.xlu0 %4043
        %4047 = vset.pattern.permute.xlu0 0
        %4048 = vperm.xlu0 %4047, %v4006
        %v4049 = vpop.permute.xlu0 %4048
        %4052 = vset.pattern.permute.xlu0 0
        %4053 = vperm.xlu0 %4052, %v4007
        %v4054 = vpop.permute.xlu0 %4053
        %4057 = vset.pattern.permute.xlu0 0
        %4058 = vperm.xlu0 %4057, %v4008
        %v4059 = vpop.permute.xlu0 %4058
        %4062 = vset.pattern.permute.xlu0 0
        %4063 = vperm.xlu0 %4062, %v4009
        %v4064 = vpop.permute.xlu0 %4063
        %4067 = vset.pattern.permute.xlu0 0
        %4068 = vperm.xlu0 %4067, %v4010
        %v4069 = vpop.permute.xlu0 %4068
        %4072 = vset.pattern.permute.xlu0 0
        %4073 = vperm.xlu0 %4072, %v4011
        %v4074 = vpop.permute.xlu0 %4073
        %4077 = vset.pattern.permute.xlu0 0
        %4078 = vperm.xlu0 %4077, %v4012
        %v4079 = vpop.permute.xlu0 %4078
        %4082 = vset.pattern.permute.xlu0 0
        %4083 = vperm.xlu0 %4082, %v4013
        %v4084 = vpop.permute.xlu0 %4083
        %4087 = vset.pattern.permute.xlu0 0
        %4088 = vperm.xlu0 %4087, %v4014
        %v4089 = vpop.permute.xlu0 %4088
        %4092 = vset.pattern.permute.xlu0 0
        %4093 = vperm.xlu0 %4092, %v4015
        %v4094 = vpop.permute.xlu0 %4093
        %4097 = vset.pattern.permute.xlu0 0
        %4098 = vperm.xlu0 %4097, %v4016
        %v4099 = vpop.permute.xlu0 %4098
        %4102 = vset.pattern.permute.xlu0 0
        %4103 = vperm.xlu0 %4102, %v4017
        %v4104 = vpop.permute.xlu0 %4103
        %4107 = vset.pattern.permute.xlu0 0
        %4108 = vperm.xlu0 %4107, %v4018
        %v4109 = vpop.permute.xlu0 %4108
        %4112 = vset.pattern.permute.xlu0 0
        %4113 = vperm.xlu0 %4112, %v4019
        %v4114 = vpop.permute.xlu0 %4113
        %4117 = vset.pattern.permute.xlu0 0
        %4118 = vperm.xlu0 %4117, %v4020
        %v4119 = vpop.permute.xlu0 %4118
        %4122 = vset.pattern.permute.xlu0 0
        %4123 = vperm.xlu0 %4122, %v4021
        %v4124 = vpop.permute.xlu0 %4123
        %4127 = vset.pattern.permute.xlu0 0
        %4128 = vperm.xlu0 %4127, %v4022
        %v4129 = vpop.permute.xlu0 %4128
        %4132 = vset.pattern.permute.xlu0 0
        %4133 = vperm.xlu0 %4132, %v4023
        %v4134 = vpop.permute.xlu0 %4133
        %4137 = vset.pattern.permute.xlu0 0
        %4138 = vperm.xlu0 %4137, %v4024
        %v4139 = vpop.permute.xlu0 %4138
        %4142 = vset.pattern.permute.xlu0 0
        %4143 = vperm.xlu0 %4142, %v4025
        %v4144 = vpop.permute.xlu0 %4143
        %4147 = vset.pattern.permute.xlu0 0
        %4148 = vperm.xlu0 %4147, %v4026
        %v4149 = vpop.permute.xlu0 %4148
        %4152 = vset.pattern.permute.xlu0 0
        %4153 = vperm.xlu0 %4152, %v4027
        %v4154 = vpop.permute.xlu0 %4153
        %4157 = vset.pattern.permute.xlu0 0
        %4158 = vperm.xlu0 %4157, %v4028
        %v4159 = vpop.permute.xlu0 %4158
        %4162 = vset.pattern.permute.xlu0 0
        %4163 = vperm.xlu0 %4162, %v4029
        %v4164 = vpop.permute.xlu0 %4163
        %4167 = vset.pattern.permute.xlu0 0
        %4168 = vperm.xlu0 %4167, %v4030
        %v4169 = vpop.permute.xlu0 %4168
        %4172 = vset.pattern.permute.xlu0 0
        %4173 = vperm.xlu0 %4172, %v4031
        %v4174 = vpop.permute.xlu0 %4173
        %4177 = vset.pattern.permute.xlu0 0
        %4178 = vperm.xlu0 %4177, %v4032
        %v4179 = vpop.permute.xlu0 %4178
        %4182 = vset.pattern.permute.xlu0 0
        %4183 = vperm.xlu0 %4182, %v4033
        %v4184 = vpop.permute.xlu0 %4183
        %4187 = vset.pattern.permute.xlu0 0
        %4188 = vperm.xlu0 %4187, %v4034
        %v4189 = vpop.permute.xlu0 %4188
        %4192 = vset.pattern.permute.xlu0 0
        %4193 = vperm.xlu0 %4192, %v4035
        %v4194 = vpop.permute.xlu0 %4193
        %v4196 = vadd.f32 %v1857, %v4039
        %v4197 = vadd.f32 %v1858, %v4044
        %v4198 = vadd.f32 %v1859, %v4049
        %v4199 = vadd.f32 %v1860, %v4054
        %v4200 = vadd.f32 %v1861, %v4059
        %v4201 = vadd.f32 %v1862, %v4064
        %v4202 = vadd.f32 %v1863, %v4069
        %v4203 = vadd.f32 %v1864, %v4074
        %v4204 = vadd.f32 %v1865, %v4079
        %v4205 = vadd.f32 %v1866, %v4084
        %v4206 = vadd.f32 %v1867, %v4089
        %v4207 = vadd.f32 %v1868, %v4094
        %v4208 = vadd.f32 %v1869, %v4099
        %v4209 = vadd.f32 %v1870, %v4104
        %v4210 = vadd.f32 %v1871, %v4109
        %v4211 = vadd.f32 %v1872, %v4114
        %v4212 = vadd.f32 %v1873, %v4119
        %v4213 = vadd.f32 %v1874, %v4124
        %v4214 = vadd.f32 %v1875, %v4129
        %v4215 = vadd.f32 %v1876, %v4134
        %v4216 = vadd.f32 %v1877, %v4139
        %v4217 = vadd.f32 %v1878, %v4144
        %v4218 = vadd.f32 %v1879, %v4149
        %v4219 = vadd.f32 %v1880, %v4154
        %v4220 = vadd.f32 %v1881, %v4159
        %v4221 = vadd.f32 %v1882, %v4164
        %v4222 = vadd.f32 %v1883, %v4169
        %v4223 = vadd.f32 %v1884, %v4174
        %v4224 = vadd.f32 %v1885, %v4179
        %v4225 = vadd.f32 %v1886, %v4184
        %v4226 = vadd.f32 %v1887, %v4189
        %v4227 = vadd.f32 %v1888, %v4194
        %v4228 = vmax.f32 %v4196, %v4200
        %v4229 = vmax.f32 %v4197, %v4201
        %v4230 = vmax.f32 %v4198, %v4202
        %v4231 = vmax.f32 %v4199, %v4203
        %v4232 = vmax.f32 %v4228, %v4204
        %v4233 = vmax.f32 %v4229, %v4205
        %v4234 = vmax.f32 %v4230, %v4206
        %v4235 = vmax.f32 %v4231, %v4207
        %v4236 = vmax.f32 %v4232, %v4208
        %v4237 = vmax.f32 %v4233, %v4209
        %v4238 = vmax.f32 %v4234, %v4210
        %v4239 = vmax.f32 %v4235, %v4211
        %v4240 = vmax.f32 %v4236, %v4212
        %v4241 = vmax.f32 %v4237, %v4213
        %v4242 = vmax.f32 %v4238, %v4214
        %v4243 = vmax.f32 %v4239, %v4215
        %v4244 = vmax.f32 %v4240, %v4216
        %v4245 = vmax.f32 %v4241, %v4217
        %v4246 = vmax.f32 %v4242, %v4218
        %v4247 = vmax.f32 %v4243, %v4219
        %v4248 = vmax.f32 %v4244, %v4220
        %v4249 = vmax.f32 %v4245, %v4221
        %v4250 = vmax.f32 %v4246, %v4222
        %v4251 = vmax.f32 %v4247, %v4223
        %v4252 = vmax.f32 %v4248, %v4224
        %v4253 = vmax.f32 %v4249, %v4225
        %v4254 = vmax.f32 %v4250, %v4226
        %v4255 = vmax.f32 %v4251, %v4227
        %v4256 = vmax.f32 %v4252, %v4253
        %v4257 = vmax.f32 %v4254, %v4255
        %v4258 = vmax.f32 %v4256, %v4257
        %v4259 = vrot.slane %v4258, 4
        %v4260 = vmax.f32 %v4258, %v4259
        %v4261 = vrot.slane %v4260, 2
        %v4262 = vmax.f32 %v4260, %v4261
        %v4263 = vrot.slane %v4262, 1
        %v4264 = vmax.f32 %v4262, %v4263
        %v4265 = vld [vmem:[#allocation2] sm:$0xff]
        %vm4266 = vcmask 1040384
        %v4267 = vsel %vm4266, %v2213, %v2506
        %vm4268 = vcmask 1041408
        %v4269 = vsel %vm4268, %v4267, %v2799
        %vm4270 = vcmask 1042432
        %v4271 = vsel %vm4270, %v4269, %v3092
        %vm4272 = vcmask 1043456
        %v4273 = vsel %vm4272, %v4271, %v3385
        %vm4274 = vcmask 1044480
        %v4275 = vsel %vm4274, %v4273, %v3678
        %vm4276 = vcmask 1045504
        %v4277 = vsel %vm4276, %v4275, %v3971
        %vm4278 = vcmask 1046528
        %v4279 = vsel %vm4278, %v4277, %v4264
        %v4280 = vmax.f32 %v4265, %v4279
        %4281 = vst [vmem:[#allocation2] sm:$0xff] %v4280
        %p4282 = scmp.eq.s32.totalorder %s30, 2
        // Predicated region
        $region93: #{tpu_custom_call.1} parent=87 // pred_check
          %p4283 = pneg %p4282
        $region94: #{tpu_custom_call.1} parent=87 // pred_check_branch
          %4285 = sbr.rel (%p4283) target = $region96
        $region95: #{tpu_custom_call.1} parent=87 // pred_region
          %v4286 = vld [vmem:[#allocation2] sm:$0xff]
          %v4287 = vld [vmem:[%s15] sm:$0xff]
          %v4288 = vld [vmem:[%s15 + $0x8] sm:$0xff]
          %v4289 = vld [vmem:[%s15 + $0x10] sm:$0xff]
          %v4290 = vld [vmem:[%s15 + $0x18] sm:$0xff]
          %v4291 = vld [vmem:[%s15 + $0x20] sm:$0xff]
          %v4292 = vld [vmem:[%s15 + $0x28] sm:$0xff]
          %v4293 = vld [vmem:[%s15 + $0x30] sm:$0xff]
          %v4294 = vld [vmem:[%s15 + $0x38] sm:$0xff]
          %v4295 = vld [vmem:[%s15 + $0x40] sm:$0xff]
          %v4296 = vld [vmem:[%s15 + $0x48] sm:$0xff]
          %v4297 = vld [vmem:[%s15 + $0x50] sm:$0xff]
          %v4298 = vld [vmem:[%s15 + $0x58] sm:$0xff]
          %v4299 = vld [vmem:[%s15 + $0x60] sm:$0xff]
          %v4300 = vld [vmem:[%s15 + $0x68] sm:$0xff]
          %v4301 = vld [vmem:[%s15 + $0x70] sm:$0xff]
          %v4302 = vld [vmem:[%s15 + $0x78] sm:$0xff]
          %v4303 = vld [vmem:[%s16] sm:$0x1]
          %v4305 = vlaneseq
          %v4306 = vshrl.u32 %v4305, 7
          %v4307 = vsub.s32 0, %v4306
          %v4308 = vrot.slane %v4303, %v4307
          %4310 = vmatprep.subr.mxu0 0.0
          %4311 = vmatpush1.msra.mxu0 %v4287
          %4312 = vmatprep.subr.mxu0 0.0
          %4313 = vmatpush1.msra.mxu0 %v4288
          %4314 = vmatprep.subr.mxu0 0.0
          %4315 = vmatpush1.msra.mxu0 %v4289
          %4316 = vmatprep.subr.mxu0 0.0
          %4317 = vmatpush1.msra.mxu0 %v4290
          %4318 = vmatprep.subr.mxu0 0.0
          %4319 = vmatpush1.msra.mxu0 %v4291
          %4320 = vmatprep.subr.mxu0 0.0
          %4321 = vmatpush1.msra.mxu0 %v4292
          %4322 = vmatprep.subr.mxu0 0.0
          %4323 = vmatpush1.msra.mxu0 %v4293
          %4324 = vmatprep.subr.mxu0 0.0
          %4325 = vmatpush1.msra.mxu0 %v4294
          %4326 = vmatprep.subr.mxu0 0.0
          %4327 = vmatpush1.msra.mxu0 %v4295
          %4328 = vmatprep.subr.mxu0 0.0
          %4329 = vmatpush1.msra.mxu0 %v4296
          %4330 = vmatprep.subr.mxu0 0.0
          %4331 = vmatpush1.msra.mxu0 %v4297
          %4332 = vmatprep.subr.mxu0 0.0
          %4333 = vmatpush1.msra.mxu0 %v4298
          %4334 = vmatprep.subr.mxu0 0.0
          %4335 = vmatpush1.msra.mxu0 %v4299
          %4336 = vmatprep.subr.mxu0 0.0
          %4337 = vmatpush1.msra.mxu0 %v4300
          %4338 = vmatprep.subr.mxu0 0.0
          %4339 = vmatpush1.msra.mxu0 %v4301
          %4340 = vmatprep.subr.mxu0 0.0
          %4341 = vmatpush1.msra.mxu0 %v4302
          %4342 = vmatprep.subr.mxu0 0.0
          %4343 = vmatpush1.msra.mxu0 0.0
          %4344 = vmatprep.subr.mxu0 0.0
          %4345 = vmatpush1.msra.mxu0 0.0
          %4346 = vmatprep.subr.mxu0 0.0
          %4347 = vmatpush1.msra.mxu0 0.0
          %4348 = vmatprep.subr.mxu0 0.0
          %4349 = vmatpush1.msra.mxu0 0.0
          %4350 = vmatprep.subr.mxu0 0.0
          %4351 = vmatpush1.msra.mxu0 0.0
          %4352 = vmatprep.subr.mxu0 0.0
          %4353 = vmatpush1.msra.mxu0 0.0
          %4354 = vmatprep.subr.mxu0 0.0
          %4355 = vmatpush1.msra.mxu0 0.0
          %4356 = vmatprep.subr.mxu0 0.0
          %4357 = vmatpush1.msra.mxu0 0.0
          %4358 = vmatprep.subr.mxu0 0.0
          %4359 = vmatpush1.msra.mxu0 0.0
          %4360 = vmatprep.subr.mxu0 0.0
          %4361 = vmatpush1.msra.mxu0 0.0
          %4362 = vmatprep.subr.mxu0 0.0
          %4363 = vmatpush1.msra.mxu0 0.0
          %4364 = vmatprep.subr.mxu0 0.0
          %4365 = vmatpush1.msra.mxu0 0.0
          %4366 = vmatprep.subr.mxu0 0.0
          %4367 = vmatpush1.msra.mxu0 0.0
          %4368 = vmatprep.subr.mxu0 0.0
          %4369 = vmatpush1.msra.mxu0 0.0
          %4370 = vmatprep.subr.mxu0 0.0
          %4371 = vmatpush1.msra.mxu0 0.0
          %4372 = vmatprep.subr.mxu0 0.0
          %4373 = vmatpush1.msra.mxu0 0.0
          %4374 = vmatprep.mubr.f32.mxu0 0.0
          %4375 = vmatmul.mubr.f32.gmra.mrb[0].mxu0 %v4286
          %v4376 = vpop.f32.mrb[0].mxu0
          %v4377 = vadd.f32 %v4308, %v4376
          %v4378 = vpop.f32.mrb[0].mxu0
          %4379 = vdwg.mxu0
          %4380 = vst [vmem:[#allocation4] sm:$0xff] %v4377
        $region96: #{tpu_custom_call.1} parent=87 // pred_fallthru
          _
        // Predicated region
        $region97: #{tpu_custom_call.1} parent=87 // pred_check
          %p4381 = pneg %p410
        $region98: #{tpu_custom_call.1} parent=87 // pred_check_branch
          %4383 = sbr.rel (%p4381) target = $region100
        $region99: #{tpu_custom_call.1} parent=87 // pred_region
          %s4385 = ssub.s32 128, 128
          %4386 = vsyncadd [#allocation5], %s4385
          %s4388 = sshll.u32 [#allocation4], 4
          %s4389 = int_to_ptr.vmem [resolvable:$true] %s4388
          %4391 = dma.vmem_to_hbm [thread:$0]  %s4389, 128, %s17, [#allocation5]
        $region100: #{tpu_custom_call.1} parent=87 // pred_fallthru
          _
        // Predicated region
        $region101: #{tpu_custom_call.1} parent=87 // pred_check
          %p4392 = pneg %p410
        $region102: #{tpu_custom_call.1} parent=87 // pred_check_branch
          %4394 = sbr.rel (%p4392) target = $region104
        $region103: #{tpu_custom_call.1} parent=87 // pred_region
          %4395 = dma.done [#allocation5], 128
        $region104: #{tpu_custom_call.1} parent=87 // pred_fallthru
          _
      $region88: #{tpu_custom_call.1} parent=5 // pred_fallthru
        _
      %p4396 = scmp.le.s32.totalorder 2, %s25
      // Predicated region
      $region105: #{tpu_custom_call.1} parent=5 // pred_check
        %p4397 = pneg %p4396
      $region106: #{tpu_custom_call.1} parent=5 // pred_check_branch
        %4399 = sbr.rel (%p4397) target = $region108
      $region107: #{tpu_custom_call.1} parent=5 // pred_region
        %s4400 = ssub.s32 %s25, 2
      $region108: #{tpu_custom_call.1} parent=5 // pred_fallthru
        _
    $region6: #{tpu_custom_call.1} parent=1 // loop_footer
      %s29 = sadd.s32 1, %s25
    $region7: #{tpu_custom_call.1} parent=1 // loop_footer_branch
      %24 = sbr.rel target = $region3
    $region8: #{tpu_custom_call.1} parent=1 // loop_exit
      _
    %4401 = vsyncpa [#allocation5], 1
    %s4402 = scalar_lea.sflag [#allocation5], 1
    %4403 = vsyncpa %s4402, 1

</llo_original>
